<compile_context>
chip_gen: v7x
topology: tpu7x:2x2x1
jax: 0.10.0
libtpu: 0.0.40
codegen_flags: <defaults>
</compile_context>

<pallas_src>
import functools
import math

import jax
import jax.numpy as jnp
import numpy as np
from jax import lax
from jax.experimental import pallas as pl
from jax.experimental.pallas import tpu as pltpu

LN_EPS = 1e-5          # torch.nn.LayerNorm default
NEG_INF = -1e10        # torch masked_fill value

# Row indices inside the packed (15, H) vector slab.
_SA_BQ, _SA_BK, _SA_BV, _SA_BO = 0, 1, 2, 3
_EA_BQ, _EA_BK, _EA_BV, _EA_BO = 4, 5, 6, 7
_LN1_G, _LN1_B, _LN2_G, _LN2_B, _LN3_G, _LN3_B = 8, 9, 10, 11, 12, 13
_FF_B2 = 14


# --------------------------------------------------------------------------
# Fused decoder-layer kernel (single invocation, everything VMEM resident)
# --------------------------------------------------------------------------
def _decoder_layer_kernel(trg_ref, enc_ref, tbias_ref, sbias_ref,
                          qkv_w_ref, out_w_ref, ff_w1_ref, ff_w2_ref,
                          vecs_ref, ff_b1_ref,
                          out_ref, attn_ref, *, n_heads):
    f32, bf16 = jnp.float32, jnp.bfloat16
    B, Lt, H = trg_ref.shape
    Ls = enc_ref.shape[1]
    hd = H // n_heads
    inv_scale = f32(1.0 / math.sqrt(hd))

    vecs = vecs_ref[...]                        # (15, H) f32 — single load
    vrow = lambda i: vecs[i:i + 1]              # (1, H) static row slice

    # Fold batch into the sublane dim (tile aligned: Lt, Ls are multiples of 8).
    trg2 = trg_ref[...].reshape(B * Lt, H)      # (B*Lt, H) f32
    enc2 = enc_ref[...].reshape(B * Ls, H)      # (B*Ls, H) f32
    tbias = tbias_ref[...]                      # (B, Lt, Lt) additive mask bias
    sbias = sbias_ref[...]                      # (B, 1, Ls)  additive mask bias

    def split_heads(x2d, L):
        # (B*L, H) -> (nh*B, L, hd): static lane slices + one leading-dim concat.
        heads = [x2d[:, h * hd:(h + 1) * hd].reshape(1, B, L, hd)
                 for h in range(n_heads)]
        return jnp.concatenate(heads, axis=0).reshape(n_heads * B, L, hd)

    def layer_norm(x, gi, bi):
        m = jnp.mean(x, axis=-1, keepdims=True)
        v = jnp.mean((x - m) ** 2, axis=-1, keepdims=True)
        return (x - m) * lax.rsqrt(v + f32(LN_EPS)) * vrow(gi) + vrow(bi)

    def mha(xq2, xkv2, Lq, Lk, bias, w_base, b_base, wo_h, approx_recip):
        # Cast each activation to bf16 once per block.
        xq_b = xq2.astype(bf16)
        xkv_b = xq_b if xkv2 is xq2 else xkv2.astype(bf16)
        q = jnp.dot(xq_b,  qkv_w_ref[w_base + 0], preferred_element_type=f32) + vrow(b_base + 0)
        k = jnp.dot(xkv_b, qkv_w_ref[w_base + 1], preferred_element_type=f32) + vrow(b_base + 1)
        v = jnp.dot(xkv_b, qkv_w_ref[w_base + 2], preferred_element_type=f32) + vrow(b_base + 2)
        qh, kh, vh = split_heads(q, Lq), split_heads(k, Lk), split_heads(v, Lk)

        # One matmul batched over B*n_heads: (BH,Lq,hd) x (BH,Lk,hd) -> (BH,Lq,Lk)
        energy = lax.dot_general(qh.astype(bf16), kh.astype(bf16),
                                 (((2,), (2,)), ((0,), (0,))),
                                 preferred_element_type=f32) * inv_scale
        energy = energy.reshape(n_heads, B, Lq, Lk) + bias[None]   # additive mask
        energy = energy - jnp.max(energy, axis=-1, keepdims=True)
        p = jnp.exp(energy)
        s = jnp.sum(p, axis=-1, keepdims=True)
        if approx_recip:
            attn = p * pl.reciprocal(s, approx=True)   # EUP slot; probs not returned
        else:
            attn = p / s                               # exact: probs are returned

        # (BH, Lq, Lk) x (BH, Lk, hd) -> (BH, Lq, hd)
        ctx = lax.dot_general(attn.reshape(n_heads * B, Lq, Lk).astype(bf16),
                              vh.astype(bf16),
                              (((2,), (1,)), ((0,), (0,))),
                              preferred_element_type=f32)
        # Head merge folded into the output projection:
        # (nh, B*Lq, hd) x (nh, hd, H) -> (nh, B*Lq, H), summed over heads.
        proj = lax.dot_general(ctx.reshape(n_heads, B * Lq, hd).astype(bf16), wo_h,
                               (((2,), (1,)), ((0,), (0,))),
                               preferred_element_type=f32)
        return jnp.sum(proj, axis=0) + vrow(b_base + 3), attn

    # --- self attention (its probabilities are never materialized outside) ---
    sa_out, _ = mha(trg2, trg2, Lt, Lt, tbias, 0, _SA_BQ, out_w_ref[0], True)
    x = layer_norm(trg2 + sa_out, _LN1_G, _LN1_B)

    # --- encoder (cross) attention — probabilities are returned ---
    ea_out, attn = mha(x, enc2, Lt, Ls, sbias, 3, _EA_BQ, out_w_ref[1], False)
    x = layer_norm(x + ea_out, _LN2_G, _LN2_B)

    # --- position-wise feed forward ---
    xb = x.astype(bf16)
    h1 = jnp.maximum(jnp.dot(xb, ff_w1_ref[...], preferred_element_type=f32)
                     + ff_b1_ref[...], 0.0)
    ff_out = jnp.dot(h1.astype(bf16), ff_w2_ref[...],
                     preferred_element_type=f32) + vrow(_FF_B2)
    x = layer_norm(x + ff_out, _LN3_G, _LN3_B)

    out_ref[...] = x.reshape(B, Lt, H)
    attn_ref[...] = attn            # (n_heads, B, Lt, Ls): wrapper transposes/slices


# --------------------------------------------------------------------------
# Wrapper
# --------------------------------------------------------------------------
def _round_up(n, m):
    return ((n + m - 1) // m) * m


@functools.partial(jax.jit, static_argnames=("n_heads",))
def decoder_layer_forward(params, trg, enc_src, trg_mask, src_mask, *, n_heads):
    f32, bf16 = jnp.float32, jnp.bfloat16
    B, Lt, H = trg.shape
    Ls = enc_src.shape[1]
    hd = H // n_heads
    Ltp, Lsp = _round_up(Lt, 8), _round_up(Ls, 8)

    # Additive mask biases (0 keep / -1e10 masked).  Sequence dims padded to
    # sublane multiples so all in-kernel reshapes / head splits are tile
    # aligned; padded keys are masked out, padded query rows are sliced off.
    tbias = (trg_mask[:, 0].astype(f32) - 1.0) * 1e10                 # (B, Lt, Lt)
    tbias = jnp.pad(tbias, ((0, 0), (0, Ltp - Lt), (0, Ltp - Lt)),
                    constant_values=NEG_INF)
    sbias = (src_mask[:, 0].astype(f32) - 1.0) * 1e10                 # (B, 1, Ls)
    sbias = jnp.pad(sbias, ((0, 0), (0, 0), (0, Lsp - Ls)), constant_values=NEG_INF)
    trg_p = jnp.pad(trg, ((0, 0), (0, Ltp - Lt), (0, 0)))
    enc_p = jnp.pad(enc_src, ((0, 0), (0, Lsp - Ls), (0, 0)))

    # --- pack parameters into a handful of slabs (few DMAs, no tiny tiles) ---
    sa, ea, ff = params['sa'], params['ea'], params['ff']
    qkv_w = jnp.stack([sa['wq'], sa['wk'], sa['wv'],
                       ea['wq'], ea['wk'], ea['wv']]).astype(bf16)          # (6, H, H)
    out_w = jnp.stack([sa['wo'].reshape(n_heads, hd, H),
                       ea['wo'].reshape(n_heads, hd, H)]).astype(bf16)      # (2, nh, hd, H)
    ff_w1 = ff['w1'].astype(bf16)                                           # (H, pf)
    ff_w2 = ff['w2'].astype(bf16)                                           # (pf, H)
    vecs = jnp.stack([sa['bq'].reshape(-1), sa['bk'].reshape(-1),
                      sa['bv'].reshape(-1), sa['bo'].reshape(-1),
                      ea['bq'].reshape(-1), ea['bk'].reshape(-1),
                      ea['bv'].reshape(-1), ea['bo'].reshape(-1),
                      params['ln1_g'].reshape(-1), params['ln1_b'].reshape(-1),
                      params['ln2_g'].reshape(-1), params['ln2_b'].reshape(-1),
                      params['ln3_g'].reshape(-1), params['ln3_b'].reshape(-1),
                      ff['b2'].reshape(-1)]).astype(f32)                    # (15, H)
    ff_b1 = ff['b1'].reshape(1, -1).astype(f32)                             # (1, pf)

    out_p, attn_hb = pl.pallas_call(
        functools.partial(_decoder_layer_kernel, n_heads=n_heads),
        out_shape=(jax.ShapeDtypeStruct((B, Ltp, H), f32),
                   jax.ShapeDtypeStruct((n_heads, B, Ltp, Lsp), f32)),
        compiler_params=pltpu.CompilerParams(vmem_limit_bytes=32 * 1024 * 1024),
    )(trg_p, enc_p, tbias, sbias, qkv_w, out_w, ff_w1, ff_w2, vecs, ff_b1)

    out = out_p[:, :Lt]
    # Kernel stores probs in its natural (head, batch, Lq, Lk) compute layout;
    # rearranging to torch's (B, nh, Lt, Ls) is wrapper-side layout plumbing.
    attn = jnp.transpose(attn_hb, (1, 0, 2, 3))[:, :, :Lt, :Ls]
    return out, attn


# --------------------------------------------------------------------------
# Deterministic parameter init (synthetic, not a checkpoint)
# --------------------------------------------------------------------------
def init_params(key, hid_dim, n_heads, pf_dim):
    keys = iter(jax.random.split(key, 64))

    def lin(din, dout):
        w = jax.random.normal(next(keys), (din, dout), jnp.float32) * 0.02
        b = jax.random.normal(next(keys), (1, dout), jnp.float32) * 0.02
        return w, b

    p = {}
    for name in ('sa', 'ea'):
        d = {}
        for pn in ('q', 'k', 'v', 'o'):
            w, b = lin(hid_dim, hid_dim)
            d['w' + pn], d['b' + pn] = w, b
        p[name] = d
    w1, b1 = lin(hid_dim, pf_dim)
    w2, b2 = lin(pf_dim, hid_dim)
    p['ff'] = {'w1': w1, 'b1': b1, 'w2': w2, 'b2': b2}
    for i in (1, 2, 3):
        p[f'ln{i}_g'] = jnp.ones((1, hid_dim), jnp.float32)
        p[f'ln{i}_b'] = jnp.zeros((1, hid_dim), jnp.float32)
    return p


# --------------------------------------------------------------------------
# Pure-JAX f32 reference (torch semantics) for correctness check
# --------------------------------------------------------------------------
def _ref_mha(q, k, v, mask, p, n_heads):
    B, Lq, H = q.shape
    hd = H // n_heads

    def proj(x, w, b):
        return (x @ w + b).reshape(B, -1, n_heads, hd).transpose(0, 2, 1, 3)

    Q, K, V = proj(q, p['wq'], p['bq']), proj(k, p['wk'], p['bk']), proj(v, p['wv'], p['bv'])
    energy = jnp.einsum('bhqd,bhkd->bhqk', Q, K) / jnp.float32(hd ** 0.5)
    energy = jnp.where(mask == 0, jnp.float32(NEG_INF), energy)
    attn = jax.nn.softmax(energy, axis=-1)
    x = jnp.einsum('bhqk,bhkd->bhqd', attn, V).transpose(0, 2, 1, 3).reshape(B, Lq, H)
    return x @ p['wo'] + p['bo'], attn


def _ref_ln(x, g, b):
    m = jnp.mean(x, axis=-1, keepdims=True)
    v = jnp.mean((x - m) ** 2, axis=-1, keepdims=True)
    return (x - m) / jnp.sqrt(v + LN_EPS) * g + b


def ref_decoder_layer(params, trg, enc_src, trg_mask, src_mask, *, n_heads):
    sa, _ = _ref_mha(trg, trg, trg, trg_mask, params['sa'], n_heads)
    x = _ref_ln(trg + sa, params['ln1_g'], params['ln1_b'])
    ea, attn = _ref_mha(x, enc_src, enc_src, src_mask, params['ea'], n_heads)
    x = _ref_ln(x + ea, params['ln2_g'], params['ln2_b'])
    ff = jnp.maximum(x @ params['ff']['w1'] + params['ff']['b1'], 0.0) \
        @ params['ff']['w2'] + params['ff']['b2']
    x = _ref_ln(x + ff, params['ln3_g'], params['ln3_b'])
    return x, attn


# --------------------------------------------------------------------------
if __name__ == "__main__":
    hid_dim, n_heads, pf_dim = 32, 4, 64
    B, Lt, Ls = 2, 8, 10

    key = jax.random.PRNGKey(0)
    k_par, k_trg, k_enc = jax.random.split(key, 3)

    params = init_params(k_par, hid_dim, n_heads, pf_dim)
    trg = jax.random.normal(k_trg, (B, Lt, hid_dim), jnp.float32)
    enc_src = jax.random.normal(k_enc, (B, Ls, hid_dim), jnp.float32)

    # causal target mask [B,1,Lt,Lt]; source padding mask [B,1,1,Ls] (batch 1 has 2 pads)
    trg_mask = jnp.broadcast_to(
        jnp.tril(jnp.ones((Lt, Lt), jnp.int32))[None, None], (B, 1, Lt, Lt))
    src_lens = jnp.array([Ls, Ls - 2])
    src_mask = (jnp.arange(Ls)[None, None, None, :]
                < src_lens[:, None, None, None]).astype(jnp.int32)

    out, attn = decoder_layer_forward(params, trg, enc_src, trg_mask, src_mask,
                                      n_heads=n_heads)
    jax.block_until_ready((out, attn))

    out_ref, attn_ref = ref_decoder_layer(params, trg, enc_src, trg_mask, src_mask,
                                          n_heads=n_heads)
    assert out.shape == (B, Lt, hid_dim) and attn.shape == (B, n_heads, Lt, Ls)
    # Loose-ish tolerance: kernel uses bf16 MXU inputs with f32 accumulation.
    np.testing.assert_allclose(np.asarray(out), np.asarray(out_ref), rtol=2e-2, atol=2e-2)
    np.testing.assert_allclose(np.asarray(attn), np.asarray(attn_ref), rtol=2e-2, atol=2e-2)
    print("KERNEL_OK")
</pallas_src>

<mosaic_0001>
module attributes {stable_mosaic.version = 11 : i64} {
  func.func @_decoder_layer_kernel(%arg0: memref<2x8x32xf32, #tpu.memory_space<vmem>>, %arg1: memref<2x16x32xf32, #tpu.memory_space<vmem>>, %arg2: memref<2x8x8xf32, #tpu.memory_space<vmem>>, %arg3: memref<2x1x16xf32, #tpu.memory_space<vmem>>, %arg4: memref<6x32x32xbf16, #tpu.memory_space<vmem>>, %arg5: memref<2x4x8x32xbf16, #tpu.memory_space<vmem>>, %arg6: memref<32x64xbf16, #tpu.memory_space<vmem>>, %arg7: memref<64x32xbf16, #tpu.memory_space<vmem>>, %arg8: memref<15x32xf32, #tpu.memory_space<vmem>>, %arg9: memref<1x64xf32, #tpu.memory_space<vmem>>, %arg10: memref<2x8x32xf32, #tpu.memory_space<vmem>>, %arg11: memref<4x2x8x16xf32, #tpu.memory_space<vmem>>) attributes {dimension_semantics = [], scalar_prefetch = 0 : i64, scratch_operands = 0 : i64, tpu.core_type = #tpu.core_type<tc>} {
    %c0 = arith.constant 0 : index
    %c0_0 = arith.constant 0 : index
    %0 = vector.load %arg8[%c0, %c0_0] : memref<15x32xf32, #tpu.memory_space<vmem>>, vector<15x32xf32>
    %c0_1 = arith.constant 0 : index
    %c0_2 = arith.constant 0 : index
    %c0_3 = arith.constant 0 : index
    %1 = vector.load %arg0[%c0_1, %c0_2, %c0_3] : memref<2x8x32xf32, #tpu.memory_space<vmem>>, vector<2x8x32xf32>
    %2 = vector.shape_cast %1 : vector<2x8x32xf32> to vector<16x32xf32>
    %c0_4 = arith.constant 0 : index
    %c0_5 = arith.constant 0 : index
    %c0_6 = arith.constant 0 : index
    %3 = vector.load %arg1[%c0_4, %c0_5, %c0_6] : memref<2x16x32xf32, #tpu.memory_space<vmem>>, vector<2x16x32xf32>
    %4 = vector.shape_cast %3 : vector<2x16x32xf32> to vector<32x32xf32>
    %c0_7 = arith.constant 0 : index
    %c0_8 = arith.constant 0 : index
    %c0_9 = arith.constant 0 : index
    %5 = vector.load %arg2[%c0_7, %c0_8, %c0_9] : memref<2x8x8xf32, #tpu.memory_space<vmem>>, vector<2x8x8xf32>
    %c0_10 = arith.constant 0 : index
    %c0_11 = arith.constant 0 : index
    %c0_12 = arith.constant 0 : index
    %6 = vector.load %arg3[%c0_10, %c0_11, %c0_12] : memref<2x1x16xf32, #tpu.memory_space<vmem>>, vector<2x1x16xf32>
    %c0_13 = arith.constant 0 : index
    %c0_14 = arith.constant 0 : index
    %c0_15 = arith.constant 0 : index
    %c0_16 = arith.constant 0 : index
    %7 = vector.load %arg5[%c0_13, %c0_14, %c0_15, %c0_16] : memref<2x4x8x32xbf16, #tpu.memory_space<vmem>>, vector<1x4x8x32xbf16>
    %8 = vector.shape_cast %7 : vector<1x4x8x32xbf16> to vector<4x8x32xbf16>
    %9 = arith.truncf %2 : vector<16x32xf32> to vector<16x32xbf16>
    %c0_17 = arith.constant 0 : index
    %c0_18 = arith.constant 0 : index
    %c0_19 = arith.constant 0 : index
    %10 = vector.load %arg4[%c0_17, %c0_18, %c0_19] : memref<6x32x32xbf16, #tpu.memory_space<vmem>>, vector<1x32x32xbf16>
    %11 = vector.shape_cast %10 : vector<1x32x32xbf16> to vector<32x32xbf16>
    %cst = arith.constant dense<0.000000e+00> : vector<16x32xf32>
    %12 = tpu.matmul %9, %11, %cst {dimension_numbers = #tpu.dot_dimension_numbers<[1], [0], [0], [1], [0, 0, 1, 1], [], []>} : vector<16x32xbf16>, vector<32x32xbf16>, vector<16x32xf32> -> vector<16x32xf32>
    %13 = vector.extract_strided_slice %0 {offsets = [0, 0], sizes = [1, 32], strides = [1, 1]} : vector<15x32xf32> to vector<1x32xf32>
    %14 = vector.broadcast %13 : vector<1x32xf32> to vector<16x32xf32>
    %15 = arith.addf %12, %14 : vector<16x32xf32>
    %c1 = arith.constant 1 : index
    %c0_20 = arith.constant 0 : index
    %c0_21 = arith.constant 0 : index
    %16 = vector.load %arg4[%c1, %c0_20, %c0_21] : memref<6x32x32xbf16, #tpu.memory_space<vmem>>, vector<1x32x32xbf16>
    %17 = vector.shape_cast %16 : vector<1x32x32xbf16> to vector<32x32xbf16>
    %cst_22 = arith.constant dense<0.000000e+00> : vector<16x32xf32>
    %18 = tpu.matmul %9, %17, %cst_22 {dimension_numbers = #tpu.dot_dimension_numbers<[1], [0], [0], [1], [0, 0, 1, 1], [], []>} : vector<16x32xbf16>, vector<32x32xbf16>, vector<16x32xf32> -> vector<16x32xf32>
    %19 = vector.extract_strided_slice %0 {offsets = [1, 0], sizes = [1, 32], strides = [1, 1]} : vector<15x32xf32> to vector<1x32xf32>
    %20 = vector.broadcast %19 : vector<1x32xf32> to vector<16x32xf32>
    %21 = arith.addf %18, %20 : vector<16x32xf32>
    %c2 = arith.constant 2 : index
    %c0_23 = arith.constant 0 : index
    %c0_24 = arith.constant 0 : index
    %22 = vector.load %arg4[%c2, %c0_23, %c0_24] : memref<6x32x32xbf16, #tpu.memory_space<vmem>>, vector<1x32x32xbf16>
    %23 = vector.shape_cast %22 : vector<1x32x32xbf16> to vector<32x32xbf16>
    %cst_25 = arith.constant dense<0.000000e+00> : vector<16x32xf32>
    %24 = tpu.matmul %9, %23, %cst_25 {dimension_numbers = #tpu.dot_dimension_numbers<[1], [0], [0], [1], [0, 0, 1, 1], [], []>} : vector<16x32xbf16>, vector<32x32xbf16>, vector<16x32xf32> -> vector<16x32xf32>
    %25 = vector.extract_strided_slice %0 {offsets = [2, 0], sizes = [1, 32], strides = [1, 1]} : vector<15x32xf32> to vector<1x32xf32>
    %26 = vector.broadcast %25 : vector<1x32xf32> to vector<16x32xf32>
    %27 = arith.addf %24, %26 : vector<16x32xf32>
    %28 = vector.extract_strided_slice %15 {offsets = [0, 0], sizes = [16, 8], strides = [1, 1]} : vector<16x32xf32> to vector<16x8xf32>
    %29 = vector.shape_cast %28 : vector<16x8xf32> to vector<1x2x8x8xf32>
    %30 = vector.extract_strided_slice %15 {offsets = [0, 8], sizes = [16, 8], strides = [1, 1]} : vector<16x32xf32> to vector<16x8xf32>
    %31 = vector.shape_cast %30 : vector<16x8xf32> to vector<1x2x8x8xf32>
    %32 = vector.extract_strided_slice %15 {offsets = [0, 16], sizes = [16, 8], strides = [1, 1]} : vector<16x32xf32> to vector<16x8xf32>
    %33 = vector.shape_cast %32 : vector<16x8xf32> to vector<1x2x8x8xf32>
    %34 = vector.extract_strided_slice %15 {offsets = [0, 24], sizes = [16, 8], strides = [1, 1]} : vector<16x32xf32> to vector<16x8xf32>
    %35 = vector.shape_cast %34 : vector<16x8xf32> to vector<1x2x8x8xf32>
    %36 = tpu.concatenate %29, %31, %33, %35 in 0 : vector<1x2x8x8xf32>, vector<1x2x8x8xf32>, vector<1x2x8x8xf32>, vector<1x2x8x8xf32> -> vector<4x2x8x8xf32>
    %37 = vector.shape_cast %36 : vector<4x2x8x8xf32> to vector<8x8x8xf32>
    %38 = vector.extract_strided_slice %21 {offsets = [0, 0], sizes = [16, 8], strides = [1, 1]} : vector<16x32xf32> to vector<16x8xf32>
    %39 = vector.shape_cast %38 : vector<16x8xf32> to vector<1x2x8x8xf32>
    %40 = vector.extract_strided_slice %21 {offsets = [0, 8], sizes = [16, 8], strides = [1, 1]} : vector<16x32xf32> to vector<16x8xf32>
    %41 = vector.shape_cast %40 : vector<16x8xf32> to vector<1x2x8x8xf32>
    %42 = vector.extract_strided_slice %21 {offsets = [0, 16], sizes = [16, 8], strides = [1, 1]} : vector<16x32xf32> to vector<16x8xf32>
    %43 = vector.shape_cast %42 : vector<16x8xf32> to vector<1x2x8x8xf32>
    %44 = vector.extract_strided_slice %21 {offsets = [0, 24], sizes = [16, 8], strides = [1, 1]} : vector<16x32xf32> to vector<16x8xf32>
    %45 = vector.shape_cast %44 : vector<16x8xf32> to vector<1x2x8x8xf32>
    %46 = tpu.concatenate %39, %41, %43, %45 in 0 : vector<1x2x8x8xf32>, vector<1x2x8x8xf32>, vector<1x2x8x8xf32>, vector<1x2x8x8xf32> -> vector<4x2x8x8xf32>
    %47 = vector.shape_cast %46 : vector<4x2x8x8xf32> to vector<8x8x8xf32>
    %48 = vector.extract_strided_slice %27 {offsets = [0, 0], sizes = [16, 8], strides = [1, 1]} : vector<16x32xf32> to vector<16x8xf32>
    %49 = vector.shape_cast %48 : vector<16x8xf32> to vector<1x2x8x8xf32>
    %50 = vector.extract_strided_slice %27 {offsets = [0, 8], sizes = [16, 8], strides = [1, 1]} : vector<16x32xf32> to vector<16x8xf32>
    %51 = vector.shape_cast %50 : vector<16x8xf32> to vector<1x2x8x8xf32>
    %52 = vector.extract_strided_slice %27 {offsets = [0, 16], sizes = [16, 8], strides = [1, 1]} : vector<16x32xf32> to vector<16x8xf32>
    %53 = vector.shape_cast %52 : vector<16x8xf32> to vector<1x2x8x8xf32>
    %54 = vector.extract_strided_slice %27 {offsets = [0, 24], sizes = [16, 8], strides = [1, 1]} : vector<16x32xf32> to vector<16x8xf32>
    %55 = vector.shape_cast %54 : vector<16x8xf32> to vector<1x2x8x8xf32>
    %56 = tpu.concatenate %49, %51, %53, %55 in 0 : vector<1x2x8x8xf32>, vector<1x2x8x8xf32>, vector<1x2x8x8xf32>, vector<1x2x8x8xf32> -> vector<4x2x8x8xf32>
    %57 = vector.shape_cast %56 : vector<4x2x8x8xf32> to vector<8x8x8xf32>
    %58 = arith.truncf %37 : vector<8x8x8xf32> to vector<8x8x8xbf16>
    %59 = arith.truncf %47 : vector<8x8x8xf32> to vector<8x8x8xbf16>
    %cst_26 = arith.constant dense<0.000000e+00> : vector<8x8x8xf32>
    %60 = tpu.matmul %58, %59, %cst_26 {dimension_numbers = #tpu.dot_dimension_numbers<[2], [2], [1], [1], [0, 0, 0, 1, 1, 1], [0], [0]>} : vector<8x8x8xbf16>, vector<8x8x8xbf16>, vector<8x8x8xf32> -> vector<8x8x8xf32>
    %cst_27 = arith.constant 0.353553385 : f32
    %61 = vector.broadcast %cst_27 : f32 to vector<8x8x8xf32>
    %62 = arith.mulf %60, %61 : vector<8x8x8xf32>
    %63 = vector.shape_cast %62 : vector<8x8x8xf32> to vector<4x2x8x8xf32>
    %64 = vector.shape_cast %5 : vector<2x8x8xf32> to vector<1x2x8x8xf32>
    %65 = vector.broadcast %64 : vector<1x2x8x8xf32> to vector<4x2x8x8xf32>
    %66 = arith.addf %63, %65 : vector<4x2x8x8xf32>
    %cst_28 = arith.constant dense<0xFF800000> : vector<4x2x8xf32>
    %67 = vector.multi_reduction <maximumf>, %66, %cst_28 [3] : vector<4x2x8x8xf32> to vector<4x2x8xf32>
    %68 = vector.shape_cast %67 : vector<4x2x8xf32> to vector<4x2x8x1xf32>
    %69 = vector.broadcast %68 : vector<4x2x8x1xf32> to vector<4x2x8x8xf32>
    %70 = arith.subf %66, %69 : vector<4x2x8x8xf32>
    %71 = math.exp %70 : vector<4x2x8x8xf32>
    %cst_29 = arith.constant dense<0.000000e+00> : vector<4x2x8xf32>
    %72 = vector.multi_reduction <add>, %71, %cst_29 [3] : vector<4x2x8x8xf32> to vector<4x2x8xf32>
    %73 = vector.shape_cast %72 : vector<4x2x8xf32> to vector<4x2x8x1xf32>
    %74 = tpu.reciprocal %73 {approx = true} : vector<4x2x8x1xf32> -> vector<4x2x8x1xf32>
    %75 = vector.broadcast %74 : vector<4x2x8x1xf32> to vector<4x2x8x8xf32>
    %76 = arith.mulf %71, %75 : vector<4x2x8x8xf32>
    %77 = vector.shape_cast %76 : vector<4x2x8x8xf32> to vector<8x8x8xf32>
    %78 = arith.truncf %77 : vector<8x8x8xf32> to vector<8x8x8xbf16>
    %79 = arith.truncf %57 : vector<8x8x8xf32> to vector<8x8x8xbf16>
    %cst_30 = arith.constant dense<0.000000e+00> : vector<8x8x8xf32>
    %80 = tpu.matmul %78, %79, %cst_30 {dimension_numbers = #tpu.dot_dimension_numbers<[2], [1], [1], [2], [0, 0, 0, 1, 1, 2], [0], [0]>} : vector<8x8x8xbf16>, vector<8x8x8xbf16>, vector<8x8x8xf32> -> vector<8x8x8xf32>
    %81 = vector.shape_cast %80 : vector<8x8x8xf32> to vector<4x16x8xf32>
    %82 = arith.truncf %81 : vector<4x16x8xf32> to vector<4x16x8xbf16>
    %cst_31 = arith.constant dense<0.000000e+00> : vector<4x16x32xf32>
    %83 = tpu.matmul %82, %8, %cst_31 {dimension_numbers = #tpu.dot_dimension_numbers<[2], [1], [1], [2], [0, 0, 0, 1, 1, 2], [0], [0]>} : vector<4x16x8xbf16>, vector<4x8x32xbf16>, vector<4x16x32xf32> -> vector<4x16x32xf32>
    %cst_32 = arith.constant dense<0.000000e+00> : vector<16x32xf32>
    %84 = vector.multi_reduction <add>, %83, %cst_32 [0] : vector<4x16x32xf32> to vector<16x32xf32>
    %85 = vector.extract_strided_slice %0 {offsets = [3, 0], sizes = [1, 32], strides = [1, 1]} : vector<15x32xf32> to vector<1x32xf32>
    %86 = vector.broadcast %85 : vector<1x32xf32> to vector<16x32xf32>
    %87 = arith.addf %84, %86 : vector<16x32xf32>
    %88 = arith.addf %2, %87 : vector<16x32xf32>
    %cst_33 = arith.constant dense<0.000000e+00> : vector<16xf32>
    %89 = vector.multi_reduction <add>, %88, %cst_33 [1] : vector<16x32xf32> to vector<16xf32>
    %90 = vector.shape_cast %89 : vector<16xf32> to vector<16x1xf32>
    %cst_34 = arith.constant 3.200000e+01 : f32
    %91 = vector.broadcast %cst_34 : f32 to vector<16x1xf32>
    %92 = arith.divf %90, %91 : vector<16x1xf32>
    %93 = vector.broadcast %92 : vector<16x1xf32> to vector<16x32xf32>
    %94 = arith.subf %88, %93 : vector<16x32xf32>
    %95 = arith.mulf %94, %94 : vector<16x32xf32>
    %cst_35 = arith.constant dense<0.000000e+00> : vector<16xf32>
    %96 = vector.multi_reduction <add>, %95, %cst_35 [1] : vector<16x32xf32> to vector<16xf32>
    %97 = vector.shape_cast %96 : vector<16xf32> to vector<16x1xf32>
    %cst_36 = arith.constant 3.200000e+01 : f32
    %98 = vector.broadcast %cst_36 : f32 to vector<16x1xf32>
    %99 = arith.divf %97, %98 : vector<16x1xf32>
    %100 = vector.broadcast %92 : vector<16x1xf32> to vector<16x32xf32>
    %101 = arith.subf %88, %100 : vector<16x32xf32>
    %cst_37 = arith.constant 9.99999974E-6 : f32
    %102 = vector.broadcast %cst_37 : f32 to vector<16x1xf32>
    %103 = arith.addf %99, %102 : vector<16x1xf32>
    %104 = math.rsqrt %103 : vector<16x1xf32>
    %105 = vector.broadcast %104 : vector<16x1xf32> to vector<16x32xf32>
    %106 = arith.mulf %101, %105 : vector<16x32xf32>
    %107 = vector.extract_strided_slice %0 {offsets = [8, 0], sizes = [1, 32], strides = [1, 1]} : vector<15x32xf32> to vector<1x32xf32>
    %108 = vector.broadcast %107 : vector<1x32xf32> to vector<16x32xf32>
    %109 = arith.mulf %106, %108 : vector<16x32xf32>
    %110 = vector.extract_strided_slice %0 {offsets = [9, 0], sizes = [1, 32], strides = [1, 1]} : vector<15x32xf32> to vector<1x32xf32>
    %111 = vector.broadcast %110 : vector<1x32xf32> to vector<16x32xf32>
    %112 = arith.addf %109, %111 : vector<16x32xf32>
    %c1_38 = arith.constant 1 : index
    %c0_39 = arith.constant 0 : index
    %c0_40 = arith.constant 0 : index
    %c0_41 = arith.constant 0 : index
    %113 = vector.load %arg5[%c1_38, %c0_39, %c0_40, %c0_41] : memref<2x4x8x32xbf16, #tpu.memory_space<vmem>>, vector<1x4x8x32xbf16>
    %114 = vector.shape_cast %113 : vector<1x4x8x32xbf16> to vector<4x8x32xbf16>
    %115 = arith.truncf %112 : vector<16x32xf32> to vector<16x32xbf16>
    %116 = arith.truncf %4 : vector<32x32xf32> to vector<32x32xbf16>
    %c3 = arith.constant 3 : index
    %c0_42 = arith.constant 0 : index
    %c0_43 = arith.constant 0 : index
    %117 = vector.load %arg4[%c3, %c0_42, %c0_43] : memref<6x32x32xbf16, #tpu.memory_space<vmem>>, vector<1x32x32xbf16>
    %118 = vector.shape_cast %117 : vector<1x32x32xbf16> to vector<32x32xbf16>
    %cst_44 = arith.constant dense<0.000000e+00> : vector<16x32xf32>
    %119 = tpu.matmul %115, %118, %cst_44 {dimension_numbers = #tpu.dot_dimension_numbers<[1], [0], [0], [1], [0, 0, 1, 1], [], []>} : vector<16x32xbf16>, vector<32x32xbf16>, vector<16x32xf32> -> vector<16x32xf32>
    %120 = vector.extract_strided_slice %0 {offsets = [4, 0], sizes = [1, 32], strides = [1, 1]} : vector<15x32xf32> to vector<1x32xf32>
    %121 = vector.broadcast %120 : vector<1x32xf32> to vector<16x32xf32>
    %122 = arith.addf %119, %121 : vector<16x32xf32>
    %c4 = arith.constant 4 : index
    %c0_45 = arith.constant 0 : index
    %c0_46 = arith.constant 0 : index
    %123 = vector.load %arg4[%c4, %c0_45, %c0_46] : memref<6x32x32xbf16, #tpu.memory_space<vmem>>, vector<1x32x32xbf16>
    %124 = vector.shape_cast %123 : vector<1x32x32xbf16> to vector<32x32xbf16>
    %cst_47 = arith.constant dense<0.000000e+00> : vector<32x32xf32>
    %125 = tpu.matmul %116, %124, %cst_47 {dimension_numbers = #tpu.dot_dimension_numbers<[1], [0], [0], [1], [0, 0, 1, 1], [], []>} : vector<32x32xbf16>, vector<32x32xbf16>, vector<32x32xf32> -> vector<32x32xf32>
    %126 = vector.extract_strided_slice %0 {offsets = [5, 0], sizes = [1, 32], strides = [1, 1]} : vector<15x32xf32> to vector<1x32xf32>
    %127 = vector.broadcast %126 : vector<1x32xf32> to vector<32x32xf32>
    %128 = arith.addf %125, %127 : vector<32x32xf32>
    %c5 = arith.constant 5 : index
    %c0_48 = arith.constant 0 : index
    %c0_49 = arith.constant 0 : index
    %129 = vector.load %arg4[%c5, %c0_48, %c0_49] : memref<6x32x32xbf16, #tpu.memory_space<vmem>>, vector<1x32x32xbf16>
    %130 = vector.shape_cast %129 : vector<1x32x32xbf16> to vector<32x32xbf16>
    %cst_50 = arith.constant dense<0.000000e+00> : vector<32x32xf32>
    %131 = tpu.matmul %116, %130, %cst_50 {dimension_numbers = #tpu.dot_dimension_numbers<[1], [0], [0], [1], [0, 0, 1, 1], [], []>} : vector<32x32xbf16>, vector<32x32xbf16>, vector<32x32xf32> -> vector<32x32xf32>
    %132 = vector.extract_strided_slice %0 {offsets = [6, 0], sizes = [1, 32], strides = [1, 1]} : vector<15x32xf32> to vector<1x32xf32>
    %133 = vector.broadcast %132 : vector<1x32xf32> to vector<32x32xf32>
    %134 = arith.addf %131, %133 : vector<32x32xf32>
    %135 = vector.extract_strided_slice %122 {offsets = [0, 0], sizes = [16, 8], strides = [1, 1]} : vector<16x32xf32> to vector<16x8xf32>
    %136 = vector.shape_cast %135 : vector<16x8xf32> to vector<1x2x8x8xf32>
    %137 = vector.extract_strided_slice %122 {offsets = [0, 8], sizes = [16, 8], strides = [1, 1]} : vector<16x32xf32> to vector<16x8xf32>
    %138 = vector.shape_cast %137 : vector<16x8xf32> to vector<1x2x8x8xf32>
    %139 = vector.extract_strided_slice %122 {offsets = [0, 16], sizes = [16, 8], strides = [1, 1]} : vector<16x32xf32> to vector<16x8xf32>
    %140 = vector.shape_cast %139 : vector<16x8xf32> to vector<1x2x8x8xf32>
    %141 = vector.extract_strided_slice %122 {offsets = [0, 24], sizes = [16, 8], strides = [1, 1]} : vector<16x32xf32> to vector<16x8xf32>
    %142 = vector.shape_cast %141 : vector<16x8xf32> to vector<1x2x8x8xf32>
    %143 = tpu.concatenate %136, %138, %140, %142 in 0 : vector<1x2x8x8xf32>, vector<1x2x8x8xf32>, vector<1x2x8x8xf32>, vector<1x2x8x8xf32> -> vector<4x2x8x8xf32>
    %144 = vector.shape_cast %143 : vector<4x2x8x8xf32> to vector<8x8x8xf32>
    %145 = vector.extract_strided_slice %128 {offsets = [0, 0], sizes = [32, 8], strides = [1, 1]} : vector<32x32xf32> to vector<32x8xf32>
    %146 = vector.shape_cast %145 : vector<32x8xf32> to vector<1x2x16x8xf32>
    %147 = vector.extract_strided_slice %128 {offsets = [0, 8], sizes = [32, 8], strides = [1, 1]} : vector<32x32xf32> to vector<32x8xf32>
    %148 = vector.shape_cast %147 : vector<32x8xf32> to vector<1x2x16x8xf32>
    %149 = vector.extract_strided_slice %128 {offsets = [0, 16], sizes = [32, 8], strides = [1, 1]} : vector<32x32xf32> to vector<32x8xf32>
    %150 = vector.shape_cast %149 : vector<32x8xf32> to vector<1x2x16x8xf32>
    %151 = vector.extract_strided_slice %128 {offsets = [0, 24], sizes = [32, 8], strides = [1, 1]} : vector<32x32xf32> to vector<32x8xf32>
    %152 = vector.shape_cast %151 : vector<32x8xf32> to vector<1x2x16x8xf32>
    %153 = tpu.concatenate %146, %148, %150, %152 in 0 : vector<1x2x16x8xf32>, vector<1x2x16x8xf32>, vector<1x2x16x8xf32>, vector<1x2x16x8xf32> -> vector<4x2x16x8xf32>
    %154 = vector.shape_cast %153 : vector<4x2x16x8xf32> to vector<8x16x8xf32>
    %155 = vector.extract_strided_slice %134 {offsets = [0, 0], sizes = [32, 8], strides = [1, 1]} : vector<32x32xf32> to vector<32x8xf32>
    %156 = vector.shape_cast %155 : vector<32x8xf32> to vector<1x2x16x8xf32>
    %157 = vector.extract_strided_slice %134 {offsets = [0, 8], sizes = [32, 8], strides = [1, 1]} : vector<32x32xf32> to vector<32x8xf32>
    %158 = vector.shape_cast %157 : vector<32x8xf32> to vector<1x2x16x8xf32>
    %159 = vector.extract_strided_slice %134 {offsets = [0, 16], sizes = [32, 8], strides = [1, 1]} : vector<32x32xf32> to vector<32x8xf32>
    %160 = vector.shape_cast %159 : vector<32x8xf32> to vector<1x2x16x8xf32>
    %161 = vector.extract_strided_slice %134 {offsets = [0, 24], sizes = [32, 8], strides = [1, 1]} : vector<32x32xf32> to vector<32x8xf32>
    %162 = vector.shape_cast %161 : vector<32x8xf32> to vector<1x2x16x8xf32>
    %163 = tpu.concatenate %156, %158, %160, %162 in 0 : vector<1x2x16x8xf32>, vector<1x2x16x8xf32>, vector<1x2x16x8xf32>, vector<1x2x16x8xf32> -> vector<4x2x16x8xf32>
    %164 = vector.shape_cast %163 : vector<4x2x16x8xf32> to vector<8x16x8xf32>
    %165 = arith.truncf %144 : vector<8x8x8xf32> to vector<8x8x8xbf16>
    %166 = arith.truncf %154 : vector<8x16x8xf32> to vector<8x16x8xbf16>
    %cst_51 = arith.constant dense<0.000000e+00> : vector<8x8x16xf32>
    %167 = tpu.matmul %165, %166, %cst_51 {dimension_numbers = #tpu.dot_dimension_numbers<[2], [2], [1], [1], [0, 0, 0, 1, 1, 1], [0], [0]>} : vector<8x8x8xbf16>, vector<8x16x8xbf16>, vector<8x8x16xf32> -> vector<8x8x16xf32>
    %cst_52 = arith.constant 0.353553385 : f32
    %168 = vector.broadcast %cst_52 : f32 to vector<8x8x16xf32>
    %169 = arith.mulf %167, %168 : vector<8x8x16xf32>
    %170 = vector.shape_cast %169 : vector<8x8x16xf32> to vector<4x2x8x16xf32>
    %171 = vector.shape_cast %6 : vector<2x1x16xf32> to vector<1x2x1x16xf32>
    %172 = vector.broadcast %171 : vector<1x2x1x16xf32> to vector<4x2x8x16xf32>
    %173 = arith.addf %170, %172 : vector<4x2x8x16xf32>
    %cst_53 = arith.constant dense<0xFF800000> : vector<4x2x8xf32>
    %174 = vector.multi_reduction <maximumf>, %173, %cst_53 [3] : vector<4x2x8x16xf32> to vector<4x2x8xf32>
    %175 = vector.shape_cast %174 : vector<4x2x8xf32> to vector<4x2x8x1xf32>
    %176 = vector.broadcast %175 : vector<4x2x8x1xf32> to vector<4x2x8x16xf32>
    %177 = arith.subf %173, %176 : vector<4x2x8x16xf32>
    %178 = math.exp %177 : vector<4x2x8x16xf32>
    %cst_54 = arith.constant dense<0.000000e+00> : vector<4x2x8xf32>
    %179 = vector.multi_reduction <add>, %178, %cst_54 [3] : vector<4x2x8x16xf32> to vector<4x2x8xf32>
    %180 = vector.shape_cast %179 : vector<4x2x8xf32> to vector<4x2x8x1xf32>
    %181 = vector.broadcast %180 : vector<4x2x8x1xf32> to vector<4x2x8x16xf32>
    %182 = arith.divf %178, %181 : vector<4x2x8x16xf32>
    %183 = vector.shape_cast %182 : vector<4x2x8x16xf32> to vector<8x8x16xf32>
    %184 = arith.truncf %183 : vector<8x8x16xf32> to vector<8x8x16xbf16>
    %185 = arith.truncf %164 : vector<8x16x8xf32> to vector<8x16x8xbf16>
    %cst_55 = arith.constant dense<0.000000e+00> : vector<8x8x8xf32>
    %186 = tpu.matmul %184, %185, %cst_55 {dimension_numbers = #tpu.dot_dimension_numbers<[2], [1], [1], [2], [0, 0, 0, 1, 1, 2], [0], [0]>} : vector<8x8x16xbf16>, vector<8x16x8xbf16>, vector<8x8x8xf32> -> vector<8x8x8xf32>
    %187 = vector.shape_cast %186 : vector<8x8x8xf32> to vector<4x16x8xf32>
    %188 = arith.truncf %187 : vector<4x16x8xf32> to vector<4x16x8xbf16>
    %cst_56 = arith.constant dense<0.000000e+00> : vector<4x16x32xf32>
    %189 = tpu.matmul %188, %114, %cst_56 {dimension_numbers = #tpu.dot_dimension_numbers<[2], [1], [1], [2], [0, 0, 0, 1, 1, 2], [0], [0]>} : vector<4x16x8xbf16>, vector<4x8x32xbf16>, vector<4x16x32xf32> -> vector<4x16x32xf32>
    %cst_57 = arith.constant dense<0.000000e+00> : vector<16x32xf32>
    %190 = vector.multi_reduction <add>, %189, %cst_57 [0] : vector<4x16x32xf32> to vector<16x32xf32>
    %191 = vector.extract_strided_slice %0 {offsets = [7, 0], sizes = [1, 32], strides = [1, 1]} : vector<15x32xf32> to vector<1x32xf32>
    %192 = vector.broadcast %191 : vector<1x32xf32> to vector<16x32xf32>
    %193 = arith.addf %190, %192 : vector<16x32xf32>
    %194 = arith.addf %112, %193 : vector<16x32xf32>
    %cst_58 = arith.constant dense<0.000000e+00> : vector<16xf32>
    %195 = vector.multi_reduction <add>, %194, %cst_58 [1] : vector<16x32xf32> to vector<16xf32>
    %196 = vector.shape_cast %195 : vector<16xf32> to vector<16x1xf32>
    %cst_59 = arith.constant 3.200000e+01 : f32
    %197 = vector.broadcast %cst_59 : f32 to vector<16x1xf32>
    %198 = arith.divf %196, %197 : vector<16x1xf32>
    %199 = vector.broadcast %198 : vector<16x1xf32> to vector<16x32xf32>
    %200 = arith.subf %194, %199 : vector<16x32xf32>
    %201 = arith.mulf %200, %200 : vector<16x32xf32>
    %cst_60 = arith.constant dense<0.000000e+00> : vector<16xf32>
    %202 = vector.multi_reduction <add>, %201, %cst_60 [1] : vector<16x32xf32> to vector<16xf32>
    %203 = vector.shape_cast %202 : vector<16xf32> to vector<16x1xf32>
    %cst_61 = arith.constant 3.200000e+01 : f32
    %204 = vector.broadcast %cst_61 : f32 to vector<16x1xf32>
    %205 = arith.divf %203, %204 : vector<16x1xf32>
    %206 = vector.broadcast %198 : vector<16x1xf32> to vector<16x32xf32>
    %207 = arith.subf %194, %206 : vector<16x32xf32>
    %cst_62 = arith.constant 9.99999974E-6 : f32
    %208 = vector.broadcast %cst_62 : f32 to vector<16x1xf32>
    %209 = arith.addf %205, %208 : vector<16x1xf32>
    %210 = math.rsqrt %209 : vector<16x1xf32>
    %211 = vector.broadcast %210 : vector<16x1xf32> to vector<16x32xf32>
    %212 = arith.mulf %207, %211 : vector<16x32xf32>
    %213 = vector.extract_strided_slice %0 {offsets = [10, 0], sizes = [1, 32], strides = [1, 1]} : vector<15x32xf32> to vector<1x32xf32>
    %214 = vector.broadcast %213 : vector<1x32xf32> to vector<16x32xf32>
    %215 = arith.mulf %212, %214 : vector<16x32xf32>
    %216 = vector.extract_strided_slice %0 {offsets = [11, 0], sizes = [1, 32], strides = [1, 1]} : vector<15x32xf32> to vector<1x32xf32>
    %217 = vector.broadcast %216 : vector<1x32xf32> to vector<16x32xf32>
    %218 = arith.addf %215, %217 : vector<16x32xf32>
    %219 = arith.truncf %218 : vector<16x32xf32> to vector<16x32xbf16>
    %c0_63 = arith.constant 0 : index
    %c0_64 = arith.constant 0 : index
    %220 = vector.load %arg6[%c0_63, %c0_64] : memref<32x64xbf16, #tpu.memory_space<vmem>>, vector<32x64xbf16>
    %cst_65 = arith.constant dense<0.000000e+00> : vector<16x64xf32>
    %221 = tpu.matmul %219, %220, %cst_65 {dimension_numbers = #tpu.dot_dimension_numbers<[1], [0], [0], [1], [0, 0, 1, 1], [], []>} : vector<16x32xbf16>, vector<32x64xbf16>, vector<16x64xf32> -> vector<16x64xf32>
    %c0_66 = arith.constant 0 : index
    %c0_67 = arith.constant 0 : index
    %222 = vector.load %arg9[%c0_66, %c0_67] : memref<1x64xf32, #tpu.memory_space<vmem>>, vector<1x64xf32>
    %223 = vector.broadcast %222 : vector<1x64xf32> to vector<16x64xf32>
    %224 = arith.addf %221, %223 : vector<16x64xf32>
    %cst_68 = arith.constant 0.000000e+00 : f32
    %225 = vector.broadcast %cst_68 : f32 to vector<16x64xf32>
    %226 = arith.maximumf %224, %225 : vector<16x64xf32>
    %227 = arith.truncf %226 : vector<16x64xf32> to vector<16x64xbf16>
    %c0_69 = arith.constant 0 : index
    %c0_70 = arith.constant 0 : index
    %228 = vector.load %arg7[%c0_69, %c0_70] : memref<64x32xbf16, #tpu.memory_space<vmem>>, vector<64x32xbf16>
    %cst_71 = arith.constant dense<0.000000e+00> : vector<16x32xf32>
    %229 = tpu.matmul %227, %228, %cst_71 {dimension_numbers = #tpu.dot_dimension_numbers<[1], [0], [0], [1], [0, 0, 1, 1], [], []>} : vector<16x64xbf16>, vector<64x32xbf16>, vector<16x32xf32> -> vector<16x32xf32>
    %230 = vector.extract_strided_slice %0 {offsets = [14, 0], sizes = [1, 32], strides = [1, 1]} : vector<15x32xf32> to vector<1x32xf32>
    %231 = vector.broadcast %230 : vector<1x32xf32> to vector<16x32xf32>
    %232 = arith.addf %229, %231 : vector<16x32xf32>
    %233 = arith.addf %218, %232 : vector<16x32xf32>
    %cst_72 = arith.constant dense<0.000000e+00> : vector<16xf32>
    %234 = vector.multi_reduction <add>, %233, %cst_72 [1] : vector<16x32xf32> to vector<16xf32>
    %235 = vector.shape_cast %234 : vector<16xf32> to vector<16x1xf32>
    %cst_73 = arith.constant 3.200000e+01 : f32
    %236 = vector.broadcast %cst_73 : f32 to vector<16x1xf32>
    %237 = arith.divf %235, %236 : vector<16x1xf32>
    %238 = vector.broadcast %237 : vector<16x1xf32> to vector<16x32xf32>
    %239 = arith.subf %233, %238 : vector<16x32xf32>
    %240 = arith.mulf %239, %239 : vector<16x32xf32>
    %cst_74 = arith.constant dense<0.000000e+00> : vector<16xf32>
    %241 = vector.multi_reduction <add>, %240, %cst_74 [1] : vector<16x32xf32> to vector<16xf32>
    %242 = vector.shape_cast %241 : vector<16xf32> to vector<16x1xf32>
    %cst_75 = arith.constant 3.200000e+01 : f32
    %243 = vector.broadcast %cst_75 : f32 to vector<16x1xf32>
    %244 = arith.divf %242, %243 : vector<16x1xf32>
    %245 = vector.broadcast %237 : vector<16x1xf32> to vector<16x32xf32>
    %246 = arith.subf %233, %245 : vector<16x32xf32>
    %cst_76 = arith.constant 9.99999974E-6 : f32
    %247 = vector.broadcast %cst_76 : f32 to vector<16x1xf32>
    %248 = arith.addf %244, %247 : vector<16x1xf32>
    %249 = math.rsqrt %248 : vector<16x1xf32>
    %250 = vector.broadcast %249 : vector<16x1xf32> to vector<16x32xf32>
    %251 = arith.mulf %246, %250 : vector<16x32xf32>
    %252 = vector.extract_strided_slice %0 {offsets = [12, 0], sizes = [1, 32], strides = [1, 1]} : vector<15x32xf32> to vector<1x32xf32>
    %253 = vector.broadcast %252 : vector<1x32xf32> to vector<16x32xf32>
    %254 = arith.mulf %251, %253 : vector<16x32xf32>
    %255 = vector.extract_strided_slice %0 {offsets = [13, 0], sizes = [1, 32], strides = [1, 1]} : vector<15x32xf32> to vector<1x32xf32>
    %256 = vector.broadcast %255 : vector<1x32xf32> to vector<16x32xf32>
    %257 = arith.addf %254, %256 : vector<16x32xf32>
    %258 = vector.shape_cast %257 : vector<16x32xf32> to vector<2x8x32xf32>
    %c0_77 = arith.constant 0 : index
    %c0_78 = arith.constant 0 : index
    %c0_79 = arith.constant 0 : index
    %259 = vector.load %arg10[%c0_77, %c0_78, %c0_79] : memref<2x8x32xf32, #tpu.memory_space<vmem>>, vector<2x8x32xf32>
    tpu.vector_store %arg10[%c0_77, %c0_78, %c0_79], %258 {strides = array<i32>} : memref<2x8x32xf32, #tpu.memory_space<vmem>>, vector<2x8x32xf32>,
    %c0_80 = arith.constant 0 : index
    %c0_81 = arith.constant 0 : index
    %c0_82 = arith.constant 0 : index
    %c0_83 = arith.constant 0 : index
    %260 = vector.load %arg11[%c0_80, %c0_81, %c0_82, %c0_83] : memref<4x2x8x16xf32, #tpu.memory_space<vmem>>, vector<4x2x8x16xf32>
    tpu.vector_store %arg11[%c0_80, %c0_81, %c0_82, %c0_83], %182 {strides = array<i32>} : memref<4x2x8x16xf32, #tpu.memory_space<vmem>>, vector<4x2x8x16xf32>,
    return
  }
}

</mosaic_0001>

<llo_original>
// kernel: decoder_layer_forward.1
$region0: #{decoder_layer_forward.1}
  #allocation0 [shape = 'u32[]', space=smem, size = 0x4, offset = 0x4, fixed_abs, tag = 'smem constant byte address 0x4 - core index']
  #allocation1 [shape = 'u32[144,128]{1,0:T(1,128)}', space=vmem, size = 0x12000, scoped, tag = 'internal scratch']
  %s0 = inlined_call_operand.vmem [shape: f32[2,8,32], index: 0, kind: input, shape index: {}]
  %s1 = inlined_call_operand.vmem [shape: f32[2,16,32], index: 1, kind: input, shape index: {}]
  %s2 = inlined_call_operand.vmem [shape: f32[2,8,8], index: 2, kind: input, shape index: {}]
  %s3 = inlined_call_operand.vmem [shape: f32[2,1,16], index: 3, kind: input, shape index: {}]
  %s4 = inlined_call_operand.vmem [shape: bf16[6,32,32], index: 4, kind: input, shape index: {}]
  %s5 = inlined_call_operand.vmem [shape: bf16[2,4,8,32], index: 5, kind: input, shape index: {}]
  %s6 = inlined_call_operand.vmem [shape: bf16[32,64], index: 6, kind: input, shape index: {}]
  %s7 = inlined_call_operand.vmem [shape: bf16[64,32], index: 7, kind: input, shape index: {}]
  %s8 = inlined_call_operand.vmem [shape: f32[15,32], index: 8, kind: input, shape index: {}]
  %s9 = inlined_call_operand.vmem [shape: f32[1,64], index: 9, kind: input, shape index: {}]
  %s10 = inlined_call_operand.hbm [shape: f32[2,8,32], index: 10, kind: output, shape index: {0}]
  %s11 = inlined_call_operand.vmem [shape: f32[4,2,8,16], index: 11, kind: output, shape index: {1}]
  %12 = xla_tuple %s10, %s11
  %s13 = sld [smem:[#allocation0]]
  $region58: #{decoder_layer_forward.1} parent=0
    _
  %s15 = ssub.s32 1, %s13
  %s16 = scalar_select 0, %s15, %s13
  $region1: #{decoder_layer_forward.1} parent=0
    #allocation2 [shape = 'u8[8192]{0}', space=vmem, size = 0x2000, scoped, tag = 'output window, operand 0, single buffered']
    #allocation3 [shape = 's32[1]{0}', space=sflag, size = 0x4, scoped, tag = 'scoped memory for decoder_layer_forward.1']
    %17 = vsyncpa [#allocation3], 0
    // Predicated region
    $region2: #{decoder_layer_forward.1} parent=1 // pred_check
      _
    $region3: #{decoder_layer_forward.1} parent=1 // pred_check_branch
      %19 = sbr.rel (0) target = $region5
    $region4: #{decoder_layer_forward.1} parent=1 // pred_region
      _
    $region5: #{decoder_layer_forward.1} parent=1 // pred_fallthru
      _
    // Predicated region
    $region6: #{decoder_layer_forward.1} parent=1 // pred_check
      _
    $region7: #{decoder_layer_forward.1} parent=1 // pred_check_branch
      %21 = sbr.rel (0) target = $region9
    $region8: #{decoder_layer_forward.1} parent=1 // pred_region
      _
    $region9: #{decoder_layer_forward.1} parent=1 // pred_fallthru
      _
    // Predicated region
    $region10: #{decoder_layer_forward.1} parent=1 // pred_check
      _
    $region11: #{decoder_layer_forward.1} parent=1 // pred_check_branch
      %23 = sbr.rel (0) target = $region13
    $region12: #{decoder_layer_forward.1} parent=1 // pred_region
      _
    $region13: #{decoder_layer_forward.1} parent=1 // pred_fallthru
      _
    // Predicated region
    $region14: #{decoder_layer_forward.1} parent=1 // pred_check
      _
    $region15: #{decoder_layer_forward.1} parent=1 // pred_check_branch
      %25 = sbr.rel (0) target = $region17
    $region16: #{decoder_layer_forward.1} parent=1 // pred_region
      _
    $region17: #{decoder_layer_forward.1} parent=1 // pred_fallthru
      _
    // Predicated region
    $region18: #{decoder_layer_forward.1} parent=1 // pred_check
      _
    $region19: #{decoder_layer_forward.1} parent=1 // pred_check_branch
      %27 = sbr.rel (0) target = $region21
    $region20: #{decoder_layer_forward.1} parent=1 // pred_region
      _
    $region21: #{decoder_layer_forward.1} parent=1 // pred_fallthru
      _
    // Predicated region
    $region22: #{decoder_layer_forward.1} parent=1 // pred_check
      _
    $region23: #{decoder_layer_forward.1} parent=1 // pred_check_branch
      %29 = sbr.rel (0) target = $region25
    $region24: #{decoder_layer_forward.1} parent=1 // pred_region
      _
    $region25: #{decoder_layer_forward.1} parent=1 // pred_fallthru
      _
    // Predicated region
    $region26: #{decoder_layer_forward.1} parent=1 // pred_check
      _
    $region27: #{decoder_layer_forward.1} parent=1 // pred_check_branch
      %31 = sbr.rel (0) target = $region29
    $region28: #{decoder_layer_forward.1} parent=1 // pred_region
      _
    $region29: #{decoder_layer_forward.1} parent=1 // pred_fallthru
      _
    // Predicated region
    $region30: #{decoder_layer_forward.1} parent=1 // pred_check
      _
    $region31: #{decoder_layer_forward.1} parent=1 // pred_check_branch
      %33 = sbr.rel (0) target = $region33
    $region32: #{decoder_layer_forward.1} parent=1 // pred_region
      _
    $region33: #{decoder_layer_forward.1} parent=1 // pred_fallthru
      _
    // Predicated region
    $region34: #{decoder_layer_forward.1} parent=1 // pred_check
      _
    $region35: #{decoder_layer_forward.1} parent=1 // pred_check_branch
      %35 = sbr.rel (0) target = $region37
    $region36: #{decoder_layer_forward.1} parent=1 // pred_region
      _
    $region37: #{decoder_layer_forward.1} parent=1 // pred_fallthru
      _
    // Predicated region
    $region38: #{decoder_layer_forward.1} parent=1 // pred_check
      _
    $region39: #{decoder_layer_forward.1} parent=1 // pred_check_branch
      %37 = sbr.rel (0) target = $region41
    $region40: #{decoder_layer_forward.1} parent=1 // pred_region
      _
    $region41: #{decoder_layer_forward.1} parent=1 // pred_fallthru
      _
    %v39 = vld [vmem:[%s8] sm:$0xff]
    %v40 = vld [vmem:[%s8 + $0x8] sm:$0x7f]
    %v41 = vld [vmem:[%s0] sm:$0xff]
    %v42 = vld [vmem:[%s0 + $0x8] sm:$0xff]
    %v43 = vld [vmem:[%s1] sm:$0xff]
    %v44 = vld [vmem:[%s1 + $0x8] sm:$0xff]
    %v45 = vld [vmem:[%s1 + $0x10] sm:$0xff]
    %v46 = vld [vmem:[%s1 + $0x18] sm:$0xff]
    %v47 = vld [vmem:[%s2] sm:$0xff]
    %v48 = vld [vmem:[%s2 + $0x8] sm:$0xff]
    %v49 = vld [vmem:[%s3] sm:$0x1]
    %v50 = vld [vmem:[%s3 + $0x1] sm:$0x1]
    %v51 = vld [vmem:[%s5] sm:$0xf]
    %v52 = vld [vmem:[%s5 + $0x4] sm:$0xf]
    %v53 = vld [vmem:[%s5 + $0x8] sm:$0xf]
    %v54 = vld [vmem:[%s5 + $0xc] sm:$0xf]
    %v55 = vpack.c.bf16 %v42, %v41
    %v56 = vld [vmem:[%s4] sm:$0xf]
    %v57 = vld [vmem:[%s4 + $0x4] sm:$0xf]
    %v58 = vld [vmem:[%s4 + $0x8] sm:$0xf]
    %v59 = vld [vmem:[%s4 + $0xc] sm:$0xf]
    %v60 = vlaneseq
    %v61 = vshrl.u32 %v60, 7
    %v62 = vsub.s32 0, %v61
    %v63 = vrot.slane %v39, %v62
    %v68 = vunpack.c.l.b16 %v56
    %v69 = vunpack.c.l.b16 %v57
    %v70 = vunpack.c.l.b16 %v58
    %v71 = vunpack.c.l.b16 %v59
    %v72 = vpack.c.b16 %v69, %v68
    %v73 = vpack.c.b16 %v71, %v70
    %vm76 = vcmask 261120
    %v78 = vsel %vm76, %v55, 0
    %80 = vmatprep.subr.bf16.mxu0 0
    %81 = vmatpush1.bf16.msra.mxu0 %v72
    %82 = vmatprep.subr.bf16.mxu0 0
    %83 = vmatpush1.bf16.msra.mxu0 %v73
    %84 = vmatprep.subr.bf16.mxu0 0
    %85 = vmatpush1.bf16.msra.mxu0 0
    %86 = vmatprep.subr.bf16.mxu0 0
    %87 = vmatpush1.bf16.msra.mxu0 0
    %88 = vmatprep.subr.bf16.mxu0 0
    %89 = vmatpush1.bf16.msra.mxu0 0
    %90 = vmatprep.subr.bf16.mxu0 0
    %91 = vmatpush1.bf16.msra.mxu0 0
    %92 = vmatprep.subr.bf16.mxu0 0
    %93 = vmatpush1.bf16.msra.mxu0 0
    %94 = vmatprep.subr.bf16.mxu0 0
    %95 = vmatpush1.bf16.msra.mxu0 0
    %96 = vmatprep.subr.bf16.mxu0 0
    %97 = vmatpush1.bf16.msra.mxu0 0
    %98 = vmatprep.subr.bf16.mxu0 0
    %99 = vmatpush1.bf16.msra.mxu0 0
    %100 = vmatprep.subr.bf16.mxu0 0
    %101 = vmatpush1.bf16.msra.mxu0 0
    %102 = vmatprep.subr.bf16.mxu0 0
    %103 = vmatpush1.bf16.msra.mxu0 0
    %104 = vmatprep.subr.bf16.mxu0 0
    %105 = vmatpush1.bf16.msra.mxu0 0
    %106 = vmatprep.subr.bf16.mxu0 0
    %107 = vmatpush1.bf16.msra.mxu0 0
    %108 = vmatprep.subr.bf16.mxu0 0
    %109 = vmatpush1.bf16.msra.mxu0 0
    %110 = vmatprep.subr.bf16.mxu0 0
    %111 = vmatpush1.bf16.msra.mxu0 0
    %112 = vmatprep.mubr.bf16.mxu0 0
    %113 = vmatmul.mubr.bf16.gmra.mrb[0].mxu0 %v78
    %v114 = vpop.f32.mrb[0].mxu0
    %v115 = vadd.f32 %v63, %v114
    %v116 = vpop.f32.mrb[0].mxu0
    %v117 = vpop.f32.mrb[0].mxu0
    %v118 = vadd.f32 %v63, %v117
    %v119 = vpop.f32.mrb[0].mxu0
    %120 = vdwg.mxu0
    %s121 = scalar_lea.vmem %s4, 16
    %v122 = vld [vmem:[%s121] sm:$0xf]
    %v123 = vld [vmem:[%s121 + $0x4] sm:$0xf]
    %v124 = vld [vmem:[%s121 + $0x8] sm:$0xf]
    %v125 = vld [vmem:[%s121 + $0xc] sm:$0xf]
    %v126 = vlaneseq
    %v127 = vshrl.u32 %v126, 7
    %v128 = vsub.s32 1, %v127
    %v129 = vrot.slane %v39, %v128
    %v134 = vunpack.c.l.b16 %v122
    %v135 = vunpack.c.l.b16 %v123
    %v136 = vunpack.c.l.b16 %v124
    %v137 = vunpack.c.l.b16 %v125
    %v138 = vpack.c.b16 %v135, %v134
    %v139 = vpack.c.b16 %v137, %v136
    %142 = vmatprep.subr.bf16.mxu0 0
    %143 = vmatpush1.bf16.msra.mxu0 %v138
    %144 = vmatprep.subr.bf16.mxu0 0
    %145 = vmatpush1.bf16.msra.mxu0 %v139
    %146 = vmatprep.subr.bf16.mxu0 0
    %147 = vmatpush1.bf16.msra.mxu0 0
    %148 = vmatprep.subr.bf16.mxu0 0
    %149 = vmatpush1.bf16.msra.mxu0 0
    %150 = vmatprep.subr.bf16.mxu0 0
    %151 = vmatpush1.bf16.msra.mxu0 0
    %152 = vmatprep.subr.bf16.mxu0 0
    %153 = vmatpush1.bf16.msra.mxu0 0
    %154 = vmatprep.subr.bf16.mxu0 0
    %155 = vmatpush1.bf16.msra.mxu0 0
    %156 = vmatprep.subr.bf16.mxu0 0
    %157 = vmatpush1.bf16.msra.mxu0 0
    %158 = vmatprep.subr.bf16.mxu0 0
    %159 = vmatpush1.bf16.msra.mxu0 0
    %160 = vmatprep.subr.bf16.mxu0 0
    %161 = vmatpush1.bf16.msra.mxu0 0
    %162 = vmatprep.subr.bf16.mxu0 0
    %163 = vmatpush1.bf16.msra.mxu0 0
    %164 = vmatprep.subr.bf16.mxu0 0
    %165 = vmatpush1.bf16.msra.mxu0 0
    %166 = vmatprep.subr.bf16.mxu0 0
    %167 = vmatpush1.bf16.msra.mxu0 0
    %168 = vmatprep.subr.bf16.mxu0 0
    %169 = vmatpush1.bf16.msra.mxu0 0
    %170 = vmatprep.subr.bf16.mxu0 0
    %171 = vmatpush1.bf16.msra.mxu0 0
    %172 = vmatprep.subr.bf16.mxu0 0
    %173 = vmatpush1.bf16.msra.mxu0 0
    %174 = vmatprep.mubr.bf16.mxu0 0
    %175 = vmatmul.mubr.bf16.gmra.mrb[0].mxu0 %v78
    %v176 = vpop.f32.mrb[0].mxu0
    %v177 = vadd.f32 %v129, %v176
    %v178 = vpop.f32.mrb[0].mxu0
    %v179 = vpop.f32.mrb[0].mxu0
    %v180 = vadd.f32 %v129, %v179
    %v181 = vpop.f32.mrb[0].mxu0
    %182 = vdwg.mxu0
    %s183 = scalar_lea.vmem %s4, 32
    %v184 = vld [vmem:[%s183] sm:$0xf]
    %v185 = vld [vmem:[%s183 + $0x4] sm:$0xf]
    %v186 = vld [vmem:[%s183 + $0x8] sm:$0xf]
    %v187 = vld [vmem:[%s183 + $0xc] sm:$0xf]
    %v188 = vlaneseq
    %v189 = vshrl.u32 %v188, 7
    %v190 = vsub.s32 2, %v189
    %v191 = vrot.slane %v39, %v190
    %v196 = vunpack.c.l.b16 %v184
    %v197 = vunpack.c.l.b16 %v185
    %v198 = vunpack.c.l.b16 %v186
    %v199 = vunpack.c.l.b16 %v187
    %v200 = vpack.c.b16 %v197, %v196
    %v201 = vpack.c.b16 %v199, %v198
    %204 = vmatprep.subr.bf16.mxu0 0
    %205 = vmatpush1.bf16.msra.mxu0 %v200
    %206 = vmatprep.subr.bf16.mxu0 0
    %207 = vmatpush1.bf16.msra.mxu0 %v201
    %208 = vmatprep.subr.bf16.mxu0 0
    %209 = vmatpush1.bf16.msra.mxu0 0
    %210 = vmatprep.subr.bf16.mxu0 0
    %211 = vmatpush1.bf16.msra.mxu0 0
    %212 = vmatprep.subr.bf16.mxu0 0
    %213 = vmatpush1.bf16.msra.mxu0 0
    %214 = vmatprep.subr.bf16.mxu0 0
    %215 = vmatpush1.bf16.msra.mxu0 0
    %216 = vmatprep.subr.bf16.mxu0 0
    %217 = vmatpush1.bf16.msra.mxu0 0
    %218 = vmatprep.subr.bf16.mxu0 0
    %219 = vmatpush1.bf16.msra.mxu0 0
    %220 = vmatprep.subr.bf16.mxu0 0
    %221 = vmatpush1.bf16.msra.mxu0 0
    %222 = vmatprep.subr.bf16.mxu0 0
    %223 = vmatpush1.bf16.msra.mxu0 0
    %224 = vmatprep.subr.bf16.mxu0 0
    %225 = vmatpush1.bf16.msra.mxu0 0
    %226 = vmatprep.subr.bf16.mxu0 0
    %227 = vmatpush1.bf16.msra.mxu0 0
    %228 = vmatprep.subr.bf16.mxu0 0
    %229 = vmatpush1.bf16.msra.mxu0 0
    %230 = vmatprep.subr.bf16.mxu0 0
    %231 = vmatpush1.bf16.msra.mxu0 0
    %232 = vmatprep.subr.bf16.mxu0 0
    %233 = vmatpush1.bf16.msra.mxu0 0
    %234 = vmatprep.subr.bf16.mxu0 0
    %235 = vmatpush1.bf16.msra.mxu0 0
    %236 = vmatprep.mubr.bf16.mxu0 0
    %237 = vmatmul.mubr.bf16.gmra.mrb[0].mxu0 %v78
    %v238 = vpop.f32.mrb[0].mxu0
    %v239 = vadd.f32 %v191, %v238
    %v240 = vpop.f32.mrb[0].mxu0
    %v241 = vpop.f32.mrb[0].mxu0
    %v242 = vadd.f32 %v191, %v241
    %v243 = vpop.f32.mrb[0].mxu0
    %244 = vdwg.mxu0
    %247 = vrot.lane.b32.xlu0 %v115, 120
    %v248 = vpop.permute.xlu0 %247
    %249 = vrot.lane.b32.xlu0 %v118, 120
    %v250 = vpop.permute.xlu0 %249
    %253 = vrot.lane.b32.xlu0 %v115, 112
    %v254 = vpop.permute.xlu0 %253
    %255 = vrot.lane.b32.xlu0 %v118, 112
    %v256 = vpop.permute.xlu0 %255
    %259 = vrot.lane.b32.xlu0 %v115, 104
    %v260 = vpop.permute.xlu0 %259
    %261 = vrot.lane.b32.xlu0 %v118, 104
    %v262 = vpop.permute.xlu0 %261
    %267 = vrot.lane.b32.xlu0 %v177, 120
    %v268 = vpop.permute.xlu0 %267
    %269 = vrot.lane.b32.xlu0 %v180, 120
    %v270 = vpop.permute.xlu0 %269
    %273 = vrot.lane.b32.xlu0 %v177, 112
    %v274 = vpop.permute.xlu0 %273
    %275 = vrot.lane.b32.xlu0 %v180, 112
    %v276 = vpop.permute.xlu0 %275
    %279 = vrot.lane.b32.xlu0 %v177, 104
    %v280 = vpop.permute.xlu0 %279
    %281 = vrot.lane.b32.xlu0 %v180, 104
    %v282 = vpop.permute.xlu0 %281
    %287 = vrot.lane.b32.xlu0 %v239, 120
    %v288 = vpop.permute.xlu0 %287
    %289 = vrot.lane.b32.xlu0 %v242, 120
    %v290 = vpop.permute.xlu0 %289
    %293 = vrot.lane.b32.xlu0 %v239, 112
    %v294 = vpop.permute.xlu0 %293
    %295 = vrot.lane.b32.xlu0 %v242, 112
    %v296 = vpop.permute.xlu0 %295
    %299 = vrot.lane.b32.xlu0 %v239, 104
    %v300 = vpop.permute.xlu0 %299
    %301 = vrot.lane.b32.xlu0 %v242, 104
    %v302 = vpop.permute.xlu0 %301
    %v305 = vpack.c.bf16 %v115, %v115
    %v306 = vpack.c.bf16 %v118, %v118
    %v307 = vpack.c.bf16 %v248, %v248
    %v308 = vpack.c.bf16 %v250, %v250
    %v309 = vpack.c.bf16 %v254, %v254
    %v310 = vpack.c.bf16 %v256, %v256
    %v311 = vpack.c.bf16 %v260, %v260
    %v312 = vpack.c.bf16 %v262, %v262
    %v313 = vpack.c.bf16 %v177, %v177
    %v314 = vpack.c.bf16 %v180, %v180
    %v315 = vpack.c.bf16 %v268, %v268
    %v316 = vpack.c.bf16 %v270, %v270
    %v317 = vpack.c.bf16 %v274, %v274
    %v318 = vpack.c.bf16 %v276, %v276
    %v319 = vpack.c.bf16 %v280, %v280
    %v320 = vpack.c.bf16 %v282, %v282
    %vm321 = vcmask 64512
    %v323 = vsel %vm321, %v305, 0
    %v326 = vsel %vm321, %v313, 0
    %328 = vmatprep.subr.bf16.mxu0 0
    %329 = vmatpush1.bf16.xpose.msra.mxu0 %v326
    %330 = vmatprep.subr.bf16.mxu0 0
    %331 = vmatpush1.bf16.xpose.msra.mxu0 0
    %332 = vmatprep.subr.bf16.mxu0 0
    %333 = vmatpush1.bf16.xpose.msra.mxu0 0
    %334 = vmatprep.subr.bf16.mxu0 0
    %335 = vmatpush1.bf16.xpose.msra.mxu0 0
    %336 = vmatprep.subr.bf16.mxu0 0
    %337 = vmatpush1.bf16.xpose.msra.mxu0 0
    %338 = vmatprep.subr.bf16.mxu0 0
    %339 = vmatpush1.bf16.xpose.msra.mxu0 0
    %340 = vmatprep.subr.bf16.mxu0 0
    %341 = vmatpush1.bf16.xpose.msra.mxu0 0
    %342 = vmatprep.subr.bf16.mxu0 0
    %343 = vmatpush1.bf16.xpose.msra.mxu0 0
    %344 = vmatprep.subr.bf16.mxu0 0
    %345 = vmatpush1.bf16.xpose.msra.mxu0 0
    %346 = vmatprep.subr.bf16.mxu0 0
    %347 = vmatpush1.bf16.xpose.msra.mxu0 0
    %348 = vmatprep.subr.bf16.mxu0 0
    %349 = vmatpush1.bf16.xpose.msra.mxu0 0
    %350 = vmatprep.subr.bf16.mxu0 0
    %351 = vmatpush1.bf16.xpose.msra.mxu0 0
    %352 = vmatprep.subr.bf16.mxu0 0
    %353 = vmatpush1.bf16.xpose.msra.mxu0 0
    %354 = vmatprep.subr.bf16.mxu0 0
    %355 = vmatpush1.bf16.xpose.msra.mxu0 0
    %356 = vmatprep.subr.bf16.mxu0 0
    %357 = vmatpush1.bf16.xpose.msra.mxu0 0
    %358 = vmatprep.subr.bf16.mxu0 0
    %359 = vmatpush1.bf16.xpose.msra.mxu0 0
    %360 = vmatprep.mubr.bf16.mxu0 0
    %361 = vmatmul.mubr.bf16.gmra.mrb[0].mxu0 %v323
    %v362 = vpop.f32.mrb[0].mxu0
    %v363 = vadd.f32 0.0, %v362
    %v364 = vpop.f32.mrb[0].mxu0
    %v365 = vpop.f32.mrb[0].mxu0
    %v366 = vpop.f32.mrb[0].mxu0
    %367 = vdwg.mxu0
    %v369 = vsel %vm321, %v306, 0
    %v372 = vsel %vm321, %v314, 0
    %374 = vmatprep.subr.bf16.mxu0 0
    %375 = vmatpush1.bf16.xpose.msra.mxu0 %v372
    %376 = vmatprep.subr.bf16.mxu0 0
    %377 = vmatpush1.bf16.xpose.msra.mxu0 0
    %378 = vmatprep.subr.bf16.mxu0 0
    %379 = vmatpush1.bf16.xpose.msra.mxu0 0
    %380 = vmatprep.subr.bf16.mxu0 0
    %381 = vmatpush1.bf16.xpose.msra.mxu0 0
    %382 = vmatprep.subr.bf16.mxu0 0
    %383 = vmatpush1.bf16.xpose.msra.mxu0 0
    %384 = vmatprep.subr.bf16.mxu0 0
    %385 = vmatpush1.bf16.xpose.msra.mxu0 0
    %386 = vmatprep.subr.bf16.mxu0 0
    %387 = vmatpush1.bf16.xpose.msra.mxu0 0
    %388 = vmatprep.subr.bf16.mxu0 0
    %389 = vmatpush1.bf16.xpose.msra.mxu0 0
    %390 = vmatprep.subr.bf16.mxu0 0
    %391 = vmatpush1.bf16.xpose.msra.mxu0 0
    %392 = vmatprep.subr.bf16.mxu0 0
    %393 = vmatpush1.bf16.xpose.msra.mxu0 0
    %394 = vmatprep.subr.bf16.mxu0 0
    %395 = vmatpush1.bf16.xpose.msra.mxu0 0
    %396 = vmatprep.subr.bf16.mxu0 0
    %397 = vmatpush1.bf16.xpose.msra.mxu0 0
    %398 = vmatprep.subr.bf16.mxu0 0
    %399 = vmatpush1.bf16.xpose.msra.mxu0 0
    %400 = vmatprep.subr.bf16.mxu0 0
    %401 = vmatpush1.bf16.xpose.msra.mxu0 0
    %402 = vmatprep.subr.bf16.mxu0 0
    %403 = vmatpush1.bf16.xpose.msra.mxu0 0
    %404 = vmatprep.subr.bf16.mxu0 0
    %405 = vmatpush1.bf16.xpose.msra.mxu0 0
    %406 = vmatprep.mubr.bf16.mxu0 0
    %407 = vmatmul.mubr.bf16.gmra.mrb[0].mxu0 %v369
    %v408 = vpop.f32.mrb[0].mxu0
    %v409 = vadd.f32 0.0, %v408
    %v410 = vpop.f32.mrb[0].mxu0
    %v411 = vpop.f32.mrb[0].mxu0
    %v412 = vpop.f32.mrb[0].mxu0
    %413 = vdwg.mxu0
    %v415 = vsel %vm321, %v307, 0
    %v418 = vsel %vm321, %v315, 0
    %420 = vmatprep.subr.bf16.mxu0 0
    %421 = vmatpush1.bf16.xpose.msra.mxu0 %v418
    %422 = vmatprep.subr.bf16.mxu0 0
    %423 = vmatpush1.bf16.xpose.msra.mxu0 0
    %424 = vmatprep.subr.bf16.mxu0 0
    %425 = vmatpush1.bf16.xpose.msra.mxu0 0
    %426 = vmatprep.subr.bf16.mxu0 0
    %427 = vmatpush1.bf16.xpose.msra.mxu0 0
    %428 = vmatprep.subr.bf16.mxu0 0
    %429 = vmatpush1.bf16.xpose.msra.mxu0 0
    %430 = vmatprep.subr.bf16.mxu0 0
    %431 = vmatpush1.bf16.xpose.msra.mxu0 0
    %432 = vmatprep.subr.bf16.mxu0 0
    %433 = vmatpush1.bf16.xpose.msra.mxu0 0
    %434 = vmatprep.subr.bf16.mxu0 0
    %435 = vmatpush1.bf16.xpose.msra.mxu0 0
    %436 = vmatprep.subr.bf16.mxu0 0
    %437 = vmatpush1.bf16.xpose.msra.mxu0 0
    %438 = vmatprep.subr.bf16.mxu0 0
    %439 = vmatpush1.bf16.xpose.msra.mxu0 0
    %440 = vmatprep.subr.bf16.mxu0 0
    %441 = vmatpush1.bf16.xpose.msra.mxu0 0
    %442 = vmatprep.subr.bf16.mxu0 0
    %443 = vmatpush1.bf16.xpose.msra.mxu0 0
    %444 = vmatprep.subr.bf16.mxu0 0
    %445 = vmatpush1.bf16.xpose.msra.mxu0 0
    %446 = vmatprep.subr.bf16.mxu0 0
    %447 = vmatpush1.bf16.xpose.msra.mxu0 0
    %448 = vmatprep.subr.bf16.mxu0 0
    %449 = vmatpush1.bf16.xpose.msra.mxu0 0
    %450 = vmatprep.subr.bf16.mxu0 0
    %451 = vmatpush1.bf16.xpose.msra.mxu0 0
    %452 = vmatprep.mubr.bf16.mxu0 0
    %453 = vmatmul.mubr.bf16.gmra.mrb[0].mxu0 %v415
    %v454 = vpop.f32.mrb[0].mxu0
    %v455 = vadd.f32 0.0, %v454
    %v456 = vpop.f32.mrb[0].mxu0
    %v457 = vpop.f32.mrb[0].mxu0
    %v458 = vpop.f32.mrb[0].mxu0
    %459 = vdwg.mxu0
    %v461 = vsel %vm321, %v308, 0
    %v464 = vsel %vm321, %v316, 0
    %466 = vmatprep.subr.bf16.mxu0 0
    %467 = vmatpush1.bf16.xpose.msra.mxu0 %v464
    %468 = vmatprep.subr.bf16.mxu0 0
    %469 = vmatpush1.bf16.xpose.msra.mxu0 0
    %470 = vmatprep.subr.bf16.mxu0 0
    %471 = vmatpush1.bf16.xpose.msra.mxu0 0
    %472 = vmatprep.subr.bf16.mxu0 0
    %473 = vmatpush1.bf16.xpose.msra.mxu0 0
    %474 = vmatprep.subr.bf16.mxu0 0
    %475 = vmatpush1.bf16.xpose.msra.mxu0 0
    %476 = vmatprep.subr.bf16.mxu0 0
    %477 = vmatpush1.bf16.xpose.msra.mxu0 0
    %478 = vmatprep.subr.bf16.mxu0 0
    %479 = vmatpush1.bf16.xpose.msra.mxu0 0
    %480 = vmatprep.subr.bf16.mxu0 0
    %481 = vmatpush1.bf16.xpose.msra.mxu0 0
    %482 = vmatprep.subr.bf16.mxu0 0
    %483 = vmatpush1.bf16.xpose.msra.mxu0 0
    %484 = vmatprep.subr.bf16.mxu0 0
    %485 = vmatpush1.bf16.xpose.msra.mxu0 0
    %486 = vmatprep.subr.bf16.mxu0 0
    %487 = vmatpush1.bf16.xpose.msra.mxu0 0
    %488 = vmatprep.subr.bf16.mxu0 0
    %489 = vmatpush1.bf16.xpose.msra.mxu0 0
    %490 = vmatprep.subr.bf16.mxu0 0
    %491 = vmatpush1.bf16.xpose.msra.mxu0 0
    %492 = vmatprep.subr.bf16.mxu0 0
    %493 = vmatpush1.bf16.xpose.msra.mxu0 0
    %494 = vmatprep.subr.bf16.mxu0 0
    %495 = vmatpush1.bf16.xpose.msra.mxu0 0
    %496 = vmatprep.subr.bf16.mxu0 0
    %497 = vmatpush1.bf16.xpose.msra.mxu0 0
    %498 = vmatprep.mubr.bf16.mxu0 0
    %499 = vmatmul.mubr.bf16.gmra.mrb[0].mxu0 %v461
    %v500 = vpop.f32.mrb[0].mxu0
    %v501 = vadd.f32 0.0, %v500
    %v502 = vpop.f32.mrb[0].mxu0
    %v503 = vpop.f32.mrb[0].mxu0
    %v504 = vpop.f32.mrb[0].mxu0
    %505 = vdwg.mxu0
    %v507 = vsel %vm321, %v309, 0
    %v510 = vsel %vm321, %v317, 0
    %512 = vmatprep.subr.bf16.mxu0 0
    %513 = vmatpush1.bf16.xpose.msra.mxu0 %v510
    %514 = vmatprep.subr.bf16.mxu0 0
    %515 = vmatpush1.bf16.xpose.msra.mxu0 0
    %516 = vmatprep.subr.bf16.mxu0 0
    %517 = vmatpush1.bf16.xpose.msra.mxu0 0
    %518 = vmatprep.subr.bf16.mxu0 0
    %519 = vmatpush1.bf16.xpose.msra.mxu0 0
    %520 = vmatprep.subr.bf16.mxu0 0
    %521 = vmatpush1.bf16.xpose.msra.mxu0 0
    %522 = vmatprep.subr.bf16.mxu0 0
    %523 = vmatpush1.bf16.xpose.msra.mxu0 0
    %524 = vmatprep.subr.bf16.mxu0 0
    %525 = vmatpush1.bf16.xpose.msra.mxu0 0
    %526 = vmatprep.subr.bf16.mxu0 0
    %527 = vmatpush1.bf16.xpose.msra.mxu0 0
    %528 = vmatprep.subr.bf16.mxu0 0
    %529 = vmatpush1.bf16.xpose.msra.mxu0 0
    %530 = vmatprep.subr.bf16.mxu0 0
    %531 = vmatpush1.bf16.xpose.msra.mxu0 0
    %532 = vmatprep.subr.bf16.mxu0 0
    %533 = vmatpush1.bf16.xpose.msra.mxu0 0
    %534 = vmatprep.subr.bf16.mxu0 0
    %535 = vmatpush1.bf16.xpose.msra.mxu0 0
    %536 = vmatprep.subr.bf16.mxu0 0
    %537 = vmatpush1.bf16.xpose.msra.mxu0 0
    %538 = vmatprep.subr.bf16.mxu0 0
    %539 = vmatpush1.bf16.xpose.msra.mxu0 0
    %540 = vmatprep.subr.bf16.mxu0 0
    %541 = vmatpush1.bf16.xpose.msra.mxu0 0
    %542 = vmatprep.subr.bf16.mxu0 0
    %543 = vmatpush1.bf16.xpose.msra.mxu0 0
    %544 = vmatprep.mubr.bf16.mxu0 0
    %545 = vmatmul.mubr.bf16.gmra.mrb[0].mxu0 %v507
    %v546 = vpop.f32.mrb[0].mxu0
    %v547 = vadd.f32 0.0, %v546
    %v548 = vpop.f32.mrb[0].mxu0
    %v549 = vpop.f32.mrb[0].mxu0
    %v550 = vpop.f32.mrb[0].mxu0
    %551 = vdwg.mxu0
    %v553 = vsel %vm321, %v310, 0
    %v556 = vsel %vm321, %v318, 0
    %558 = vmatprep.subr.bf16.mxu0 0
    %559 = vmatpush1.bf16.xpose.msra.mxu0 %v556
    %560 = vmatprep.subr.bf16.mxu0 0
    %561 = vmatpush1.bf16.xpose.msra.mxu0 0
    %562 = vmatprep.subr.bf16.mxu0 0
    %563 = vmatpush1.bf16.xpose.msra.mxu0 0
    %564 = vmatprep.subr.bf16.mxu0 0
    %565 = vmatpush1.bf16.xpose.msra.mxu0 0
    %566 = vmatprep.subr.bf16.mxu0 0
    %567 = vmatpush1.bf16.xpose.msra.mxu0 0
    %568 = vmatprep.subr.bf16.mxu0 0
    %569 = vmatpush1.bf16.xpose.msra.mxu0 0
    %570 = vmatprep.subr.bf16.mxu0 0
    %571 = vmatpush1.bf16.xpose.msra.mxu0 0
    %572 = vmatprep.subr.bf16.mxu0 0
    %573 = vmatpush1.bf16.xpose.msra.mxu0 0
    %574 = vmatprep.subr.bf16.mxu0 0
    %575 = vmatpush1.bf16.xpose.msra.mxu0 0
    %576 = vmatprep.subr.bf16.mxu0 0
    %577 = vmatpush1.bf16.xpose.msra.mxu0 0
    %578 = vmatprep.subr.bf16.mxu0 0
    %579 = vmatpush1.bf16.xpose.msra.mxu0 0
    %580 = vmatprep.subr.bf16.mxu0 0
    %581 = vmatpush1.bf16.xpose.msra.mxu0 0
    %582 = vmatprep.subr.bf16.mxu0 0
    %583 = vmatpush1.bf16.xpose.msra.mxu0 0
    %584 = vmatprep.subr.bf16.mxu0 0
    %585 = vmatpush1.bf16.xpose.msra.mxu0 0
    %586 = vmatprep.subr.bf16.mxu0 0
    %587 = vmatpush1.bf16.xpose.msra.mxu0 0
    %588 = vmatprep.subr.bf16.mxu0 0
    %589 = vmatpush1.bf16.xpose.msra.mxu0 0
    %590 = vmatprep.mubr.bf16.mxu0 0
    %591 = vmatmul.mubr.bf16.gmra.mrb[0].mxu0 %v553
    %v592 = vpop.f32.mrb[0].mxu0
    %v593 = vadd.f32 0.0, %v592
    %v594 = vpop.f32.mrb[0].mxu0
    %v595 = vpop.f32.mrb[0].mxu0
    %v596 = vpop.f32.mrb[0].mxu0
    %597 = vdwg.mxu0
    %v599 = vsel %vm321, %v311, 0
    %v602 = vsel %vm321, %v319, 0
    %604 = vmatprep.subr.bf16.mxu0 0
    %605 = vmatpush1.bf16.xpose.msra.mxu0 %v602
    %606 = vmatprep.subr.bf16.mxu0 0
    %607 = vmatpush1.bf16.xpose.msra.mxu0 0
    %608 = vmatprep.subr.bf16.mxu0 0
    %609 = vmatpush1.bf16.xpose.msra.mxu0 0
    %610 = vmatprep.subr.bf16.mxu0 0
    %611 = vmatpush1.bf16.xpose.msra.mxu0 0
    %612 = vmatprep.subr.bf16.mxu0 0
    %613 = vmatpush1.bf16.xpose.msra.mxu0 0
    %614 = vmatprep.subr.bf16.mxu0 0
    %615 = vmatpush1.bf16.xpose.msra.mxu0 0
    %616 = vmatprep.subr.bf16.mxu0 0
    %617 = vmatpush1.bf16.xpose.msra.mxu0 0
    %618 = vmatprep.subr.bf16.mxu0 0
    %619 = vmatpush1.bf16.xpose.msra.mxu0 0
    %620 = vmatprep.subr.bf16.mxu0 0
    %621 = vmatpush1.bf16.xpose.msra.mxu0 0
    %622 = vmatprep.subr.bf16.mxu0 0
    %623 = vmatpush1.bf16.xpose.msra.mxu0 0
    %624 = vmatprep.subr.bf16.mxu0 0
    %625 = vmatpush1.bf16.xpose.msra.mxu0 0
    %626 = vmatprep.subr.bf16.mxu0 0
    %627 = vmatpush1.bf16.xpose.msra.mxu0 0
    %628 = vmatprep.subr.bf16.mxu0 0
    %629 = vmatpush1.bf16.xpose.msra.mxu0 0
    %630 = vmatprep.subr.bf16.mxu0 0
    %631 = vmatpush1.bf16.xpose.msra.mxu0 0
    %632 = vmatprep.subr.bf16.mxu0 0
    %633 = vmatpush1.bf16.xpose.msra.mxu0 0
    %634 = vmatprep.subr.bf16.mxu0 0
    %635 = vmatpush1.bf16.xpose.msra.mxu0 0
    %636 = vmatprep.mubr.bf16.mxu0 0
    %637 = vmatmul.mubr.bf16.gmra.mrb[0].mxu0 %v599
    %v638 = vpop.f32.mrb[0].mxu0
    %v639 = vadd.f32 0.0, %v638
    %v640 = vpop.f32.mrb[0].mxu0
    %v641 = vpop.f32.mrb[0].mxu0
    %v642 = vpop.f32.mrb[0].mxu0
    %643 = vdwg.mxu0
    %v645 = vsel %vm321, %v312, 0
    %v648 = vsel %vm321, %v320, 0
    %650 = vmatprep.subr.bf16.mxu0 0
    %651 = vmatpush1.bf16.xpose.msra.mxu0 %v648
    %652 = vmatprep.subr.bf16.mxu0 0
    %653 = vmatpush1.bf16.xpose.msra.mxu0 0
    %654 = vmatprep.subr.bf16.mxu0 0
    %655 = vmatpush1.bf16.xpose.msra.mxu0 0
    %656 = vmatprep.subr.bf16.mxu0 0
    %657 = vmatpush1.bf16.xpose.msra.mxu0 0
    %658 = vmatprep.subr.bf16.mxu0 0
    %659 = vmatpush1.bf16.xpose.msra.mxu0 0
    %660 = vmatprep.subr.bf16.mxu0 0
    %661 = vmatpush1.bf16.xpose.msra.mxu0 0
    %662 = vmatprep.subr.bf16.mxu0 0
    %663 = vmatpush1.bf16.xpose.msra.mxu0 0
    %664 = vmatprep.subr.bf16.mxu0 0
    %665 = vmatpush1.bf16.xpose.msra.mxu0 0
    %666 = vmatprep.subr.bf16.mxu0 0
    %667 = vmatpush1.bf16.xpose.msra.mxu0 0
    %668 = vmatprep.subr.bf16.mxu0 0
    %669 = vmatpush1.bf16.xpose.msra.mxu0 0
    %670 = vmatprep.subr.bf16.mxu0 0
    %671 = vmatpush1.bf16.xpose.msra.mxu0 0
    %672 = vmatprep.subr.bf16.mxu0 0
    %673 = vmatpush1.bf16.xpose.msra.mxu0 0
    %674 = vmatprep.subr.bf16.mxu0 0
    %675 = vmatpush1.bf16.xpose.msra.mxu0 0
    %676 = vmatprep.subr.bf16.mxu0 0
    %677 = vmatpush1.bf16.xpose.msra.mxu0 0
    %678 = vmatprep.subr.bf16.mxu0 0
    %679 = vmatpush1.bf16.xpose.msra.mxu0 0
    %680 = vmatprep.subr.bf16.mxu0 0
    %681 = vmatpush1.bf16.xpose.msra.mxu0 0
    %682 = vmatprep.mubr.bf16.mxu0 0
    %683 = vmatmul.mubr.bf16.gmra.mrb[0].mxu0 %v645
    %v684 = vpop.f32.mrb[0].mxu0
    %v685 = vadd.f32 0.0, %v684
    %v686 = vpop.f32.mrb[0].mxu0
    %v687 = vpop.f32.mrb[0].mxu0
    %v688 = vpop.f32.mrb[0].mxu0
    %689 = vdwg.mxu0
    %v690 = vmul.f32 %v363, 0.35355338
    %v691 = vmul.f32 %v409, 0.35355338
    %v692 = vmul.f32 %v455, 0.35355338
    %v693 = vmul.f32 %v501, 0.35355338
    %v694 = vmul.f32 %v547, 0.35355338
    %v695 = vmul.f32 %v593, 0.35355338
    %v696 = vmul.f32 %v639, 0.35355338
    %v697 = vmul.f32 %v685, 0.35355338
    %v698 = vadd.f32 %v690, %v47
    %v699 = vadd.f32 %v691, %v48
    %v700 = vadd.f32 %v692, %v47
    %v701 = vadd.f32 %v693, %v48
    %v702 = vadd.f32 %v694, %v47
    %v703 = vadd.f32 %v695, %v48
    %v704 = vadd.f32 %v696, %v47
    %v705 = vadd.f32 %v697, %v48
    %v706 = vsel %vm321, %v698, -inf
    %707 = vmax.xlane.f32.xlu0 %v706
    %v708 = vpop.xlane.xlu0 %707
    %v709 = vsel %vm321, %v699, -inf
    %710 = vmax.xlane.f32.xlu0 %v709
    %v711 = vpop.xlane.xlu0 %710
    %v712 = vsel %vm321, %v700, -inf
    %713 = vmax.xlane.f32.xlu0 %v712
    %v714 = vpop.xlane.xlu0 %713
    %v715 = vsel %vm321, %v701, -inf
    %716 = vmax.xlane.f32.xlu0 %v715
    %v717 = vpop.xlane.xlu0 %716
    %v718 = vsel %vm321, %v702, -inf
    %719 = vmax.xlane.f32.xlu0 %v718
    %v720 = vpop.xlane.xlu0 %719
    %v721 = vsel %vm321, %v703, -inf
    %722 = vmax.xlane.f32.xlu0 %v721
    %v723 = vpop.xlane.xlu0 %722
    %v724 = vsel %vm321, %v704, -inf
    %725 = vmax.xlane.f32.xlu0 %v724
    %v726 = vpop.xlane.xlu0 %725
    %v727 = vsel %vm321, %v705, -inf
    %728 = vmax.xlane.f32.xlu0 %v727
    %v729 = vpop.xlane.xlu0 %728
    %v730 = vsub.f32 %v698, %v708
    %v731 = vsub.f32 %v699, %v711
    %v732 = vsub.f32 %v700, %v714
    %v733 = vsub.f32 %v701, %v717
    %v734 = vsub.f32 %v702, %v720
    %v735 = vsub.f32 %v703, %v723
    %v736 = vsub.f32 %v704, %v726
    %v737 = vsub.f32 %v705, %v729
    %v738 = vmul.f32 %v730, 1.442695
    %v739 = vpow.pop %v738
    %v740 = vmul.f32 %v731, 1.442695
    %v741 = vpow.pop %v740
    %v742 = vmul.f32 %v732, 1.442695
    %v743 = vpow.pop %v742
    %v744 = vmul.f32 %v733, 1.442695
    %v745 = vpow.pop %v744
    %v746 = vmul.f32 %v734, 1.442695
    %v747 = vpow.pop %v746
    %v748 = vmul.f32 %v735, 1.442695
    %v749 = vpow.pop %v748
    %v750 = vmul.f32 %v736, 1.442695
    %v751 = vpow.pop %v750
    %v752 = vmul.f32 %v737, 1.442695
    %v753 = vpow.pop %v752
    %v754 = vsel %vm321, %v739, 0.0
    %755 = vadd.xlane.f32.xlu0 %v754
    %v756 = vpop.xlane.xlu0 %755
    %v757 = vsel %vm321, %v741, 0.0
    %758 = vadd.xlane.f32.xlu0 %v757
    %v759 = vpop.xlane.xlu0 %758
    %v760 = vsel %vm321, %v743, 0.0
    %761 = vadd.xlane.f32.xlu0 %v760
    %v762 = vpop.xlane.xlu0 %761
    %v763 = vsel %vm321, %v745, 0.0
    %764 = vadd.xlane.f32.xlu0 %v763
    %v765 = vpop.xlane.xlu0 %764
    %v766 = vsel %vm321, %v747, 0.0
    %767 = vadd.xlane.f32.xlu0 %v766
    %v768 = vpop.xlane.xlu0 %767
    %v769 = vsel %vm321, %v749, 0.0
    %770 = vadd.xlane.f32.xlu0 %v769
    %v771 = vpop.xlane.xlu0 %770
    %v772 = vsel %vm321, %v751, 0.0
    %773 = vadd.xlane.f32.xlu0 %v772
    %v774 = vpop.xlane.xlu0 %773
    %v775 = vsel %vm321, %v753, 0.0
    %776 = vadd.xlane.f32.xlu0 %v775
    %v777 = vpop.xlane.xlu0 %776
    %v778 = vrcp.pop %v756
    %v779 = vrcp.pop %v759
    %v780 = vrcp.pop %v762
    %v781 = vrcp.pop %v765
    %v782 = vrcp.pop %v768
    %v783 = vrcp.pop %v771
    %v784 = vrcp.pop %v774
    %v785 = vrcp.pop %v777
    %v786 = vmul.f32 %v739, %v778
    %v787 = vmul.f32 %v741, %v779
    %v788 = vmul.f32 %v743, %v780
    %v789 = vmul.f32 %v745, %v781
    %v790 = vmul.f32 %v747, %v782
    %v791 = vmul.f32 %v749, %v783
    %v792 = vmul.f32 %v751, %v784
    %v793 = vmul.f32 %v753, %v785
    %v794 = vpack.c.bf16 %v786, %v786
    %v795 = vpack.c.bf16 %v787, %v787
    %v796 = vpack.c.bf16 %v788, %v788
    %v797 = vpack.c.bf16 %v789, %v789
    %v798 = vpack.c.bf16 %v790, %v790
    %v799 = vpack.c.bf16 %v791, %v791
    %v800 = vpack.c.bf16 %v792, %v792
    %v801 = vpack.c.bf16 %v793, %v793
    %v802 = vpack.c.bf16 %v239, %v239
    %v803 = vpack.c.bf16 %v242, %v242
    %v804 = vpack.c.bf16 %v288, %v288
    %v805 = vpack.c.bf16 %v290, %v290
    %v806 = vpack.c.bf16 %v294, %v294
    %v807 = vpack.c.bf16 %v296, %v296
    %v808 = vpack.c.bf16 %v300, %v300
    %v809 = vpack.c.bf16 %v302, %v302
    %v811 = vsel %vm321, %v794, 0
    %vm813 = vcmask 1043456
    %v815 = vsel %vm813, %v802, 0
    %817 = vmatprep.subr.bf16.mxu0 0
    %818 = vmatpush1.bf16.msra.mxu0 %v815
    %819 = vmatprep.subr.bf16.mxu0 0
    %820 = vmatpush1.bf16.msra.mxu0 0
    %821 = vmatprep.subr.bf16.mxu0 0
    %822 = vmatpush1.bf16.msra.mxu0 0
    %823 = vmatprep.subr.bf16.mxu0 0
    %824 = vmatpush1.bf16.msra.mxu0 0
    %825 = vmatprep.subr.bf16.mxu0 0
    %826 = vmatpush1.bf16.msra.mxu0 0
    %827 = vmatprep.subr.bf16.mxu0 0
    %828 = vmatpush1.bf16.msra.mxu0 0
    %829 = vmatprep.subr.bf16.mxu0 0
    %830 = vmatpush1.bf16.msra.mxu0 0
    %831 = vmatprep.subr.bf16.mxu0 0
    %832 = vmatpush1.bf16.msra.mxu0 0
    %833 = vmatprep.subr.bf16.mxu0 0
    %834 = vmatpush1.bf16.msra.mxu0 0
    %835 = vmatprep.subr.bf16.mxu0 0
    %836 = vmatpush1.bf16.msra.mxu0 0
    %837 = vmatprep.subr.bf16.mxu0 0
    %838 = vmatpush1.bf16.msra.mxu0 0
    %839 = vmatprep.subr.bf16.mxu0 0
    %840 = vmatpush1.bf16.msra.mxu0 0
    %841 = vmatprep.subr.bf16.mxu0 0
    %842 = vmatpush1.bf16.msra.mxu0 0
    %843 = vmatprep.subr.bf16.mxu0 0
    %844 = vmatpush1.bf16.msra.mxu0 0
    %845 = vmatprep.subr.bf16.mxu0 0
    %846 = vmatpush1.bf16.msra.mxu0 0
    %847 = vmatprep.subr.bf16.mxu0 0
    %848 = vmatpush1.bf16.msra.mxu0 0
    %849 = vmatprep.mubr.bf16.mxu0 0
    %850 = vmatmul.mubr.bf16.gmra.mrb[0].mxu0 %v811
    %v851 = vpop.f32.mrb[0].mxu0
    %v852 = vadd.f32 0.0, %v851
    %v853 = vpop.f32.mrb[0].mxu0
    %v854 = vpop.f32.mrb[0].mxu0
    %v855 = vpop.f32.mrb[0].mxu0
    %856 = vdwg.mxu0
    %v858 = vsel %vm321, %v795, 0
    %v861 = vsel %vm813, %v803, 0
    %863 = vmatprep.subr.bf16.mxu0 0
    %864 = vmatpush1.bf16.msra.mxu0 %v861
    %865 = vmatprep.subr.bf16.mxu0 0
    %866 = vmatpush1.bf16.msra.mxu0 0
    %867 = vmatprep.subr.bf16.mxu0 0
    %868 = vmatpush1.bf16.msra.mxu0 0
    %869 = vmatprep.subr.bf16.mxu0 0
    %870 = vmatpush1.bf16.msra.mxu0 0
    %871 = vmatprep.subr.bf16.mxu0 0
    %872 = vmatpush1.bf16.msra.mxu0 0
    %873 = vmatprep.subr.bf16.mxu0 0
    %874 = vmatpush1.bf16.msra.mxu0 0
    %875 = vmatprep.subr.bf16.mxu0 0
    %876 = vmatpush1.bf16.msra.mxu0 0
    %877 = vmatprep.subr.bf16.mxu0 0
    %878 = vmatpush1.bf16.msra.mxu0 0
    %879 = vmatprep.subr.bf16.mxu0 0
    %880 = vmatpush1.bf16.msra.mxu0 0
    %881 = vmatprep.subr.bf16.mxu0 0
    %882 = vmatpush1.bf16.msra.mxu0 0
    %883 = vmatprep.subr.bf16.mxu0 0
    %884 = vmatpush1.bf16.msra.mxu0 0
    %885 = vmatprep.subr.bf16.mxu0 0
    %886 = vmatpush1.bf16.msra.mxu0 0
    %887 = vmatprep.subr.bf16.mxu0 0
    %888 = vmatpush1.bf16.msra.mxu0 0
    %889 = vmatprep.subr.bf16.mxu0 0
    %890 = vmatpush1.bf16.msra.mxu0 0
    %891 = vmatprep.subr.bf16.mxu0 0
    %892 = vmatpush1.bf16.msra.mxu0 0
    %893 = vmatprep.subr.bf16.mxu0 0
    %894 = vmatpush1.bf16.msra.mxu0 0
    %895 = vmatprep.mubr.bf16.mxu0 0
    %896 = vmatmul.mubr.bf16.gmra.mrb[0].mxu0 %v858
    %v897 = vpop.f32.mrb[0].mxu0
    %v898 = vadd.f32 0.0, %v897
    %v899 = vpop.f32.mrb[0].mxu0
    %v900 = vpop.f32.mrb[0].mxu0
    %v901 = vpop.f32.mrb[0].mxu0
    %902 = vdwg.mxu0
    %v904 = vsel %vm321, %v796, 0
    %v907 = vsel %vm813, %v804, 0
    %909 = vmatprep.subr.bf16.mxu0 0
    %910 = vmatpush1.bf16.msra.mxu0 %v907
    %911 = vmatprep.subr.bf16.mxu0 0
    %912 = vmatpush1.bf16.msra.mxu0 0
    %913 = vmatprep.subr.bf16.mxu0 0
    %914 = vmatpush1.bf16.msra.mxu0 0
    %915 = vmatprep.subr.bf16.mxu0 0
    %916 = vmatpush1.bf16.msra.mxu0 0
    %917 = vmatprep.subr.bf16.mxu0 0
    %918 = vmatpush1.bf16.msra.mxu0 0
    %919 = vmatprep.subr.bf16.mxu0 0
    %920 = vmatpush1.bf16.msra.mxu0 0
    %921 = vmatprep.subr.bf16.mxu0 0
    %922 = vmatpush1.bf16.msra.mxu0 0
    %923 = vmatprep.subr.bf16.mxu0 0
    %924 = vmatpush1.bf16.msra.mxu0 0
    %925 = vmatprep.subr.bf16.mxu0 0
    %926 = vmatpush1.bf16.msra.mxu0 0
    %927 = vmatprep.subr.bf16.mxu0 0
    %928 = vmatpush1.bf16.msra.mxu0 0
    %929 = vmatprep.subr.bf16.mxu0 0
    %930 = vmatpush1.bf16.msra.mxu0 0
    %931 = vmatprep.subr.bf16.mxu0 0
    %932 = vmatpush1.bf16.msra.mxu0 0
    %933 = vmatprep.subr.bf16.mxu0 0
    %934 = vmatpush1.bf16.msra.mxu0 0
    %935 = vmatprep.subr.bf16.mxu0 0
    %936 = vmatpush1.bf16.msra.mxu0 0
    %937 = vmatprep.subr.bf16.mxu0 0
    %938 = vmatpush1.bf16.msra.mxu0 0
    %939 = vmatprep.subr.bf16.mxu0 0
    %940 = vmatpush1.bf16.msra.mxu0 0
    %941 = vmatprep.mubr.bf16.mxu0 0
    %942 = vmatmul.mubr.bf16.gmra.mrb[0].mxu0 %v904
    %v943 = vpop.f32.mrb[0].mxu0
    %v944 = vadd.f32 0.0, %v943
    %v945 = vpop.f32.mrb[0].mxu0
    %v946 = vpop.f32.mrb[0].mxu0
    %v947 = vpop.f32.mrb[0].mxu0
    %948 = vdwg.mxu0
    %v950 = vsel %vm321, %v797, 0
    %v953 = vsel %vm813, %v805, 0
    %955 = vmatprep.subr.bf16.mxu0 0
    %956 = vmatpush1.bf16.msra.mxu0 %v953
    %957 = vmatprep.subr.bf16.mxu0 0
    %958 = vmatpush1.bf16.msra.mxu0 0
    %959 = vmatprep.subr.bf16.mxu0 0
    %960 = vmatpush1.bf16.msra.mxu0 0
    %961 = vmatprep.subr.bf16.mxu0 0
    %962 = vmatpush1.bf16.msra.mxu0 0
    %963 = vmatprep.subr.bf16.mxu0 0
    %964 = vmatpush1.bf16.msra.mxu0 0
    %965 = vmatprep.subr.bf16.mxu0 0
    %966 = vmatpush1.bf16.msra.mxu0 0
    %967 = vmatprep.subr.bf16.mxu0 0
    %968 = vmatpush1.bf16.msra.mxu0 0
    %969 = vmatprep.subr.bf16.mxu0 0
    %970 = vmatpush1.bf16.msra.mxu0 0
    %971 = vmatprep.subr.bf16.mxu0 0
    %972 = vmatpush1.bf16.msra.mxu0 0
    %973 = vmatprep.subr.bf16.mxu0 0
    %974 = vmatpush1.bf16.msra.mxu0 0
    %975 = vmatprep.subr.bf16.mxu0 0
    %976 = vmatpush1.bf16.msra.mxu0 0
    %977 = vmatprep.subr.bf16.mxu0 0
    %978 = vmatpush1.bf16.msra.mxu0 0
    %979 = vmatprep.subr.bf16.mxu0 0
    %980 = vmatpush1.bf16.msra.mxu0 0
    %981 = vmatprep.subr.bf16.mxu0 0
    %982 = vmatpush1.bf16.msra.mxu0 0
    %983 = vmatprep.subr.bf16.mxu0 0
    %984 = vmatpush1.bf16.msra.mxu0 0
    %985 = vmatprep.subr.bf16.mxu0 0
    %986 = vmatpush1.bf16.msra.mxu0 0
    %987 = vmatprep.mubr.bf16.mxu0 0
    %988 = vmatmul.mubr.bf16.gmra.mrb[0].mxu0 %v950
    %v989 = vpop.f32.mrb[0].mxu0
    %v990 = vadd.f32 0.0, %v989
    %v991 = vpop.f32.mrb[0].mxu0
    %v992 = vpop.f32.mrb[0].mxu0
    %v993 = vpop.f32.mrb[0].mxu0
    %994 = vdwg.mxu0
    %v996 = vsel %vm321, %v798, 0
    %v999 = vsel %vm813, %v806, 0
    %1001 = vmatprep.subr.bf16.mxu0 0
    %1002 = vmatpush1.bf16.msra.mxu0 %v999
    %1003 = vmatprep.subr.bf16.mxu0 0
    %1004 = vmatpush1.bf16.msra.mxu0 0
    %1005 = vmatprep.subr.bf16.mxu0 0
    %1006 = vmatpush1.bf16.msra.mxu0 0
    %1007 = vmatprep.subr.bf16.mxu0 0
    %1008 = vmatpush1.bf16.msra.mxu0 0
    %1009 = vmatprep.subr.bf16.mxu0 0
    %1010 = vmatpush1.bf16.msra.mxu0 0
    %1011 = vmatprep.subr.bf16.mxu0 0
    %1012 = vmatpush1.bf16.msra.mxu0 0
    %1013 = vmatprep.subr.bf16.mxu0 0
    %1014 = vmatpush1.bf16.msra.mxu0 0
    %1015 = vmatprep.subr.bf16.mxu0 0
    %1016 = vmatpush1.bf16.msra.mxu0 0
    %1017 = vmatprep.subr.bf16.mxu0 0
    %1018 = vmatpush1.bf16.msra.mxu0 0
    %1019 = vmatprep.subr.bf16.mxu0 0
    %1020 = vmatpush1.bf16.msra.mxu0 0
    %1021 = vmatprep.subr.bf16.mxu0 0
    %1022 = vmatpush1.bf16.msra.mxu0 0
    %1023 = vmatprep.subr.bf16.mxu0 0
    %1024 = vmatpush1.bf16.msra.mxu0 0
    %1025 = vmatprep.subr.bf16.mxu0 0
    %1026 = vmatpush1.bf16.msra.mxu0 0
    %1027 = vmatprep.subr.bf16.mxu0 0
    %1028 = vmatpush1.bf16.msra.mxu0 0
    %1029 = vmatprep.subr.bf16.mxu0 0
    %1030 = vmatpush1.bf16.msra.mxu0 0
    %1031 = vmatprep.subr.bf16.mxu0 0
    %1032 = vmatpush1.bf16.msra.mxu0 0
    %1033 = vmatprep.mubr.bf16.mxu0 0
    %1034 = vmatmul.mubr.bf16.gmra.mrb[0].mxu0 %v996
    %v1035 = vpop.f32.mrb[0].mxu0
    %v1036 = vadd.f32 0.0, %v1035
    %v1037 = vpop.f32.mrb[0].mxu0
    %v1038 = vpop.f32.mrb[0].mxu0
    %v1039 = vpop.f32.mrb[0].mxu0
    %1040 = vdwg.mxu0
    %v1042 = vsel %vm321, %v799, 0
    %v1045 = vsel %vm813, %v807, 0
    %1047 = vmatprep.subr.bf16.mxu0 0
    %1048 = vmatpush1.bf16.msra.mxu0 %v1045
    %1049 = vmatprep.subr.bf16.mxu0 0
    %1050 = vmatpush1.bf16.msra.mxu0 0
    %1051 = vmatprep.subr.bf16.mxu0 0
    %1052 = vmatpush1.bf16.msra.mxu0 0
    %1053 = vmatprep.subr.bf16.mxu0 0
    %1054 = vmatpush1.bf16.msra.mxu0 0
    %1055 = vmatprep.subr.bf16.mxu0 0
    %1056 = vmatpush1.bf16.msra.mxu0 0
    %1057 = vmatprep.subr.bf16.mxu0 0
    %1058 = vmatpush1.bf16.msra.mxu0 0
    %1059 = vmatprep.subr.bf16.mxu0 0
    %1060 = vmatpush1.bf16.msra.mxu0 0
    %1061 = vmatprep.subr.bf16.mxu0 0
    %1062 = vmatpush1.bf16.msra.mxu0 0
    %1063 = vmatprep.subr.bf16.mxu0 0
    %1064 = vmatpush1.bf16.msra.mxu0 0
    %1065 = vmatprep.subr.bf16.mxu0 0
    %1066 = vmatpush1.bf16.msra.mxu0 0
    %1067 = vmatprep.subr.bf16.mxu0 0
    %1068 = vmatpush1.bf16.msra.mxu0 0
    %1069 = vmatprep.subr.bf16.mxu0 0
    %1070 = vmatpush1.bf16.msra.mxu0 0
    %1071 = vmatprep.subr.bf16.mxu0 0
    %1072 = vmatpush1.bf16.msra.mxu0 0
    %1073 = vmatprep.subr.bf16.mxu0 0
    %1074 = vmatpush1.bf16.msra.mxu0 0
    %1075 = vmatprep.subr.bf16.mxu0 0
    %1076 = vmatpush1.bf16.msra.mxu0 0
    %1077 = vmatprep.subr.bf16.mxu0 0
    %1078 = vmatpush1.bf16.msra.mxu0 0
    %1079 = vmatprep.mubr.bf16.mxu0 0
    %1080 = vmatmul.mubr.bf16.gmra.mrb[0].mxu0 %v1042
    %v1081 = vpop.f32.mrb[0].mxu0
    %v1082 = vadd.f32 0.0, %v1081
    %v1083 = vpop.f32.mrb[0].mxu0
    %v1084 = vpop.f32.mrb[0].mxu0
    %v1085 = vpop.f32.mrb[0].mxu0
    %1086 = vdwg.mxu0
    %v1088 = vsel %vm321, %v800, 0
    %v1091 = vsel %vm813, %v808, 0
    %1093 = vmatprep.subr.bf16.mxu0 0
    %1094 = vmatpush1.bf16.msra.mxu0 %v1091
    %1095 = vmatprep.subr.bf16.mxu0 0
    %1096 = vmatpush1.bf16.msra.mxu0 0
    %1097 = vmatprep.subr.bf16.mxu0 0
    %1098 = vmatpush1.bf16.msra.mxu0 0
    %1099 = vmatprep.subr.bf16.mxu0 0
    %1100 = vmatpush1.bf16.msra.mxu0 0
    %1101 = vmatprep.subr.bf16.mxu0 0
    %1102 = vmatpush1.bf16.msra.mxu0 0
    %1103 = vmatprep.subr.bf16.mxu0 0
    %1104 = vmatpush1.bf16.msra.mxu0 0
    %1105 = vmatprep.subr.bf16.mxu0 0
    %1106 = vmatpush1.bf16.msra.mxu0 0
    %1107 = vmatprep.subr.bf16.mxu0 0
    %1108 = vmatpush1.bf16.msra.mxu0 0
    %1109 = vmatprep.subr.bf16.mxu0 0
    %1110 = vmatpush1.bf16.msra.mxu0 0
    %1111 = vmatprep.subr.bf16.mxu0 0
    %1112 = vmatpush1.bf16.msra.mxu0 0
    %1113 = vmatprep.subr.bf16.mxu0 0
    %1114 = vmatpush1.bf16.msra.mxu0 0
    %1115 = vmatprep.subr.bf16.mxu0 0
    %1116 = vmatpush1.bf16.msra.mxu0 0
    %1117 = vmatprep.subr.bf16.mxu0 0
    %1118 = vmatpush1.bf16.msra.mxu0 0
    %1119 = vmatprep.subr.bf16.mxu0 0
    %1120 = vmatpush1.bf16.msra.mxu0 0
    %1121 = vmatprep.subr.bf16.mxu0 0
    %1122 = vmatpush1.bf16.msra.mxu0 0
    %1123 = vmatprep.subr.bf16.mxu0 0
    %1124 = vmatpush1.bf16.msra.mxu0 0
    %1125 = vmatprep.mubr.bf16.mxu0 0
    %1126 = vmatmul.mubr.bf16.gmra.mrb[0].mxu0 %v1088
    %v1127 = vpop.f32.mrb[0].mxu0
    %v1128 = vadd.f32 0.0, %v1127
    %v1129 = vpop.f32.mrb[0].mxu0
    %v1130 = vpop.f32.mrb[0].mxu0
    %v1131 = vpop.f32.mrb[0].mxu0
    %1132 = vdwg.mxu0
    %v1134 = vsel %vm321, %v801, 0
    %v1137 = vsel %vm813, %v809, 0
    %1139 = vmatprep.subr.bf16.mxu0 0
    %1140 = vmatpush1.bf16.msra.mxu0 %v1137
    %1141 = vmatprep.subr.bf16.mxu0 0
    %1142 = vmatpush1.bf16.msra.mxu0 0
    %1143 = vmatprep.subr.bf16.mxu0 0
    %1144 = vmatpush1.bf16.msra.mxu0 0
    %1145 = vmatprep.subr.bf16.mxu0 0
    %1146 = vmatpush1.bf16.msra.mxu0 0
    %1147 = vmatprep.subr.bf16.mxu0 0
    %1148 = vmatpush1.bf16.msra.mxu0 0
    %1149 = vmatprep.subr.bf16.mxu0 0
    %1150 = vmatpush1.bf16.msra.mxu0 0
    %1151 = vmatprep.subr.bf16.mxu0 0
    %1152 = vmatpush1.bf16.msra.mxu0 0
    %1153 = vmatprep.subr.bf16.mxu0 0
    %1154 = vmatpush1.bf16.msra.mxu0 0
    %1155 = vmatprep.subr.bf16.mxu0 0
    %1156 = vmatpush1.bf16.msra.mxu0 0
    %1157 = vmatprep.subr.bf16.mxu0 0
    %1158 = vmatpush1.bf16.msra.mxu0 0
    %1159 = vmatprep.subr.bf16.mxu0 0
    %1160 = vmatpush1.bf16.msra.mxu0 0
    %1161 = vmatprep.subr.bf16.mxu0 0
    %1162 = vmatpush1.bf16.msra.mxu0 0
    %1163 = vmatprep.subr.bf16.mxu0 0
    %1164 = vmatpush1.bf16.msra.mxu0 0
    %1165 = vmatprep.subr.bf16.mxu0 0
    %1166 = vmatpush1.bf16.msra.mxu0 0
    %1167 = vmatprep.subr.bf16.mxu0 0
    %1168 = vmatpush1.bf16.msra.mxu0 0
    %1169 = vmatprep.subr.bf16.mxu0 0
    %1170 = vmatpush1.bf16.msra.mxu0 0
    %1171 = vmatprep.mubr.bf16.mxu0 0
    %1172 = vmatmul.mubr.bf16.gmra.mrb[0].mxu0 %v1134
    %v1173 = vpop.f32.mrb[0].mxu0
    %v1174 = vadd.f32 0.0, %v1173
    %v1175 = vpop.f32.mrb[0].mxu0
    %v1176 = vpop.f32.mrb[0].mxu0
    %v1177 = vpop.f32.mrb[0].mxu0
    %1178 = vdwg.mxu0
    %v1179 = vpack.c.bf16 %v898, %v852
    %v1180 = vpack.c.bf16 %v990, %v944
    %v1181 = vpack.c.bf16 %v1082, %v1036
    %v1182 = vpack.c.bf16 %v1174, %v1128
    %v1184 = vsel %vm321, %v1179, 0
    %v1187 = vsel %vm813, %v51, 0
    %1189 = vmatprep.subr.bf16.mxu0 0
    %1190 = vmatpush1.bf16.msra.mxu0 %v1187
    %1191 = vmatprep.subr.bf16.mxu0 0
    %1192 = vmatpush1.bf16.msra.mxu0 0
    %1193 = vmatprep.subr.bf16.mxu0 0
    %1194 = vmatpush1.bf16.msra.mxu0 0
    %1195 = vmatprep.subr.bf16.mxu0 0
    %1196 = vmatpush1.bf16.msra.mxu0 0
    %1197 = vmatprep.subr.bf16.mxu0 0
    %1198 = vmatpush1.bf16.msra.mxu0 0
    %1199 = vmatprep.subr.bf16.mxu0 0
    %1200 = vmatpush1.bf16.msra.mxu0 0
    %1201 = vmatprep.subr.bf16.mxu0 0
    %1202 = vmatpush1.bf16.msra.mxu0 0
    %1203 = vmatprep.subr.bf16.mxu0 0
    %1204 = vmatpush1.bf16.msra.mxu0 0
    %1205 = vmatprep.subr.bf16.mxu0 0
    %1206 = vmatpush1.bf16.msra.mxu0 0
    %1207 = vmatprep.subr.bf16.mxu0 0
    %1208 = vmatpush1.bf16.msra.mxu0 0
    %1209 = vmatprep.subr.bf16.mxu0 0
    %1210 = vmatpush1.bf16.msra.mxu0 0
    %1211 = vmatprep.subr.bf16.mxu0 0
    %1212 = vmatpush1.bf16.msra.mxu0 0
    %1213 = vmatprep.subr.bf16.mxu0 0
    %1214 = vmatpush1.bf16.msra.mxu0 0
    %1215 = vmatprep.subr.bf16.mxu0 0
    %1216 = vmatpush1.bf16.msra.mxu0 0
    %1217 = vmatprep.subr.bf16.mxu0 0
    %1218 = vmatpush1.bf16.msra.mxu0 0
    %1219 = vmatprep.subr.bf16.mxu0 0
    %1220 = vmatpush1.bf16.msra.mxu0 0
    %1221 = vmatprep.mubr.bf16.mxu0 0
    %1222 = vmatmul.mubr.bf16.gmra.mrb[0].mxu0 %v1184
    %v1223 = vpop.f32.mrb[0].mxu0
    %v1224 = vadd.f32 0.0, %v1223
    %v1225 = vpop.f32.mrb[0].mxu0
    %v1226 = vpop.f32.mrb[0].mxu0
    %v1227 = vadd.f32 0.0, %v1226
    %v1228 = vpop.f32.mrb[0].mxu0
    %1229 = vdwg.mxu0
    %v1231 = vsel %vm321, %v1180, 0
    %v1234 = vsel %vm813, %v52, 0
    %1236 = vmatprep.subr.bf16.mxu0 0
    %1237 = vmatpush1.bf16.msra.mxu0 %v1234
    %1238 = vmatprep.subr.bf16.mxu0 0
    %1239 = vmatpush1.bf16.msra.mxu0 0
    %1240 = vmatprep.subr.bf16.mxu0 0
    %1241 = vmatpush1.bf16.msra.mxu0 0
    %1242 = vmatprep.subr.bf16.mxu0 0
    %1243 = vmatpush1.bf16.msra.mxu0 0
    %1244 = vmatprep.subr.bf16.mxu0 0
    %1245 = vmatpush1.bf16.msra.mxu0 0
    %1246 = vmatprep.subr.bf16.mxu0 0
    %1247 = vmatpush1.bf16.msra.mxu0 0
    %1248 = vmatprep.subr.bf16.mxu0 0
    %1249 = vmatpush1.bf16.msra.mxu0 0
    %1250 = vmatprep.subr.bf16.mxu0 0
    %1251 = vmatpush1.bf16.msra.mxu0 0
    %1252 = vmatprep.subr.bf16.mxu0 0
    %1253 = vmatpush1.bf16.msra.mxu0 0
    %1254 = vmatprep.subr.bf16.mxu0 0
    %1255 = vmatpush1.bf16.msra.mxu0 0
    %1256 = vmatprep.subr.bf16.mxu0 0
    %1257 = vmatpush1.bf16.msra.mxu0 0
    %1258 = vmatprep.subr.bf16.mxu0 0
    %1259 = vmatpush1.bf16.msra.mxu0 0
    %1260 = vmatprep.subr.bf16.mxu0 0
    %1261 = vmatpush1.bf16.msra.mxu0 0
    %1262 = vmatprep.subr.bf16.mxu0 0
    %1263 = vmatpush1.bf16.msra.mxu0 0
    %1264 = vmatprep.subr.bf16.mxu0 0
    %1265 = vmatpush1.bf16.msra.mxu0 0
    %1266 = vmatprep.subr.bf16.mxu0 0
    %1267 = vmatpush1.bf16.msra.mxu0 0
    %1268 = vmatprep.mubr.bf16.mxu0 0
    %1269 = vmatmul.mubr.bf16.gmra.mrb[0].mxu0 %v1231
    %v1270 = vpop.f32.mrb[0].mxu0
    %v1271 = vadd.f32 0.0, %v1270
    %v1272 = vpop.f32.mrb[0].mxu0
    %v1273 = vpop.f32.mrb[0].mxu0
    %v1274 = vadd.f32 0.0, %v1273
    %v1275 = vpop.f32.mrb[0].mxu0
    %1276 = vdwg.mxu0
    %v1278 = vsel %vm321, %v1181, 0
    %v1281 = vsel %vm813, %v53, 0
    %1283 = vmatprep.subr.bf16.mxu0 0
    %1284 = vmatpush1.bf16.msra.mxu0 %v1281
    %1285 = vmatprep.subr.bf16.mxu0 0
    %1286 = vmatpush1.bf16.msra.mxu0 0
    %1287 = vmatprep.subr.bf16.mxu0 0
    %1288 = vmatpush1.bf16.msra.mxu0 0
    %1289 = vmatprep.subr.bf16.mxu0 0
    %1290 = vmatpush1.bf16.msra.mxu0 0
    %1291 = vmatprep.subr.bf16.mxu0 0
    %1292 = vmatpush1.bf16.msra.mxu0 0
    %1293 = vmatprep.subr.bf16.mxu0 0
    %1294 = vmatpush1.bf16.msra.mxu0 0
    %1295 = vmatprep.subr.bf16.mxu0 0
    %1296 = vmatpush1.bf16.msra.mxu0 0
    %1297 = vmatprep.subr.bf16.mxu0 0
    %1298 = vmatpush1.bf16.msra.mxu0 0
    %1299 = vmatprep.subr.bf16.mxu0 0
    %1300 = vmatpush1.bf16.msra.mxu0 0
    %1301 = vmatprep.subr.bf16.mxu0 0
    %1302 = vmatpush1.bf16.msra.mxu0 0
    %1303 = vmatprep.subr.bf16.mxu0 0
    %1304 = vmatpush1.bf16.msra.mxu0 0
    %1305 = vmatprep.subr.bf16.mxu0 0
    %1306 = vmatpush1.bf16.msra.mxu0 0
    %1307 = vmatprep.subr.bf16.mxu0 0
    %1308 = vmatpush1.bf16.msra.mxu0 0
    %1309 = vmatprep.subr.bf16.mxu0 0
    %1310 = vmatpush1.bf16.msra.mxu0 0
    %1311 = vmatprep.subr.bf16.mxu0 0
    %1312 = vmatpush1.bf16.msra.mxu0 0
    %1313 = vmatprep.subr.bf16.mxu0 0
    %1314 = vmatpush1.bf16.msra.mxu0 0
    %1315 = vmatprep.mubr.bf16.mxu0 0
    %1316 = vmatmul.mubr.bf16.gmra.mrb[0].mxu0 %v1278
    %v1317 = vpop.f32.mrb[0].mxu0
    %v1318 = vadd.f32 0.0, %v1317
    %v1319 = vpop.f32.mrb[0].mxu0
    %v1320 = vpop.f32.mrb[0].mxu0
    %v1321 = vadd.f32 0.0, %v1320
    %v1322 = vpop.f32.mrb[0].mxu0
    %1323 = vdwg.mxu0
    %v1325 = vsel %vm321, %v1182, 0
    %v1328 = vsel %vm813, %v54, 0
    %1330 = vmatprep.subr.bf16.mxu0 0
    %1331 = vmatpush1.bf16.msra.mxu0 %v1328
    %1332 = vmatprep.subr.bf16.mxu0 0
    %1333 = vmatpush1.bf16.msra.mxu0 0
    %1334 = vmatprep.subr.bf16.mxu0 0
    %1335 = vmatpush1.bf16.msra.mxu0 0
    %1336 = vmatprep.subr.bf16.mxu0 0
    %1337 = vmatpush1.bf16.msra.mxu0 0
    %1338 = vmatprep.subr.bf16.mxu0 0
    %1339 = vmatpush1.bf16.msra.mxu0 0
    %1340 = vmatprep.subr.bf16.mxu0 0
    %1341 = vmatpush1.bf16.msra.mxu0 0
    %1342 = vmatprep.subr.bf16.mxu0 0
    %1343 = vmatpush1.bf16.msra.mxu0 0
    %1344 = vmatprep.subr.bf16.mxu0 0
    %1345 = vmatpush1.bf16.msra.mxu0 0
    %1346 = vmatprep.subr.bf16.mxu0 0
    %1347 = vmatpush1.bf16.msra.mxu0 0
    %1348 = vmatprep.subr.bf16.mxu0 0
    %1349 = vmatpush1.bf16.msra.mxu0 0
    %1350 = vmatprep.subr.bf16.mxu0 0
    %1351 = vmatpush1.bf16.msra.mxu0 0
    %1352 = vmatprep.subr.bf16.mxu0 0
    %1353 = vmatpush1.bf16.msra.mxu0 0
    %1354 = vmatprep.subr.bf16.mxu0 0
    %1355 = vmatpush1.bf16.msra.mxu0 0
    %1356 = vmatprep.subr.bf16.mxu0 0
    %1357 = vmatpush1.bf16.msra.mxu0 0
    %1358 = vmatprep.subr.bf16.mxu0 0
    %1359 = vmatpush1.bf16.msra.mxu0 0
    %1360 = vmatprep.subr.bf16.mxu0 0
    %1361 = vmatpush1.bf16.msra.mxu0 0
    %1362 = vmatprep.mubr.bf16.mxu0 0
    %1363 = vmatmul.mubr.bf16.gmra.mrb[0].mxu0 %v1325
    %v1364 = vpop.f32.mrb[0].mxu0
    %v1365 = vadd.f32 0.0, %v1364
    %v1366 = vpop.f32.mrb[0].mxu0
    %v1367 = vpop.f32.mrb[0].mxu0
    %v1368 = vadd.f32 0.0, %v1367
    %v1369 = vpop.f32.mrb[0].mxu0
    %1370 = vdwg.mxu0
    %v1371 = vsel %vm76, %v1224, 0.0
    %v1372 = vsel %vm76, %v1271, 0.0
    %v1373 = vadd.f32 %v1371, %v1372
    %v1374 = vsel %vm76, %v1318, 0.0
    %v1375 = vadd.f32 %v1373, %v1374
    %v1376 = vsel %vm76, %v1365, 0.0
    %v1377 = vadd.f32 %v1375, %v1376
    %v1378 = vsel %vm76, %v1227, 0.0
    %v1379 = vsel %vm76, %v1274, 0.0
    %v1380 = vadd.f32 %v1378, %v1379
    %v1381 = vsel %vm76, %v1321, 0.0
    %v1382 = vadd.f32 %v1380, %v1381
    %v1383 = vsel %vm76, %v1368, 0.0
    %v1384 = vadd.f32 %v1382, %v1383
    %v1385 = vlaneseq
    %v1386 = vshrl.u32 %v1385, 7
    %v1387 = vsub.s32 3, %v1386
    %v1388 = vrot.slane %v39, %v1387
    %v1389 = vadd.f32 %v1377, %v1388
    %v1390 = vadd.f32 %v1384, %v1388
    %v1391 = vadd.f32 %v41, %v1389
    %v1392 = vadd.f32 %v42, %v1390
    %v1393 = vsel %vm76, %v1391, 0.0
    %1394 = vadd.xlane.f32.xlu0 %v1393
    %v1395 = vpop.xlane.xlu0 %1394
    %v1396 = vsel %vm76, %v1392, 0.0
    %1397 = vadd.xlane.f32.xlu0 %v1396
    %v1398 = vpop.xlane.xlu0 %1397
    %v1399 = vrcp.pop 32.0
    %v1400 = vmul.f32 %v1395, %v1399
    %v1401 = vmul.f32 %v1398, %v1399
    %v1402 = vsub.f32 %v1391, %v1400
    %v1403 = vsub.f32 %v1392, %v1401
    %v1404 = vmul.f32 %v1402, %v1402
    %v1405 = vmul.f32 %v1403, %v1403
    %v1406 = vsel %vm76, %v1404, 0.0
    %1407 = vadd.xlane.f32.xlu0 %v1406
    %v1408 = vpop.xlane.xlu0 %1407
    %v1409 = vsel %vm76, %v1405, 0.0
    %1410 = vadd.xlane.f32.xlu0 %v1409
    %v1411 = vpop.xlane.xlu0 %1410
    %v1412 = vmul.f32 %v1408, %v1399
    %v1413 = vmul.f32 %v1411, %v1399
    %v1414 = vadd.f32 %v1412, 1e-05
    %v1415 = vadd.f32 %v1413, 1e-05
    %v1416 = vrsqrt.pop %v1414
    %v1417 = vrsqrt.pop %v1415
    %v1418 = vmul.f32 %v1402, %v1416
    %v1419 = vmul.f32 %v1403, %v1417
    %v1420 = vlaneseq
    %v1421 = vshrl.u32 %v1420, 7
    %v1422 = vsub.s32 0, %v1421
    %v1423 = vrot.slane %v40, %v1422
    %v1424 = vmul.f32 %v1418, %v1423
    %v1425 = vmul.f32 %v1419, %v1423
    %v1426 = vlaneseq
    %v1427 = vshrl.u32 %v1426, 7
    %v1428 = vsub.s32 1, %v1427
    %v1429 = vrot.slane %v40, %v1428
    %v1430 = vadd.f32 %v1424, %v1429
    %v1431 = vadd.f32 %v1425, %v1429
    %s1432 = scalar_lea.vmem %s5, 16
    %v1433 = vld [vmem:[%s1432] sm:$0xf]
    %v1434 = vld [vmem:[%s1432 + $0x4] sm:$0xf]
    %v1435 = vld [vmem:[%s1432 + $0x8] sm:$0xf]
    %v1436 = vld [vmem:[%s1432 + $0xc] sm:$0xf]
    %v1437 = vpack.c.bf16 %v1431, %v1430
    %v1438 = vpack.c.bf16 %v44, %v43
    %v1439 = vpack.c.bf16 %v46, %v45
    %s1440 = scalar_lea.vmem %s4, 48
    %v1441 = vld [vmem:[%s1440] sm:$0xf]
    %v1442 = vld [vmem:[%s1440 + $0x4] sm:$0xf]
    %v1443 = vld [vmem:[%s1440 + $0x8] sm:$0xf]
    %v1444 = vld [vmem:[%s1440 + $0xc] sm:$0xf]
    %v1445 = vlaneseq
    %v1446 = vshrl.u32 %v1445, 7
    %v1447 = vsub.s32 4, %v1446
    %v1448 = vrot.slane %v39, %v1447
    %v1453 = vunpack.c.l.b16 %v1441
    %v1454 = vunpack.c.l.b16 %v1442
    %v1455 = vunpack.c.l.b16 %v1443
    %v1456 = vunpack.c.l.b16 %v1444
    %v1457 = vpack.c.b16 %v1454, %v1453
    %v1458 = vpack.c.b16 %v1456, %v1455
    %v1462 = vsel %vm76, %v1437, 0
    %1464 = vmatprep.subr.bf16.mxu0 0
    %1465 = vmatpush1.bf16.msra.mxu0 %v1457
    %1466 = vmatprep.subr.bf16.mxu0 0
    %1467 = vmatpush1.bf16.msra.mxu0 %v1458
    %1468 = vmatprep.subr.bf16.mxu0 0
    %1469 = vmatpush1.bf16.msra.mxu0 0
    %1470 = vmatprep.subr.bf16.mxu0 0
    %1471 = vmatpush1.bf16.msra.mxu0 0
    %1472 = vmatprep.subr.bf16.mxu0 0
    %1473 = vmatpush1.bf16.msra.mxu0 0
    %1474 = vmatprep.subr.bf16.mxu0 0
    %1475 = vmatpush1.bf16.msra.mxu0 0
    %1476 = vmatprep.subr.bf16.mxu0 0
    %1477 = vmatpush1.bf16.msra.mxu0 0
    %1478 = vmatprep.subr.bf16.mxu0 0
    %1479 = vmatpush1.bf16.msra.mxu0 0
    %1480 = vmatprep.subr.bf16.mxu0 0
    %1481 = vmatpush1.bf16.msra.mxu0 0
    %1482 = vmatprep.subr.bf16.mxu0 0
    %1483 = vmatpush1.bf16.msra.mxu0 0
    %1484 = vmatprep.subr.bf16.mxu0 0
    %1485 = vmatpush1.bf16.msra.mxu0 0
    %1486 = vmatprep.subr.bf16.mxu0 0
    %1487 = vmatpush1.bf16.msra.mxu0 0
    %1488 = vmatprep.subr.bf16.mxu0 0
    %1489 = vmatpush1.bf16.msra.mxu0 0
    %1490 = vmatprep.subr.bf16.mxu0 0
    %1491 = vmatpush1.bf16.msra.mxu0 0
    %1492 = vmatprep.subr.bf16.mxu0 0
    %1493 = vmatpush1.bf16.msra.mxu0 0
    %1494 = vmatprep.subr.bf16.mxu0 0
    %1495 = vmatpush1.bf16.msra.mxu0 0
    %1496 = vmatprep.mubr.bf16.mxu0 0
    %1497 = vmatmul.mubr.bf16.gmra.mrb[0].mxu0 %v1462
    %v1498 = vpop.f32.mrb[0].mxu0
    %v1499 = vadd.f32 %v1448, %v1498
    %v1500 = vpop.f32.mrb[0].mxu0
    %v1501 = vpop.f32.mrb[0].mxu0
    %v1502 = vadd.f32 %v1448, %v1501
    %v1503 = vpop.f32.mrb[0].mxu0
    %1504 = vdwg.mxu0
    %s1505 = scalar_lea.vmem %s4, 64
    %v1506 = vld [vmem:[%s1505] sm:$0xf]
    %v1507 = vld [vmem:[%s1505 + $0x4] sm:$0xf]
    %v1508 = vld [vmem:[%s1505 + $0x8] sm:$0xf]
    %v1509 = vld [vmem:[%s1505 + $0xc] sm:$0xf]
    %v1510 = vlaneseq
    %v1511 = vshrl.u32 %v1510, 7
    %v1512 = vsub.s32 5, %v1511
    %v1513 = vrot.slane %v39, %v1512
    %v1518 = vunpack.c.l.b16 %v1506
    %v1519 = vunpack.c.l.b16 %v1507
    %v1520 = vunpack.c.l.b16 %v1508
    %v1521 = vunpack.c.l.b16 %v1509
    %v1522 = vpack.c.b16 %v1519, %v1518
    %v1523 = vpack.c.b16 %v1521, %v1520
    %v1527 = vsel %vm76, %v1438, 0
    %v1530 = vsel %vm76, %v1439, 0
    %1532 = vmatprep.subr.bf16.mxu0 0
    %1533 = vmatpush1.bf16.msra.mxu0 %v1522
    %1534 = vmatprep.subr.bf16.mxu0 0
    %1535 = vmatpush1.bf16.msra.mxu0 %v1523
    %1536 = vmatprep.subr.bf16.mxu0 0
    %1537 = vmatpush1.bf16.msra.mxu0 0
    %1538 = vmatprep.subr.bf16.mxu0 0
    %1539 = vmatpush1.bf16.msra.mxu0 0
    %1540 = vmatprep.subr.bf16.mxu0 0
    %1541 = vmatpush1.bf16.msra.mxu0 0
    %1542 = vmatprep.subr.bf16.mxu0 0
    %1543 = vmatpush1.bf16.msra.mxu0 0
    %1544 = vmatprep.subr.bf16.mxu0 0
    %1545 = vmatpush1.bf16.msra.mxu0 0
    %1546 = vmatprep.subr.bf16.mxu0 0
    %1547 = vmatpush1.bf16.msra.mxu0 0
    %1548 = vmatprep.subr.bf16.mxu0 0
    %1549 = vmatpush1.bf16.msra.mxu0 0
    %1550 = vmatprep.subr.bf16.mxu0 0
    %1551 = vmatpush1.bf16.msra.mxu0 0
    %1552 = vmatprep.subr.bf16.mxu0 0
    %1553 = vmatpush1.bf16.msra.mxu0 0
    %1554 = vmatprep.subr.bf16.mxu0 0
    %1555 = vmatpush1.bf16.msra.mxu0 0
    %1556 = vmatprep.subr.bf16.mxu0 0
    %1557 = vmatpush1.bf16.msra.mxu0 0
    %1558 = vmatprep.subr.bf16.mxu0 0
    %1559 = vmatpush1.bf16.msra.mxu0 0
    %1560 = vmatprep.subr.bf16.mxu0 0
    %1561 = vmatpush1.bf16.msra.mxu0 0
    %1562 = vmatprep.subr.bf16.mxu0 0
    %1563 = vmatpush1.bf16.msra.mxu0 0
    %1564 = vmatprep.mubr.bf16.mxu0 0
    %1565 = vmatmul.mubr.bf16.gmra.mrb[0].mxu0 %v1527
    %v1566 = vpop.f32.mrb[0].mxu0
    %v1567 = vadd.f32 %v1513, %v1566
    %v1568 = vpop.f32.mrb[0].mxu0
    %v1569 = vpop.f32.mrb[0].mxu0
    %v1570 = vadd.f32 %v1513, %v1569
    %v1571 = vpop.f32.mrb[0].mxu0
    %1572 = vmatprep.mubr.bf16.mxu0 0
    %1573 = vmatmul.mubr.bf16.gmra.mrb[0].mxu0 %v1530
    %v1574 = vpop.f32.mrb[0].mxu0
    %v1575 = vadd.f32 %v1513, %v1574
    %v1576 = vpop.f32.mrb[0].mxu0
    %v1577 = vpop.f32.mrb[0].mxu0
    %v1578 = vadd.f32 %v1513, %v1577
    %v1579 = vpop.f32.mrb[0].mxu0
    %1580 = vdwg.mxu0
    %s1581 = scalar_lea.vmem %s4, 80
    %v1582 = vld [vmem:[%s1581] sm:$0xf]
    %v1583 = vld [vmem:[%s1581 + $0x4] sm:$0xf]
    %v1584 = vld [vmem:[%s1581 + $0x8] sm:$0xf]
    %v1585 = vld [vmem:[%s1581 + $0xc] sm:$0xf]
    %v1586 = vlaneseq
    %v1587 = vshrl.u32 %v1586, 7
    %v1588 = vsub.s32 6, %v1587
    %v1589 = vrot.slane %v39, %v1588
    %v1594 = vunpack.c.l.b16 %v1582
    %v1595 = vunpack.c.l.b16 %v1583
    %v1596 = vunpack.c.l.b16 %v1584
    %v1597 = vunpack.c.l.b16 %v1585
    %v1598 = vpack.c.b16 %v1595, %v1594
    %v1599 = vpack.c.b16 %v1597, %v1596
    %1602 = vmatprep.subr.bf16.mxu0 0
    %1603 = vmatpush1.bf16.msra.mxu0 %v1598
    %1604 = vmatprep.subr.bf16.mxu0 0
    %1605 = vmatpush1.bf16.msra.mxu0 %v1599
    %1606 = vmatprep.subr.bf16.mxu0 0
    %1607 = vmatpush1.bf16.msra.mxu0 0
    %1608 = vmatprep.subr.bf16.mxu0 0
    %1609 = vmatpush1.bf16.msra.mxu0 0
    %1610 = vmatprep.subr.bf16.mxu0 0
    %1611 = vmatpush1.bf16.msra.mxu0 0
    %1612 = vmatprep.subr.bf16.mxu0 0
    %1613 = vmatpush1.bf16.msra.mxu0 0
    %1614 = vmatprep.subr.bf16.mxu0 0
    %1615 = vmatpush1.bf16.msra.mxu0 0
    %1616 = vmatprep.subr.bf16.mxu0 0
    %1617 = vmatpush1.bf16.msra.mxu0 0
    %1618 = vmatprep.subr.bf16.mxu0 0
    %1619 = vmatpush1.bf16.msra.mxu0 0
    %1620 = vmatprep.subr.bf16.mxu0 0
    %1621 = vmatpush1.bf16.msra.mxu0 0
    %1622 = vmatprep.subr.bf16.mxu0 0
    %1623 = vmatpush1.bf16.msra.mxu0 0
    %1624 = vmatprep.subr.bf16.mxu0 0
    %1625 = vmatpush1.bf16.msra.mxu0 0
    %1626 = vmatprep.subr.bf16.mxu0 0
    %1627 = vmatpush1.bf16.msra.mxu0 0
    %1628 = vmatprep.subr.bf16.mxu0 0
    %1629 = vmatpush1.bf16.msra.mxu0 0
    %1630 = vmatprep.subr.bf16.mxu0 0
    %1631 = vmatpush1.bf16.msra.mxu0 0
    %1632 = vmatprep.subr.bf16.mxu0 0
    %1633 = vmatpush1.bf16.msra.mxu0 0
    %1634 = vmatprep.mubr.bf16.mxu0 0
    %1635 = vmatmul.mubr.bf16.gmra.mrb[0].mxu0 %v1527
    %v1636 = vpop.f32.mrb[0].mxu0
    %v1637 = vadd.f32 %v1589, %v1636
    %v1638 = vpop.f32.mrb[0].mxu0
    %v1639 = vpop.f32.mrb[0].mxu0
    %v1640 = vadd.f32 %v1589, %v1639
    %v1641 = vpop.f32.mrb[0].mxu0
    %1642 = vmatprep.mubr.bf16.mxu0 0
    %1643 = vmatmul.mubr.bf16.gmra.mrb[0].mxu0 %v1530
    %v1644 = vpop.f32.mrb[0].mxu0
    %v1645 = vadd.f32 %v1589, %v1644
    %v1646 = vpop.f32.mrb[0].mxu0
    %v1647 = vpop.f32.mrb[0].mxu0
    %v1648 = vadd.f32 %v1589, %v1647
    %v1649 = vpop.f32.mrb[0].mxu0
    %1650 = vdwg.mxu0
    %1653 = vrot.lane.b32.xlu0 %v1499, 120
    %v1654 = vpop.permute.xlu0 %1653
    %1655 = vrot.lane.b32.xlu0 %v1502, 120
    %v1656 = vpop.permute.xlu0 %1655
    %1659 = vrot.lane.b32.xlu0 %v1499, 112
    %v1660 = vpop.permute.xlu0 %1659
    %1661 = vrot.lane.b32.xlu0 %v1502, 112
    %v1662 = vpop.permute.xlu0 %1661
    %1665 = vrot.lane.b32.xlu0 %v1499, 104
    %v1666 = vpop.permute.xlu0 %1665
    %1667 = vrot.lane.b32.xlu0 %v1502, 104
    %v1668 = vpop.permute.xlu0 %1667
    %1675 = vrot.lane.b32.xlu0 %v1567, 120
    %v1676 = vpop.permute.xlu0 %1675
    %1677 = vrot.lane.b32.xlu0 %v1570, 120
    %v1678 = vpop.permute.xlu0 %1677
    %1679 = vrot.lane.b32.xlu0 %v1575, 120
    %v1680 = vpop.permute.xlu0 %1679
    %1681 = vrot.lane.b32.xlu0 %v1578, 120
    %v1682 = vpop.permute.xlu0 %1681
    %1687 = vrot.lane.b32.xlu0 %v1567, 112
    %v1688 = vpop.permute.xlu0 %1687
    %1689 = vrot.lane.b32.xlu0 %v1570, 112
    %v1690 = vpop.permute.xlu0 %1689
    %1691 = vrot.lane.b32.xlu0 %v1575, 112
    %v1692 = vpop.permute.xlu0 %1691
    %1693 = vrot.lane.b32.xlu0 %v1578, 112
    %v1694 = vpop.permute.xlu0 %1693
    %1699 = vrot.lane.b32.xlu0 %v1567, 104
    %v1700 = vpop.permute.xlu0 %1699
    %1701 = vrot.lane.b32.xlu0 %v1570, 104
    %v1702 = vpop.permute.xlu0 %1701
    %1703 = vrot.lane.b32.xlu0 %v1575, 104
    %v1704 = vpop.permute.xlu0 %1703
    %1705 = vrot.lane.b32.xlu0 %v1578, 104
    %v1706 = vpop.permute.xlu0 %1705
    %1715 = vrot.lane.b32.xlu0 %v1637, 120
    %v1716 = vpop.permute.xlu0 %1715
    %1717 = vrot.lane.b32.xlu0 %v1640, 120
    %v1718 = vpop.permute.xlu0 %1717
    %1719 = vrot.lane.b32.xlu0 %v1645, 120
    %v1720 = vpop.permute.xlu0 %1719
    %1721 = vrot.lane.b32.xlu0 %v1648, 120
    %v1722 = vpop.permute.xlu0 %1721
    %1727 = vrot.lane.b32.xlu0 %v1637, 112
    %v1728 = vpop.permute.xlu0 %1727
    %1729 = vrot.lane.b32.xlu0 %v1640, 112
    %v1730 = vpop.permute.xlu0 %1729
    %1731 = vrot.lane.b32.xlu0 %v1645, 112
    %v1732 = vpop.permute.xlu0 %1731
    %1733 = vrot.lane.b32.xlu0 %v1648, 112
    %v1734 = vpop.permute.xlu0 %1733
    %1739 = vrot.lane.b32.xlu0 %v1637, 104
    %v1740 = vpop.permute.xlu0 %1739
    %1741 = vrot.lane.b32.xlu0 %v1640, 104
    %v1742 = vpop.permute.xlu0 %1741
    %1743 = vrot.lane.b32.xlu0 %v1645, 104
    %v1744 = vpop.permute.xlu0 %1743
    %1745 = vrot.lane.b32.xlu0 %v1648, 104
    %v1746 = vpop.permute.xlu0 %1745
    %v1751 = vpack.c.bf16 %v1499, %v1499
    %v1752 = vpack.c.bf16 %v1502, %v1502
    %v1753 = vpack.c.bf16 %v1654, %v1654
    %v1754 = vpack.c.bf16 %v1656, %v1656
    %v1755 = vpack.c.bf16 %v1660, %v1660
    %v1756 = vpack.c.bf16 %v1662, %v1662
    %v1757 = vpack.c.bf16 %v1666, %v1666
    %v1758 = vpack.c.bf16 %v1668, %v1668
    %v1759 = vpack.c.bf16 %v1570, %v1567
    %v1760 = vpack.c.bf16 %v1578, %v1575
    %v1761 = vpack.c.bf16 %v1678, %v1676
    %v1762 = vpack.c.bf16 %v1682, %v1680
    %v1763 = vpack.c.bf16 %v1690, %v1688
    %v1764 = vpack.c.bf16 %v1694, %v1692
    %v1765 = vpack.c.bf16 %v1702, %v1700
    %v1766 = vpack.c.bf16 %v1706, %v1704
    %v1768 = vsel %vm321, %v1751, 0
    %v1771 = vsel %vm321, %v1759, 0
    %1773 = vmatprep.subr.bf16.mxu0 0
    %1774 = vmatpush1.bf16.xpose.msra.mxu0 %v1771
    %1775 = vmatprep.subr.bf16.mxu0 0
    %1776 = vmatpush1.bf16.xpose.msra.mxu0 0
    %1777 = vmatprep.subr.bf16.mxu0 0
    %1778 = vmatpush1.bf16.xpose.msra.mxu0 0
    %1779 = vmatprep.subr.bf16.mxu0 0
    %1780 = vmatpush1.bf16.xpose.msra.mxu0 0
    %1781 = vmatprep.subr.bf16.mxu0 0
    %1782 = vmatpush1.bf16.xpose.msra.mxu0 0
    %1783 = vmatprep.subr.bf16.mxu0 0
    %1784 = vmatpush1.bf16.xpose.msra.mxu0 0
    %1785 = vmatprep.subr.bf16.mxu0 0
    %1786 = vmatpush1.bf16.xpose.msra.mxu0 0
    %1787 = vmatprep.subr.bf16.mxu0 0
    %1788 = vmatpush1.bf16.xpose.msra.mxu0 0
    %1789 = vmatprep.subr.bf16.mxu0 0
    %1790 = vmatpush1.bf16.xpose.msra.mxu0 0
    %1791 = vmatprep.subr.bf16.mxu0 0
    %1792 = vmatpush1.bf16.xpose.msra.mxu0 0
    %1793 = vmatprep.subr.bf16.mxu0 0
    %1794 = vmatpush1.bf16.xpose.msra.mxu0 0
    %1795 = vmatprep.subr.bf16.mxu0 0
    %1796 = vmatpush1.bf16.xpose.msra.mxu0 0
    %1797 = vmatprep.subr.bf16.mxu0 0
    %1798 = vmatpush1.bf16.xpose.msra.mxu0 0
    %1799 = vmatprep.subr.bf16.mxu0 0
    %1800 = vmatpush1.bf16.xpose.msra.mxu0 0
    %1801 = vmatprep.subr.bf16.mxu0 0
    %1802 = vmatpush1.bf16.xpose.msra.mxu0 0
    %1803 = vmatprep.subr.bf16.mxu0 0
    %1804 = vmatpush1.bf16.xpose.msra.mxu0 0
    %1805 = vmatprep.mubr.bf16.mxu0 0
    %1806 = vmatmul.mubr.bf16.gmra.mrb[0].mxu0 %v1768
    %v1807 = vpop.f32.mrb[0].mxu0
    %v1808 = vadd.f32 0.0, %v1807
    %v1809 = vpop.f32.mrb[0].mxu0
    %v1810 = vpop.f32.mrb[0].mxu0
    %v1811 = vpop.f32.mrb[0].mxu0
    %1812 = vdwg.mxu0
    %v1814 = vsel %vm321, %v1752, 0
    %v1817 = vsel %vm321, %v1760, 0
    %1819 = vmatprep.subr.bf16.mxu0 0
    %1820 = vmatpush1.bf16.xpose.msra.mxu0 %v1817
    %1821 = vmatprep.subr.bf16.mxu0 0
    %1822 = vmatpush1.bf16.xpose.msra.mxu0 0
    %1823 = vmatprep.subr.bf16.mxu0 0
    %1824 = vmatpush1.bf16.xpose.msra.mxu0 0
    %1825 = vmatprep.subr.bf16.mxu0 0
    %1826 = vmatpush1.bf16.xpose.msra.mxu0 0
    %1827 = vmatprep.subr.bf16.mxu0 0
    %1828 = vmatpush1.bf16.xpose.msra.mxu0 0
    %1829 = vmatprep.subr.bf16.mxu0 0
    %1830 = vmatpush1.bf16.xpose.msra.mxu0 0
    %1831 = vmatprep.subr.bf16.mxu0 0
    %1832 = vmatpush1.bf16.xpose.msra.mxu0 0
    %1833 = vmatprep.subr.bf16.mxu0 0
    %1834 = vmatpush1.bf16.xpose.msra.mxu0 0
    %1835 = vmatprep.subr.bf16.mxu0 0
    %1836 = vmatpush1.bf16.xpose.msra.mxu0 0
    %1837 = vmatprep.subr.bf16.mxu0 0
    %1838 = vmatpush1.bf16.xpose.msra.mxu0 0
    %1839 = vmatprep.subr.bf16.mxu0 0
    %1840 = vmatpush1.bf16.xpose.msra.mxu0 0
    %1841 = vmatprep.subr.bf16.mxu0 0
    %1842 = vmatpush1.bf16.xpose.msra.mxu0 0
    %1843 = vmatprep.subr.bf16.mxu0 0
    %1844 = vmatpush1.bf16.xpose.msra.mxu0 0
    %1845 = vmatprep.subr.bf16.mxu0 0
    %1846 = vmatpush1.bf16.xpose.msra.mxu0 0
    %1847 = vmatprep.subr.bf16.mxu0 0
    %1848 = vmatpush1.bf16.xpose.msra.mxu0 0
    %1849 = vmatprep.subr.bf16.mxu0 0
    %1850 = vmatpush1.bf16.xpose.msra.mxu0 0
    %1851 = vmatprep.mubr.bf16.mxu0 0
    %1852 = vmatmul.mubr.bf16.gmra.mrb[0].mxu0 %v1814
    %v1853 = vpop.f32.mrb[0].mxu0
    %v1854 = vadd.f32 0.0, %v1853
    %v1855 = vpop.f32.mrb[0].mxu0
    %v1856 = vpop.f32.mrb[0].mxu0
    %v1857 = vpop.f32.mrb[0].mxu0
    %1858 = vdwg.mxu0
    %v1860 = vsel %vm321, %v1753, 0
    %v1863 = vsel %vm321, %v1761, 0
    %1865 = vmatprep.subr.bf16.mxu0 0
    %1866 = vmatpush1.bf16.xpose.msra.mxu0 %v1863
    %1867 = vmatprep.subr.bf16.mxu0 0
    %1868 = vmatpush1.bf16.xpose.msra.mxu0 0
    %1869 = vmatprep.subr.bf16.mxu0 0
    %1870 = vmatpush1.bf16.xpose.msra.mxu0 0
    %1871 = vmatprep.subr.bf16.mxu0 0
    %1872 = vmatpush1.bf16.xpose.msra.mxu0 0
    %1873 = vmatprep.subr.bf16.mxu0 0
    %1874 = vmatpush1.bf16.xpose.msra.mxu0 0
    %1875 = vmatprep.subr.bf16.mxu0 0
    %1876 = vmatpush1.bf16.xpose.msra.mxu0 0
    %1877 = vmatprep.subr.bf16.mxu0 0
    %1878 = vmatpush1.bf16.xpose.msra.mxu0 0
    %1879 = vmatprep.subr.bf16.mxu0 0
    %1880 = vmatpush1.bf16.xpose.msra.mxu0 0
    %1881 = vmatprep.subr.bf16.mxu0 0
    %1882 = vmatpush1.bf16.xpose.msra.mxu0 0
    %1883 = vmatprep.subr.bf16.mxu0 0
    %1884 = vmatpush1.bf16.xpose.msra.mxu0 0
    %1885 = vmatprep.subr.bf16.mxu0 0
    %1886 = vmatpush1.bf16.xpose.msra.mxu0 0
    %1887 = vmatprep.subr.bf16.mxu0 0
    %1888 = vmatpush1.bf16.xpose.msra.mxu0 0
    %1889 = vmatprep.subr.bf16.mxu0 0
    %1890 = vmatpush1.bf16.xpose.msra.mxu0 0
    %1891 = vmatprep.subr.bf16.mxu0 0
    %1892 = vmatpush1.bf16.xpose.msra.mxu0 0
    %1893 = vmatprep.subr.bf16.mxu0 0
    %1894 = vmatpush1.bf16.xpose.msra.mxu0 0
    %1895 = vmatprep.subr.bf16.mxu0 0
    %1896 = vmatpush1.bf16.xpose.msra.mxu0 0
    %1897 = vmatprep.mubr.bf16.mxu0 0
    %1898 = vmatmul.mubr.bf16.gmra.mrb[0].mxu0 %v1860
    %v1899 = vpop.f32.mrb[0].mxu0
    %v1900 = vadd.f32 0.0, %v1899
    %v1901 = vpop.f32.mrb[0].mxu0
    %v1902 = vpop.f32.mrb[0].mxu0
    %v1903 = vpop.f32.mrb[0].mxu0
    %1904 = vdwg.mxu0
    %v1906 = vsel %vm321, %v1754, 0
    %v1909 = vsel %vm321, %v1762, 0
    %1911 = vmatprep.subr.bf16.mxu0 0
    %1912 = vmatpush1.bf16.xpose.msra.mxu0 %v1909
    %1913 = vmatprep.subr.bf16.mxu0 0
    %1914 = vmatpush1.bf16.xpose.msra.mxu0 0
    %1915 = vmatprep.subr.bf16.mxu0 0
    %1916 = vmatpush1.bf16.xpose.msra.mxu0 0
    %1917 = vmatprep.subr.bf16.mxu0 0
    %1918 = vmatpush1.bf16.xpose.msra.mxu0 0
    %1919 = vmatprep.subr.bf16.mxu0 0
    %1920 = vmatpush1.bf16.xpose.msra.mxu0 0
    %1921 = vmatprep.subr.bf16.mxu0 0
    %1922 = vmatpush1.bf16.xpose.msra.mxu0 0
    %1923 = vmatprep.subr.bf16.mxu0 0
    %1924 = vmatpush1.bf16.xpose.msra.mxu0 0
    %1925 = vmatprep.subr.bf16.mxu0 0
    %1926 = vmatpush1.bf16.xpose.msra.mxu0 0
    %1927 = vmatprep.subr.bf16.mxu0 0
    %1928 = vmatpush1.bf16.xpose.msra.mxu0 0
    %1929 = vmatprep.subr.bf16.mxu0 0
    %1930 = vmatpush1.bf16.xpose.msra.mxu0 0
    %1931 = vmatprep.subr.bf16.mxu0 0
    %1932 = vmatpush1.bf16.xpose.msra.mxu0 0
    %1933 = vmatprep.subr.bf16.mxu0 0
    %1934 = vmatpush1.bf16.xpose.msra.mxu0 0
    %1935 = vmatprep.subr.bf16.mxu0 0
    %1936 = vmatpush1.bf16.xpose.msra.mxu0 0
    %1937 = vmatprep.subr.bf16.mxu0 0
    %1938 = vmatpush1.bf16.xpose.msra.mxu0 0
    %1939 = vmatprep.subr.bf16.mxu0 0
    %1940 = vmatpush1.bf16.xpose.msra.mxu0 0
    %1941 = vmatprep.subr.bf16.mxu0 0
    %1942 = vmatpush1.bf16.xpose.msra.mxu0 0
    %1943 = vmatprep.mubr.bf16.mxu0 0
    %1944 = vmatmul.mubr.bf16.gmra.mrb[0].mxu0 %v1906
    %v1945 = vpop.f32.mrb[0].mxu0
    %v1946 = vadd.f32 0.0, %v1945
    %v1947 = vpop.f32.mrb[0].mxu0
    %v1948 = vpop.f32.mrb[0].mxu0
    %v1949 = vpop.f32.mrb[0].mxu0
    %1950 = vdwg.mxu0
    %v1952 = vsel %vm321, %v1755, 0
    %v1955 = vsel %vm321, %v1763, 0
    %1957 = vmatprep.subr.bf16.mxu0 0
    %1958 = vmatpush1.bf16.xpose.msra.mxu0 %v1955
    %1959 = vmatprep.subr.bf16.mxu0 0
    %1960 = vmatpush1.bf16.xpose.msra.mxu0 0
    %1961 = vmatprep.subr.bf16.mxu0 0
    %1962 = vmatpush1.bf16.xpose.msra.mxu0 0
    %1963 = vmatprep.subr.bf16.mxu0 0
    %1964 = vmatpush1.bf16.xpose.msra.mxu0 0
    %1965 = vmatprep.subr.bf16.mxu0 0
    %1966 = vmatpush1.bf16.xpose.msra.mxu0 0
    %1967 = vmatprep.subr.bf16.mxu0 0
    %1968 = vmatpush1.bf16.xpose.msra.mxu0 0
    %1969 = vmatprep.subr.bf16.mxu0 0
    %1970 = vmatpush1.bf16.xpose.msra.mxu0 0
    %1971 = vmatprep.subr.bf16.mxu0 0
    %1972 = vmatpush1.bf16.xpose.msra.mxu0 0
    %1973 = vmatprep.subr.bf16.mxu0 0
    %1974 = vmatpush1.bf16.xpose.msra.mxu0 0
    %1975 = vmatprep.subr.bf16.mxu0 0
    %1976 = vmatpush1.bf16.xpose.msra.mxu0 0
    %1977 = vmatprep.subr.bf16.mxu0 0
    %1978 = vmatpush1.bf16.xpose.msra.mxu0 0
    %1979 = vmatprep.subr.bf16.mxu0 0
    %1980 = vmatpush1.bf16.xpose.msra.mxu0 0
    %1981 = vmatprep.subr.bf16.mxu0 0
    %1982 = vmatpush1.bf16.xpose.msra.mxu0 0
    %1983 = vmatprep.subr.bf16.mxu0 0
    %1984 = vmatpush1.bf16.xpose.msra.mxu0 0
    %1985 = vmatprep.subr.bf16.mxu0 0
    %1986 = vmatpush1.bf16.xpose.msra.mxu0 0
    %1987 = vmatprep.subr.bf16.mxu0 0
    %1988 = vmatpush1.bf16.xpose.msra.mxu0 0
    %1989 = vmatprep.mubr.bf16.mxu0 0
    %1990 = vmatmul.mubr.bf16.gmra.mrb[0].mxu0 %v1952
    %v1991 = vpop.f32.mrb[0].mxu0
    %v1992 = vadd.f32 0.0, %v1991
    %v1993 = vpop.f32.mrb[0].mxu0
    %v1994 = vpop.f32.mrb[0].mxu0
    %v1995 = vpop.f32.mrb[0].mxu0
    %1996 = vdwg.mxu0
    %v1998 = vsel %vm321, %v1756, 0
    %v2001 = vsel %vm321, %v1764, 0
    %2003 = vmatprep.subr.bf16.mxu0 0
    %2004 = vmatpush1.bf16.xpose.msra.mxu0 %v2001
    %2005 = vmatprep.subr.bf16.mxu0 0
    %2006 = vmatpush1.bf16.xpose.msra.mxu0 0
    %2007 = vmatprep.subr.bf16.mxu0 0
    %2008 = vmatpush1.bf16.xpose.msra.mxu0 0
    %2009 = vmatprep.subr.bf16.mxu0 0
    %2010 = vmatpush1.bf16.xpose.msra.mxu0 0
    %2011 = vmatprep.subr.bf16.mxu0 0
    %2012 = vmatpush1.bf16.xpose.msra.mxu0 0
    %2013 = vmatprep.subr.bf16.mxu0 0
    %2014 = vmatpush1.bf16.xpose.msra.mxu0 0
    %2015 = vmatprep.subr.bf16.mxu0 0
    %2016 = vmatpush1.bf16.xpose.msra.mxu0 0
    %2017 = vmatprep.subr.bf16.mxu0 0
    %2018 = vmatpush1.bf16.xpose.msra.mxu0 0
    %2019 = vmatprep.subr.bf16.mxu0 0
    %2020 = vmatpush1.bf16.xpose.msra.mxu0 0
    %2021 = vmatprep.subr.bf16.mxu0 0
    %2022 = vmatpush1.bf16.xpose.msra.mxu0 0
    %2023 = vmatprep.subr.bf16.mxu0 0
    %2024 = vmatpush1.bf16.xpose.msra.mxu0 0
    %2025 = vmatprep.subr.bf16.mxu0 0
    %2026 = vmatpush1.bf16.xpose.msra.mxu0 0
    %2027 = vmatprep.subr.bf16.mxu0 0
    %2028 = vmatpush1.bf16.xpose.msra.mxu0 0
    %2029 = vmatprep.subr.bf16.mxu0 0
    %2030 = vmatpush1.bf16.xpose.msra.mxu0 0
    %2031 = vmatprep.subr.bf16.mxu0 0
    %2032 = vmatpush1.bf16.xpose.msra.mxu0 0
    %2033 = vmatprep.subr.bf16.mxu0 0
    %2034 = vmatpush1.bf16.xpose.msra.mxu0 0
    %2035 = vmatprep.mubr.bf16.mxu0 0
    %2036 = vmatmul.mubr.bf16.gmra.mrb[0].mxu0 %v1998
    %v2037 = vpop.f32.mrb[0].mxu0
    %v2038 = vadd.f32 0.0, %v2037
    %v2039 = vpop.f32.mrb[0].mxu0
    %v2040 = vpop.f32.mrb[0].mxu0
    %v2041 = vpop.f32.mrb[0].mxu0
    %2042 = vdwg.mxu0
    %v2044 = vsel %vm321, %v1757, 0
    %v2047 = vsel %vm321, %v1765, 0
    %2049 = vmatprep.subr.bf16.mxu0 0
    %2050 = vmatpush1.bf16.xpose.msra.mxu0 %v2047
    %2051 = vmatprep.subr.bf16.mxu0 0
    %2052 = vmatpush1.bf16.xpose.msra.mxu0 0
    %2053 = vmatprep.subr.bf16.mxu0 0
    %2054 = vmatpush1.bf16.xpose.msra.mxu0 0
    %2055 = vmatprep.subr.bf16.mxu0 0
    %2056 = vmatpush1.bf16.xpose.msra.mxu0 0
    %2057 = vmatprep.subr.bf16.mxu0 0
    %2058 = vmatpush1.bf16.xpose.msra.mxu0 0
    %2059 = vmatprep.subr.bf16.mxu0 0
    %2060 = vmatpush1.bf16.xpose.msra.mxu0 0
    %2061 = vmatprep.subr.bf16.mxu0 0
    %2062 = vmatpush1.bf16.xpose.msra.mxu0 0
    %2063 = vmatprep.subr.bf16.mxu0 0
    %2064 = vmatpush1.bf16.xpose.msra.mxu0 0
    %2065 = vmatprep.subr.bf16.mxu0 0
    %2066 = vmatpush1.bf16.xpose.msra.mxu0 0
    %2067 = vmatprep.subr.bf16.mxu0 0
    %2068 = vmatpush1.bf16.xpose.msra.mxu0 0
    %2069 = vmatprep.subr.bf16.mxu0 0
    %2070 = vmatpush1.bf16.xpose.msra.mxu0 0
    %2071 = vmatprep.subr.bf16.mxu0 0
    %2072 = vmatpush1.bf16.xpose.msra.mxu0 0
    %2073 = vmatprep.subr.bf16.mxu0 0
    %2074 = vmatpush1.bf16.xpose.msra.mxu0 0
    %2075 = vmatprep.subr.bf16.mxu0 0
    %2076 = vmatpush1.bf16.xpose.msra.mxu0 0
    %2077 = vmatprep.subr.bf16.mxu0 0
    %2078 = vmatpush1.bf16.xpose.msra.mxu0 0
    %2079 = vmatprep.subr.bf16.mxu0 0
    %2080 = vmatpush1.bf16.xpose.msra.mxu0 0
    %2081 = vmatprep.mubr.bf16.mxu0 0
    %2082 = vmatmul.mubr.bf16.gmra.mrb[0].mxu0 %v2044
    %v2083 = vpop.f32.mrb[0].mxu0
    %v2084 = vadd.f32 0.0, %v2083
    %v2085 = vpop.f32.mrb[0].mxu0
    %v2086 = vpop.f32.mrb[0].mxu0
    %v2087 = vpop.f32.mrb[0].mxu0
    %2088 = vdwg.mxu0
    %v2090 = vsel %vm321, %v1758, 0
    %v2093 = vsel %vm321, %v1766, 0
    %2095 = vmatprep.subr.bf16.mxu0 0
    %2096 = vmatpush1.bf16.xpose.msra.mxu0 %v2093
    %2097 = vmatprep.subr.bf16.mxu0 0
    %2098 = vmatpush1.bf16.xpose.msra.mxu0 0
    %2099 = vmatprep.subr.bf16.mxu0 0
    %2100 = vmatpush1.bf16.xpose.msra.mxu0 0
    %2101 = vmatprep.subr.bf16.mxu0 0
    %2102 = vmatpush1.bf16.xpose.msra.mxu0 0
    %2103 = vmatprep.subr.bf16.mxu0 0
    %2104 = vmatpush1.bf16.xpose.msra.mxu0 0
    %2105 = vmatprep.subr.bf16.mxu0 0
    %2106 = vmatpush1.bf16.xpose.msra.mxu0 0
    %2107 = vmatprep.subr.bf16.mxu0 0
    %2108 = vmatpush1.bf16.xpose.msra.mxu0 0
    %2109 = vmatprep.subr.bf16.mxu0 0
    %2110 = vmatpush1.bf16.xpose.msra.mxu0 0
    %2111 = vmatprep.subr.bf16.mxu0 0
    %2112 = vmatpush1.bf16.xpose.msra.mxu0 0
    %2113 = vmatprep.subr.bf16.mxu0 0
    %2114 = vmatpush1.bf16.xpose.msra.mxu0 0
    %2115 = vmatprep.subr.bf16.mxu0 0
    %2116 = vmatpush1.bf16.xpose.msra.mxu0 0
    %2117 = vmatprep.subr.bf16.mxu0 0
    %2118 = vmatpush1.bf16.xpose.msra.mxu0 0
    %2119 = vmatprep.subr.bf16.mxu0 0
    %2120 = vmatpush1.bf16.xpose.msra.mxu0 0
    %2121 = vmatprep.subr.bf16.mxu0 0
    %2122 = vmatpush1.bf16.xpose.msra.mxu0 0
    %2123 = vmatprep.subr.bf16.mxu0 0
    %2124 = vmatpush1.bf16.xpose.msra.mxu0 0
    %2125 = vmatprep.subr.bf16.mxu0 0
    %2126 = vmatpush1.bf16.xpose.msra.mxu0 0
    %2127 = vmatprep.mubr.bf16.mxu0 0
    %2128 = vmatmul.mubr.bf16.gmra.mrb[0].mxu0 %v2090
    %v2129 = vpop.f32.mrb[0].mxu0
    %v2130 = vadd.f32 0.0, %v2129
    %v2131 = vpop.f32.mrb[0].mxu0
    %v2132 = vpop.f32.mrb[0].mxu0
    %v2133 = vpop.f32.mrb[0].mxu0
    %2134 = vdwg.mxu0
    %v2135 = vmul.f32 %v1808, 0.35355338
    %v2136 = vmul.f32 %v1854, 0.35355338
    %v2137 = vmul.f32 %v1900, 0.35355338
    %v2138 = vmul.f32 %v1946, 0.35355338
    %v2139 = vmul.f32 %v1992, 0.35355338
    %v2140 = vmul.f32 %v2038, 0.35355338
    %v2141 = vmul.f32 %v2084, 0.35355338
    %v2142 = vmul.f32 %v2130, 0.35355338
    %v2145 = vlaneseq
    %v2146 = vshrl.u32 %v2145, 7
    %v2147 = vsub.s32 0, %v2146
    %v2148 = vrot.slane %v49, %v2147
    %v2149 = vlaneseq
    %v2150 = vshrl.u32 %v2149, 7
    %v2151 = vsub.s32 0, %v2150
    %v2152 = vrot.slane %v50, %v2151
    %v2155 = vadd.f32 %v2135, %v2148
    %v2156 = vadd.f32 %v2136, %v2152
    %v2157 = vadd.f32 %v2137, %v2148
    %v2158 = vadd.f32 %v2138, %v2152
    %v2159 = vadd.f32 %v2139, %v2148
    %v2160 = vadd.f32 %v2140, %v2152
    %v2161 = vadd.f32 %v2141, %v2148
    %v2162 = vadd.f32 %v2142, %v2152
    %vm2163 = vcmask 130048
    %v2164 = vsel %vm2163, %v2155, -inf
    %2165 = vmax.xlane.f32.xlu0 %v2164
    %v2166 = vpop.xlane.xlu0 %2165
    %v2167 = vsel %vm2163, %v2156, -inf
    %2168 = vmax.xlane.f32.xlu0 %v2167
    %v2169 = vpop.xlane.xlu0 %2168
    %v2170 = vsel %vm2163, %v2157, -inf
    %2171 = vmax.xlane.f32.xlu0 %v2170
    %v2172 = vpop.xlane.xlu0 %2171
    %v2173 = vsel %vm2163, %v2158, -inf
    %2174 = vmax.xlane.f32.xlu0 %v2173
    %v2175 = vpop.xlane.xlu0 %2174
    %v2176 = vsel %vm2163, %v2159, -inf
    %2177 = vmax.xlane.f32.xlu0 %v2176
    %v2178 = vpop.xlane.xlu0 %2177
    %v2179 = vsel %vm2163, %v2160, -inf
    %2180 = vmax.xlane.f32.xlu0 %v2179
    %v2181 = vpop.xlane.xlu0 %2180
    %v2182 = vsel %vm2163, %v2161, -inf
    %2183 = vmax.xlane.f32.xlu0 %v2182
    %v2184 = vpop.xlane.xlu0 %2183
    %v2185 = vsel %vm2163, %v2162, -inf
    %2186 = vmax.xlane.f32.xlu0 %v2185
    %v2187 = vpop.xlane.xlu0 %2186
    %v2188 = vsub.f32 %v2155, %v2166
    %v2189 = vsub.f32 %v2156, %v2169
    %v2190 = vsub.f32 %v2157, %v2172
    %v2191 = vsub.f32 %v2158, %v2175
    %v2192 = vsub.f32 %v2159, %v2178
    %v2193 = vsub.f32 %v2160, %v2181
    %v2194 = vsub.f32 %v2161, %v2184
    %v2195 = vsub.f32 %v2162, %v2187
    %v2196 = vmul.f32 %v2188, 1.442695
    %v2197 = vpow.pop %v2196
    %v2198 = vmul.f32 %v2189, 1.442695
    %v2199 = vpow.pop %v2198
    %v2200 = vmul.f32 %v2190, 1.442695
    %v2201 = vpow.pop %v2200
    %v2202 = vmul.f32 %v2191, 1.442695
    %v2203 = vpow.pop %v2202
    %v2204 = vmul.f32 %v2192, 1.442695
    %v2205 = vpow.pop %v2204
    %v2206 = vmul.f32 %v2193, 1.442695
    %v2207 = vpow.pop %v2206
    %v2208 = vmul.f32 %v2194, 1.442695
    %v2209 = vpow.pop %v2208
    %v2210 = vmul.f32 %v2195, 1.442695
    %v2211 = vpow.pop %v2210
    %v2212 = vsel %vm2163, %v2197, 0.0
    %2213 = vadd.xlane.f32.xlu0 %v2212
    %v2214 = vpop.xlane.xlu0 %2213
    %v2215 = vsel %vm2163, %v2199, 0.0
    %2216 = vadd.xlane.f32.xlu0 %v2215
    %v2217 = vpop.xlane.xlu0 %2216
    %v2218 = vsel %vm2163, %v2201, 0.0
    %2219 = vadd.xlane.f32.xlu0 %v2218
    %v2220 = vpop.xlane.xlu0 %2219
    %v2221 = vsel %vm2163, %v2203, 0.0
    %2222 = vadd.xlane.f32.xlu0 %v2221
    %v2223 = vpop.xlane.xlu0 %2222
    %v2224 = vsel %vm2163, %v2205, 0.0
    %2225 = vadd.xlane.f32.xlu0 %v2224
    %v2226 = vpop.xlane.xlu0 %2225
    %v2227 = vsel %vm2163, %v2207, 0.0
    %2228 = vadd.xlane.f32.xlu0 %v2227
    %v2229 = vpop.xlane.xlu0 %2228
    %v2230 = vsel %vm2163, %v2209, 0.0
    %2231 = vadd.xlane.f32.xlu0 %v2230
    %v2232 = vpop.xlane.xlu0 %2231
    %v2233 = vsel %vm2163, %v2211, 0.0
    %2234 = vadd.xlane.f32.xlu0 %v2233
    %v2235 = vpop.xlane.xlu0 %2234
    %v2236 = vrcp.pop %v2214
    %v2237 = vmul.f32 %v2197, %v2236
    %v2238 = vrcp.pop %v2217
    %v2239 = vmul.f32 %v2199, %v2238
    %v2240 = vrcp.pop %v2220
    %v2241 = vmul.f32 %v2201, %v2240
    %v2242 = vrcp.pop %v2223
    %v2243 = vmul.f32 %v2203, %v2242
    %v2244 = vrcp.pop %v2226
    %v2245 = vmul.f32 %v2205, %v2244
    %v2246 = vrcp.pop %v2229
    %v2247 = vmul.f32 %v2207, %v2246
    %v2248 = vrcp.pop %v2232
    %v2249 = vmul.f32 %v2209, %v2248
    %v2250 = vrcp.pop %v2235
    %v2251 = vmul.f32 %v2211, %v2250
    %v2252 = vpack.c.bf16 %v2237, %v2237
    %v2253 = vpack.c.bf16 %v2239, %v2239
    %v2254 = vpack.c.bf16 %v2241, %v2241
    %v2255 = vpack.c.bf16 %v2243, %v2243
    %v2256 = vpack.c.bf16 %v2245, %v2245
    %v2257 = vpack.c.bf16 %v2247, %v2247
    %v2258 = vpack.c.bf16 %v2249, %v2249
    %v2259 = vpack.c.bf16 %v2251, %v2251
    %v2260 = vpack.c.bf16 %v1640, %v1637
    %v2261 = vpack.c.bf16 %v1648, %v1645
    %v2262 = vpack.c.bf16 %v1718, %v1716
    %v2263 = vpack.c.bf16 %v1722, %v1720
    %v2264 = vpack.c.bf16 %v1730, %v1728
    %v2265 = vpack.c.bf16 %v1734, %v1732
    %v2266 = vpack.c.bf16 %v1742, %v1740
    %v2267 = vpack.c.bf16 %v1746, %v1744
    %v2269 = vsel %vm2163, %v2252, 0
    %2271 = vmatprep.subr.bf16.mxu0 0
    %2272 = vmatpush1.bf16.msra.mxu0 %v2260
    %2273 = vmatprep.subr.bf16.mxu0 0
    %2274 = vmatpush1.bf16.msra.mxu0 0
    %2275 = vmatprep.subr.bf16.mxu0 0
    %2276 = vmatpush1.bf16.msra.mxu0 0
    %2277 = vmatprep.subr.bf16.mxu0 0
    %2278 = vmatpush1.bf16.msra.mxu0 0
    %2279 = vmatprep.subr.bf16.mxu0 0
    %2280 = vmatpush1.bf16.msra.mxu0 0
    %2281 = vmatprep.subr.bf16.mxu0 0
    %2282 = vmatpush1.bf16.msra.mxu0 0
    %2283 = vmatprep.subr.bf16.mxu0 0
    %2284 = vmatpush1.bf16.msra.mxu0 0
    %2285 = vmatprep.subr.bf16.mxu0 0
    %2286 = vmatpush1.bf16.msra.mxu0 0
    %2287 = vmatprep.subr.bf16.mxu0 0
    %2288 = vmatpush1.bf16.msra.mxu0 0
    %2289 = vmatprep.subr.bf16.mxu0 0
    %2290 = vmatpush1.bf16.msra.mxu0 0
    %2291 = vmatprep.subr.bf16.mxu0 0
    %2292 = vmatpush1.bf16.msra.mxu0 0
    %2293 = vmatprep.subr.bf16.mxu0 0
    %2294 = vmatpush1.bf16.msra.mxu0 0
    %2295 = vmatprep.subr.bf16.mxu0 0
    %2296 = vmatpush1.bf16.msra.mxu0 0
    %2297 = vmatprep.subr.bf16.mxu0 0
    %2298 = vmatpush1.bf16.msra.mxu0 0
    %2299 = vmatprep.subr.bf16.mxu0 0
    %2300 = vmatpush1.bf16.msra.mxu0 0
    %2301 = vmatprep.subr.bf16.mxu0 0
    %2302 = vmatpush1.bf16.msra.mxu0 0
    %2303 = vmatprep.mubr.bf16.mxu0 0
    %2304 = vmatmul.mubr.bf16.gmra.mrb[0].mxu0 %v2269
    %v2305 = vpop.f32.mrb[0].mxu0
    %v2306 = vadd.f32 0.0, %v2305
    %v2307 = vpop.f32.mrb[0].mxu0
    %v2308 = vpop.f32.mrb[0].mxu0
    %v2309 = vpop.f32.mrb[0].mxu0
    %2310 = vdwg.mxu0
    %v2312 = vsel %vm2163, %v2253, 0
    %2314 = vmatprep.subr.bf16.mxu0 0
    %2315 = vmatpush1.bf16.msra.mxu0 %v2261
    %2316 = vmatprep.subr.bf16.mxu0 0
    %2317 = vmatpush1.bf16.msra.mxu0 0
    %2318 = vmatprep.subr.bf16.mxu0 0
    %2319 = vmatpush1.bf16.msra.mxu0 0
    %2320 = vmatprep.subr.bf16.mxu0 0
    %2321 = vmatpush1.bf16.msra.mxu0 0
    %2322 = vmatprep.subr.bf16.mxu0 0
    %2323 = vmatpush1.bf16.msra.mxu0 0
    %2324 = vmatprep.subr.bf16.mxu0 0
    %2325 = vmatpush1.bf16.msra.mxu0 0
    %2326 = vmatprep.subr.bf16.mxu0 0
    %2327 = vmatpush1.bf16.msra.mxu0 0
    %2328 = vmatprep.subr.bf16.mxu0 0
    %2329 = vmatpush1.bf16.msra.mxu0 0
    %2330 = vmatprep.subr.bf16.mxu0 0
    %2331 = vmatpush1.bf16.msra.mxu0 0
    %2332 = vmatprep.subr.bf16.mxu0 0
    %2333 = vmatpush1.bf16.msra.mxu0 0
    %2334 = vmatprep.subr.bf16.mxu0 0
    %2335 = vmatpush1.bf16.msra.mxu0 0
    %2336 = vmatprep.subr.bf16.mxu0 0
    %2337 = vmatpush1.bf16.msra.mxu0 0
    %2338 = vmatprep.subr.bf16.mxu0 0
    %2339 = vmatpush1.bf16.msra.mxu0 0
    %2340 = vmatprep.subr.bf16.mxu0 0
    %2341 = vmatpush1.bf16.msra.mxu0 0
    %2342 = vmatprep.subr.bf16.mxu0 0
    %2343 = vmatpush1.bf16.msra.mxu0 0
    %2344 = vmatprep.subr.bf16.mxu0 0
    %2345 = vmatpush1.bf16.msra.mxu0 0
    %2346 = vmatprep.mubr.bf16.mxu0 0
    %2347 = vmatmul.mubr.bf16.gmra.mrb[0].mxu0 %v2312
    %v2348 = vpop.f32.mrb[0].mxu0
    %v2349 = vadd.f32 0.0, %v2348
    %v2350 = vpop.f32.mrb[0].mxu0
    %v2351 = vpop.f32.mrb[0].mxu0
    %v2352 = vpop.f32.mrb[0].mxu0
    %2353 = vdwg.mxu0
    %v2355 = vsel %vm2163, %v2254, 0
    %2357 = vmatprep.subr.bf16.mxu0 0
    %2358 = vmatpush1.bf16.msra.mxu0 %v2262
    %2359 = vmatprep.subr.bf16.mxu0 0
    %2360 = vmatpush1.bf16.msra.mxu0 0
    %2361 = vmatprep.subr.bf16.mxu0 0
    %2362 = vmatpush1.bf16.msra.mxu0 0
    %2363 = vmatprep.subr.bf16.mxu0 0
    %2364 = vmatpush1.bf16.msra.mxu0 0
    %2365 = vmatprep.subr.bf16.mxu0 0
    %2366 = vmatpush1.bf16.msra.mxu0 0
    %2367 = vmatprep.subr.bf16.mxu0 0
    %2368 = vmatpush1.bf16.msra.mxu0 0
    %2369 = vmatprep.subr.bf16.mxu0 0
    %2370 = vmatpush1.bf16.msra.mxu0 0
    %2371 = vmatprep.subr.bf16.mxu0 0
    %2372 = vmatpush1.bf16.msra.mxu0 0
    %2373 = vmatprep.subr.bf16.mxu0 0
    %2374 = vmatpush1.bf16.msra.mxu0 0
    %2375 = vmatprep.subr.bf16.mxu0 0
    %2376 = vmatpush1.bf16.msra.mxu0 0
    %2377 = vmatprep.subr.bf16.mxu0 0
    %2378 = vmatpush1.bf16.msra.mxu0 0
    %2379 = vmatprep.subr.bf16.mxu0 0
    %2380 = vmatpush1.bf16.msra.mxu0 0
    %2381 = vmatprep.subr.bf16.mxu0 0
    %2382 = vmatpush1.bf16.msra.mxu0 0
    %2383 = vmatprep.subr.bf16.mxu0 0
    %2384 = vmatpush1.bf16.msra.mxu0 0
    %2385 = vmatprep.subr.bf16.mxu0 0
    %2386 = vmatpush1.bf16.msra.mxu0 0
    %2387 = vmatprep.subr.bf16.mxu0 0
    %2388 = vmatpush1.bf16.msra.mxu0 0
    %2389 = vmatprep.mubr.bf16.mxu0 0
    %2390 = vmatmul.mubr.bf16.gmra.mrb[0].mxu0 %v2355
    %v2391 = vpop.f32.mrb[0].mxu0
    %v2392 = vadd.f32 0.0, %v2391
    %v2393 = vpop.f32.mrb[0].mxu0
    %v2394 = vpop.f32.mrb[0].mxu0
    %v2395 = vpop.f32.mrb[0].mxu0
    %2396 = vdwg.mxu0
    %v2398 = vsel %vm2163, %v2255, 0
    %2400 = vmatprep.subr.bf16.mxu0 0
    %2401 = vmatpush1.bf16.msra.mxu0 %v2263
    %2402 = vmatprep.subr.bf16.mxu0 0
    %2403 = vmatpush1.bf16.msra.mxu0 0
    %2404 = vmatprep.subr.bf16.mxu0 0
    %2405 = vmatpush1.bf16.msra.mxu0 0
    %2406 = vmatprep.subr.bf16.mxu0 0
    %2407 = vmatpush1.bf16.msra.mxu0 0
    %2408 = vmatprep.subr.bf16.mxu0 0
    %2409 = vmatpush1.bf16.msra.mxu0 0
    %2410 = vmatprep.subr.bf16.mxu0 0
    %2411 = vmatpush1.bf16.msra.mxu0 0
    %2412 = vmatprep.subr.bf16.mxu0 0
    %2413 = vmatpush1.bf16.msra.mxu0 0
    %2414 = vmatprep.subr.bf16.mxu0 0
    %2415 = vmatpush1.bf16.msra.mxu0 0
    %2416 = vmatprep.subr.bf16.mxu0 0
    %2417 = vmatpush1.bf16.msra.mxu0 0
    %2418 = vmatprep.subr.bf16.mxu0 0
    %2419 = vmatpush1.bf16.msra.mxu0 0
    %2420 = vmatprep.subr.bf16.mxu0 0
    %2421 = vmatpush1.bf16.msra.mxu0 0
    %2422 = vmatprep.subr.bf16.mxu0 0
    %2423 = vmatpush1.bf16.msra.mxu0 0
    %2424 = vmatprep.subr.bf16.mxu0 0
    %2425 = vmatpush1.bf16.msra.mxu0 0
    %2426 = vmatprep.subr.bf16.mxu0 0
    %2427 = vmatpush1.bf16.msra.mxu0 0
    %2428 = vmatprep.subr.bf16.mxu0 0
    %2429 = vmatpush1.bf16.msra.mxu0 0
    %2430 = vmatprep.subr.bf16.mxu0 0
    %2431 = vmatpush1.bf16.msra.mxu0 0
    %2432 = vmatprep.mubr.bf16.mxu0 0
    %2433 = vmatmul.mubr.bf16.gmra.mrb[0].mxu0 %v2398
    %v2434 = vpop.f32.mrb[0].mxu0
    %v2435 = vadd.f32 0.0, %v2434
    %v2436 = vpop.f32.mrb[0].mxu0
    %v2437 = vpop.f32.mrb[0].mxu0
    %v2438 = vpop.f32.mrb[0].mxu0
    %2439 = vdwg.mxu0
    %v2441 = vsel %vm2163, %v2256, 0
    %2443 = vmatprep.subr.bf16.mxu0 0
    %2444 = vmatpush1.bf16.msra.mxu0 %v2264
    %2445 = vmatprep.subr.bf16.mxu0 0
    %2446 = vmatpush1.bf16.msra.mxu0 0
    %2447 = vmatprep.subr.bf16.mxu0 0
    %2448 = vmatpush1.bf16.msra.mxu0 0
    %2449 = vmatprep.subr.bf16.mxu0 0
    %2450 = vmatpush1.bf16.msra.mxu0 0
    %2451 = vmatprep.subr.bf16.mxu0 0
    %2452 = vmatpush1.bf16.msra.mxu0 0
    %2453 = vmatprep.subr.bf16.mxu0 0
    %2454 = vmatpush1.bf16.msra.mxu0 0
    %2455 = vmatprep.subr.bf16.mxu0 0
    %2456 = vmatpush1.bf16.msra.mxu0 0
    %2457 = vmatprep.subr.bf16.mxu0 0
    %2458 = vmatpush1.bf16.msra.mxu0 0
    %2459 = vmatprep.subr.bf16.mxu0 0
    %2460 = vmatpush1.bf16.msra.mxu0 0
    %2461 = vmatprep.subr.bf16.mxu0 0
    %2462 = vmatpush1.bf16.msra.mxu0 0
    %2463 = vmatprep.subr.bf16.mxu0 0
    %2464 = vmatpush1.bf16.msra.mxu0 0
    %2465 = vmatprep.subr.bf16.mxu0 0
    %2466 = vmatpush1.bf16.msra.mxu0 0
    %2467 = vmatprep.subr.bf16.mxu0 0
    %2468 = vmatpush1.bf16.msra.mxu0 0
    %2469 = vmatprep.subr.bf16.mxu0 0
    %2470 = vmatpush1.bf16.msra.mxu0 0
    %2471 = vmatprep.subr.bf16.mxu0 0
    %2472 = vmatpush1.bf16.msra.mxu0 0
    %2473 = vmatprep.subr.bf16.mxu0 0
    %2474 = vmatpush1.bf16.msra.mxu0 0
    %2475 = vmatprep.mubr.bf16.mxu0 0
    %2476 = vmatmul.mubr.bf16.gmra.mrb[0].mxu0 %v2441
    %v2477 = vpop.f32.mrb[0].mxu0
    %v2478 = vadd.f32 0.0, %v2477
    %v2479 = vpop.f32.mrb[0].mxu0
    %v2480 = vpop.f32.mrb[0].mxu0
    %v2481 = vpop.f32.mrb[0].mxu0
    %2482 = vdwg.mxu0
    %v2484 = vsel %vm2163, %v2257, 0
    %2486 = vmatprep.subr.bf16.mxu0 0
    %2487 = vmatpush1.bf16.msra.mxu0 %v2265
    %2488 = vmatprep.subr.bf16.mxu0 0
    %2489 = vmatpush1.bf16.msra.mxu0 0
    %2490 = vmatprep.subr.bf16.mxu0 0
    %2491 = vmatpush1.bf16.msra.mxu0 0
    %2492 = vmatprep.subr.bf16.mxu0 0
    %2493 = vmatpush1.bf16.msra.mxu0 0
    %2494 = vmatprep.subr.bf16.mxu0 0
    %2495 = vmatpush1.bf16.msra.mxu0 0
    %2496 = vmatprep.subr.bf16.mxu0 0
    %2497 = vmatpush1.bf16.msra.mxu0 0
    %2498 = vmatprep.subr.bf16.mxu0 0
    %2499 = vmatpush1.bf16.msra.mxu0 0
    %2500 = vmatprep.subr.bf16.mxu0 0
    %2501 = vmatpush1.bf16.msra.mxu0 0
    %2502 = vmatprep.subr.bf16.mxu0 0
    %2503 = vmatpush1.bf16.msra.mxu0 0
    %2504 = vmatprep.subr.bf16.mxu0 0
    %2505 = vmatpush1.bf16.msra.mxu0 0
    %2506 = vmatprep.subr.bf16.mxu0 0
    %2507 = vmatpush1.bf16.msra.mxu0 0
    %2508 = vmatprep.subr.bf16.mxu0 0
    %2509 = vmatpush1.bf16.msra.mxu0 0
    %2510 = vmatprep.subr.bf16.mxu0 0
    %2511 = vmatpush1.bf16.msra.mxu0 0
    %2512 = vmatprep.subr.bf16.mxu0 0
    %2513 = vmatpush1.bf16.msra.mxu0 0
    %2514 = vmatprep.subr.bf16.mxu0 0
    %2515 = vmatpush1.bf16.msra.mxu0 0
    %2516 = vmatprep.subr.bf16.mxu0 0
    %2517 = vmatpush1.bf16.msra.mxu0 0
    %2518 = vmatprep.mubr.bf16.mxu0 0
    %2519 = vmatmul.mubr.bf16.gmra.mrb[0].mxu0 %v2484
    %v2520 = vpop.f32.mrb[0].mxu0
    %v2521 = vadd.f32 0.0, %v2520
    %v2522 = vpop.f32.mrb[0].mxu0
    %v2523 = vpop.f32.mrb[0].mxu0
    %v2524 = vpop.f32.mrb[0].mxu0
    %2525 = vdwg.mxu0
    %v2527 = vsel %vm2163, %v2258, 0
    %2529 = vmatprep.subr.bf16.mxu0 0
    %2530 = vmatpush1.bf16.msra.mxu0 %v2266
    %2531 = vmatprep.subr.bf16.mxu0 0
    %2532 = vmatpush1.bf16.msra.mxu0 0
    %2533 = vmatprep.subr.bf16.mxu0 0
    %2534 = vmatpush1.bf16.msra.mxu0 0
    %2535 = vmatprep.subr.bf16.mxu0 0
    %2536 = vmatpush1.bf16.msra.mxu0 0
    %2537 = vmatprep.subr.bf16.mxu0 0
    %2538 = vmatpush1.bf16.msra.mxu0 0
    %2539 = vmatprep.subr.bf16.mxu0 0
    %2540 = vmatpush1.bf16.msra.mxu0 0
    %2541 = vmatprep.subr.bf16.mxu0 0
    %2542 = vmatpush1.bf16.msra.mxu0 0
    %2543 = vmatprep.subr.bf16.mxu0 0
    %2544 = vmatpush1.bf16.msra.mxu0 0
    %2545 = vmatprep.subr.bf16.mxu0 0
    %2546 = vmatpush1.bf16.msra.mxu0 0
    %2547 = vmatprep.subr.bf16.mxu0 0
    %2548 = vmatpush1.bf16.msra.mxu0 0
    %2549 = vmatprep.subr.bf16.mxu0 0
    %2550 = vmatpush1.bf16.msra.mxu0 0
    %2551 = vmatprep.subr.bf16.mxu0 0
    %2552 = vmatpush1.bf16.msra.mxu0 0
    %2553 = vmatprep.subr.bf16.mxu0 0
    %2554 = vmatpush1.bf16.msra.mxu0 0
    %2555 = vmatprep.subr.bf16.mxu0 0
    %2556 = vmatpush1.bf16.msra.mxu0 0
    %2557 = vmatprep.subr.bf16.mxu0 0
    %2558 = vmatpush1.bf16.msra.mxu0 0
    %2559 = vmatprep.subr.bf16.mxu0 0
    %2560 = vmatpush1.bf16.msra.mxu0 0
    %2561 = vmatprep.mubr.bf16.mxu0 0
    %2562 = vmatmul.mubr.bf16.gmra.mrb[0].mxu0 %v2527
    %v2563 = vpop.f32.mrb[0].mxu0
    %v2564 = vadd.f32 0.0, %v2563
    %v2565 = vpop.f32.mrb[0].mxu0
    %v2566 = vpop.f32.mrb[0].mxu0
    %v2567 = vpop.f32.mrb[0].mxu0
    %2568 = vdwg.mxu0
    %v2570 = vsel %vm2163, %v2259, 0
    %2572 = vmatprep.subr.bf16.mxu0 0
    %2573 = vmatpush1.bf16.msra.mxu0 %v2267
    %2574 = vmatprep.subr.bf16.mxu0 0
    %2575 = vmatpush1.bf16.msra.mxu0 0
    %2576 = vmatprep.subr.bf16.mxu0 0
    %2577 = vmatpush1.bf16.msra.mxu0 0
    %2578 = vmatprep.subr.bf16.mxu0 0
    %2579 = vmatpush1.bf16.msra.mxu0 0
    %2580 = vmatprep.subr.bf16.mxu0 0
    %2581 = vmatpush1.bf16.msra.mxu0 0
    %2582 = vmatprep.subr.bf16.mxu0 0
    %2583 = vmatpush1.bf16.msra.mxu0 0
    %2584 = vmatprep.subr.bf16.mxu0 0
    %2585 = vmatpush1.bf16.msra.mxu0 0
    %2586 = vmatprep.subr.bf16.mxu0 0
    %2587 = vmatpush1.bf16.msra.mxu0 0
    %2588 = vmatprep.subr.bf16.mxu0 0
    %2589 = vmatpush1.bf16.msra.mxu0 0
    %2590 = vmatprep.subr.bf16.mxu0 0
    %2591 = vmatpush1.bf16.msra.mxu0 0
    %2592 = vmatprep.subr.bf16.mxu0 0
    %2593 = vmatpush1.bf16.msra.mxu0 0
    %2594 = vmatprep.subr.bf16.mxu0 0
    %2595 = vmatpush1.bf16.msra.mxu0 0
    %2596 = vmatprep.subr.bf16.mxu0 0
    %2597 = vmatpush1.bf16.msra.mxu0 0
    %2598 = vmatprep.subr.bf16.mxu0 0
    %2599 = vmatpush1.bf16.msra.mxu0 0
    %2600 = vmatprep.subr.bf16.mxu0 0
    %2601 = vmatpush1.bf16.msra.mxu0 0
    %2602 = vmatprep.subr.bf16.mxu0 0
    %2603 = vmatpush1.bf16.msra.mxu0 0
    %2604 = vmatprep.mubr.bf16.mxu0 0
    %2605 = vmatmul.mubr.bf16.gmra.mrb[0].mxu0 %v2570
    %v2606 = vpop.f32.mrb[0].mxu0
    %v2607 = vadd.f32 0.0, %v2606
    %v2608 = vpop.f32.mrb[0].mxu0
    %v2609 = vpop.f32.mrb[0].mxu0
    %v2610 = vpop.f32.mrb[0].mxu0
    %2611 = vdwg.mxu0
    %v2612 = vpack.c.bf16 %v2349, %v2306
    %v2613 = vpack.c.bf16 %v2435, %v2392
    %v2614 = vpack.c.bf16 %v2521, %v2478
    %v2615 = vpack.c.bf16 %v2607, %v2564
    %v2617 = vsel %vm321, %v2612, 0
    %v2620 = vsel %vm813, %v1433, 0
    %2622 = vmatprep.subr.bf16.mxu0 0
    %2623 = vmatpush1.bf16.msra.mxu0 %v2620
    %2624 = vmatprep.subr.bf16.mxu0 0
    %2625 = vmatpush1.bf16.msra.mxu0 0
    %2626 = vmatprep.subr.bf16.mxu0 0
    %2627 = vmatpush1.bf16.msra.mxu0 0
    %2628 = vmatprep.subr.bf16.mxu0 0
    %2629 = vmatpush1.bf16.msra.mxu0 0
    %2630 = vmatprep.subr.bf16.mxu0 0
    %2631 = vmatpush1.bf16.msra.mxu0 0
    %2632 = vmatprep.subr.bf16.mxu0 0
    %2633 = vmatpush1.bf16.msra.mxu0 0
    %2634 = vmatprep.subr.bf16.mxu0 0
    %2635 = vmatpush1.bf16.msra.mxu0 0
    %2636 = vmatprep.subr.bf16.mxu0 0
    %2637 = vmatpush1.bf16.msra.mxu0 0
    %2638 = vmatprep.subr.bf16.mxu0 0
    %2639 = vmatpush1.bf16.msra.mxu0 0
    %2640 = vmatprep.subr.bf16.mxu0 0
    %2641 = vmatpush1.bf16.msra.mxu0 0
    %2642 = vmatprep.subr.bf16.mxu0 0
    %2643 = vmatpush1.bf16.msra.mxu0 0
    %2644 = vmatprep.subr.bf16.mxu0 0
    %2645 = vmatpush1.bf16.msra.mxu0 0
    %2646 = vmatprep.subr.bf16.mxu0 0
    %2647 = vmatpush1.bf16.msra.mxu0 0
    %2648 = vmatprep.subr.bf16.mxu0 0
    %2649 = vmatpush1.bf16.msra.mxu0 0
    %2650 = vmatprep.subr.bf16.mxu0 0
    %2651 = vmatpush1.bf16.msra.mxu0 0
    %2652 = vmatprep.subr.bf16.mxu0 0
    %2653 = vmatpush1.bf16.msra.mxu0 0
    %2654 = vmatprep.mubr.bf16.mxu0 0
    %2655 = vmatmul.mubr.bf16.gmra.mrb[0].mxu0 %v2617
    %v2656 = vpop.f32.mrb[0].mxu0
    %v2657 = vadd.f32 0.0, %v2656
    %v2658 = vpop.f32.mrb[0].mxu0
    %v2659 = vpop.f32.mrb[0].mxu0
    %v2660 = vadd.f32 0.0, %v2659
    %v2661 = vpop.f32.mrb[0].mxu0
    %2662 = vdwg.mxu0
    %v2664 = vsel %vm321, %v2613, 0
    %v2667 = vsel %vm813, %v1434, 0
    %2669 = vmatprep.subr.bf16.mxu0 0
    %2670 = vmatpush1.bf16.msra.mxu0 %v2667
    %2671 = vmatprep.subr.bf16.mxu0 0
    %2672 = vmatpush1.bf16.msra.mxu0 0
    %2673 = vmatprep.subr.bf16.mxu0 0
    %2674 = vmatpush1.bf16.msra.mxu0 0
    %2675 = vmatprep.subr.bf16.mxu0 0
    %2676 = vmatpush1.bf16.msra.mxu0 0
    %2677 = vmatprep.subr.bf16.mxu0 0
    %2678 = vmatpush1.bf16.msra.mxu0 0
    %2679 = vmatprep.subr.bf16.mxu0 0
    %2680 = vmatpush1.bf16.msra.mxu0 0
    %2681 = vmatprep.subr.bf16.mxu0 0
    %2682 = vmatpush1.bf16.msra.mxu0 0
    %2683 = vmatprep.subr.bf16.mxu0 0
    %2684 = vmatpush1.bf16.msra.mxu0 0
    %2685 = vmatprep.subr.bf16.mxu0 0
    %2686 = vmatpush1.bf16.msra.mxu0 0
    %2687 = vmatprep.subr.bf16.mxu0 0
    %2688 = vmatpush1.bf16.msra.mxu0 0
    %2689 = vmatprep.subr.bf16.mxu0 0
    %2690 = vmatpush1.bf16.msra.mxu0 0
    %2691 = vmatprep.subr.bf16.mxu0 0
    %2692 = vmatpush1.bf16.msra.mxu0 0
    %2693 = vmatprep.subr.bf16.mxu0 0
    %2694 = vmatpush1.bf16.msra.mxu0 0
    %2695 = vmatprep.subr.bf16.mxu0 0
    %2696 = vmatpush1.bf16.msra.mxu0 0
    %2697 = vmatprep.subr.bf16.mxu0 0
    %2698 = vmatpush1.bf16.msra.mxu0 0
    %2699 = vmatprep.subr.bf16.mxu0 0
    %2700 = vmatpush1.bf16.msra.mxu0 0
    %2701 = vmatprep.mubr.bf16.mxu0 0
    %2702 = vmatmul.mubr.bf16.gmra.mrb[0].mxu0 %v2664
    %v2703 = vpop.f32.mrb[0].mxu0
    %v2704 = vadd.f32 0.0, %v2703
    %v2705 = vpop.f32.mrb[0].mxu0
    %v2706 = vpop.f32.mrb[0].mxu0
    %v2707 = vadd.f32 0.0, %v2706
    %v2708 = vpop.f32.mrb[0].mxu0
    %2709 = vdwg.mxu0
    %v2711 = vsel %vm321, %v2614, 0
    %v2714 = vsel %vm813, %v1435, 0
    %2716 = vmatprep.subr.bf16.mxu0 0
    %2717 = vmatpush1.bf16.msra.mxu0 %v2714
    %2718 = vmatprep.subr.bf16.mxu0 0
    %2719 = vmatpush1.bf16.msra.mxu0 0
    %2720 = vmatprep.subr.bf16.mxu0 0
    %2721 = vmatpush1.bf16.msra.mxu0 0
    %2722 = vmatprep.subr.bf16.mxu0 0
    %2723 = vmatpush1.bf16.msra.mxu0 0
    %2724 = vmatprep.subr.bf16.mxu0 0
    %2725 = vmatpush1.bf16.msra.mxu0 0
    %2726 = vmatprep.subr.bf16.mxu0 0
    %2727 = vmatpush1.bf16.msra.mxu0 0
    %2728 = vmatprep.subr.bf16.mxu0 0
    %2729 = vmatpush1.bf16.msra.mxu0 0
    %2730 = vmatprep.subr.bf16.mxu0 0
    %2731 = vmatpush1.bf16.msra.mxu0 0
    %2732 = vmatprep.subr.bf16.mxu0 0
    %2733 = vmatpush1.bf16.msra.mxu0 0
    %2734 = vmatprep.subr.bf16.mxu0 0
    %2735 = vmatpush1.bf16.msra.mxu0 0
    %2736 = vmatprep.subr.bf16.mxu0 0
    %2737 = vmatpush1.bf16.msra.mxu0 0
    %2738 = vmatprep.subr.bf16.mxu0 0
    %2739 = vmatpush1.bf16.msra.mxu0 0
    %2740 = vmatprep.subr.bf16.mxu0 0
    %2741 = vmatpush1.bf16.msra.mxu0 0
    %2742 = vmatprep.subr.bf16.mxu0 0
    %2743 = vmatpush1.bf16.msra.mxu0 0
    %2744 = vmatprep.subr.bf16.mxu0 0
    %2745 = vmatpush1.bf16.msra.mxu0 0
    %2746 = vmatprep.subr.bf16.mxu0 0
    %2747 = vmatpush1.bf16.msra.mxu0 0
    %2748 = vmatprep.mubr.bf16.mxu0 0
    %2749 = vmatmul.mubr.bf16.gmra.mrb[0].mxu0 %v2711
    %v2750 = vpop.f32.mrb[0].mxu0
    %v2751 = vadd.f32 0.0, %v2750
    %v2752 = vpop.f32.mrb[0].mxu0
    %v2753 = vpop.f32.mrb[0].mxu0
    %v2754 = vadd.f32 0.0, %v2753
    %v2755 = vpop.f32.mrb[0].mxu0
    %2756 = vdwg.mxu0
    %v2758 = vsel %vm321, %v2615, 0
    %v2761 = vsel %vm813, %v1436, 0
    %2763 = vmatprep.subr.bf16.mxu0 0
    %2764 = vmatpush1.bf16.msra.mxu0 %v2761
    %2765 = vmatprep.subr.bf16.mxu0 0
    %2766 = vmatpush1.bf16.msra.mxu0 0
    %2767 = vmatprep.subr.bf16.mxu0 0
    %2768 = vmatpush1.bf16.msra.mxu0 0
    %2769 = vmatprep.subr.bf16.mxu0 0
    %2770 = vmatpush1.bf16.msra.mxu0 0
    %2771 = vmatprep.subr.bf16.mxu0 0
    %2772 = vmatpush1.bf16.msra.mxu0 0
    %2773 = vmatprep.subr.bf16.mxu0 0
    %2774 = vmatpush1.bf16.msra.mxu0 0
    %2775 = vmatprep.subr.bf16.mxu0 0
    %2776 = vmatpush1.bf16.msra.mxu0 0
    %2777 = vmatprep.subr.bf16.mxu0 0
    %2778 = vmatpush1.bf16.msra.mxu0 0
    %2779 = vmatprep.subr.bf16.mxu0 0
    %2780 = vmatpush1.bf16.msra.mxu0 0
    %2781 = vmatprep.subr.bf16.mxu0 0
    %2782 = vmatpush1.bf16.msra.mxu0 0
    %2783 = vmatprep.subr.bf16.mxu0 0
    %2784 = vmatpush1.bf16.msra.mxu0 0
    %2785 = vmatprep.subr.bf16.mxu0 0
    %2786 = vmatpush1.bf16.msra.mxu0 0
    %2787 = vmatprep.subr.bf16.mxu0 0
    %2788 = vmatpush1.bf16.msra.mxu0 0
    %2789 = vmatprep.subr.bf16.mxu0 0
    %2790 = vmatpush1.bf16.msra.mxu0 0
    %2791 = vmatprep.subr.bf16.mxu0 0
    %2792 = vmatpush1.bf16.msra.mxu0 0
    %2793 = vmatprep.subr.bf16.mxu0 0
    %2794 = vmatpush1.bf16.msra.mxu0 0
    %2795 = vmatprep.mubr.bf16.mxu0 0
    %2796 = vmatmul.mubr.bf16.gmra.mrb[0].mxu0 %v2758
    %v2797 = vpop.f32.mrb[0].mxu0
    %v2798 = vadd.f32 0.0, %v2797
    %v2799 = vpop.f32.mrb[0].mxu0
    %v2800 = vpop.f32.mrb[0].mxu0
    %v2801 = vadd.f32 0.0, %v2800
    %v2802 = vpop.f32.mrb[0].mxu0
    %2803 = vdwg.mxu0
    %v2804 = vsel %vm76, %v2657, 0.0
    %v2805 = vsel %vm76, %v2704, 0.0
    %v2806 = vadd.f32 %v2804, %v2805
    %v2807 = vsel %vm76, %v2751, 0.0
    %v2808 = vadd.f32 %v2806, %v2807
    %v2809 = vsel %vm76, %v2798, 0.0
    %v2810 = vadd.f32 %v2808, %v2809
    %v2811 = vsel %vm76, %v2660, 0.0
    %v2812 = vsel %vm76, %v2707, 0.0
    %v2813 = vadd.f32 %v2811, %v2812
    %v2814 = vsel %vm76, %v2754, 0.0
    %v2815 = vadd.f32 %v2813, %v2814
    %v2816 = vsel %vm76, %v2801, 0.0
    %v2817 = vadd.f32 %v2815, %v2816
    %v2818 = vlaneseq
    %v2819 = vshrl.u32 %v2818, 7
    %v2820 = vsub.s32 7, %v2819
    %v2821 = vrot.slane %v39, %v2820
    %v2822 = vadd.f32 %v2810, %v2821
    %v2823 = vadd.f32 %v2817, %v2821
    %v2824 = vadd.f32 %v1430, %v2822
    %v2825 = vadd.f32 %v1431, %v2823
    %v2826 = vsel %vm76, %v2824, 0.0
    %2827 = vadd.xlane.f32.xlu0 %v2826
    %v2828 = vpop.xlane.xlu0 %2827
    %v2829 = vsel %vm76, %v2825, 0.0
    %2830 = vadd.xlane.f32.xlu0 %v2829
    %v2831 = vpop.xlane.xlu0 %2830
    %v2832 = vmul.f32 %v2828, %v1399
    %v2833 = vmul.f32 %v2831, %v1399
    %v2834 = vsub.f32 %v2824, %v2832
    %v2835 = vsub.f32 %v2825, %v2833
    %v2836 = vmul.f32 %v2834, %v2834
    %v2837 = vmul.f32 %v2835, %v2835
    %v2838 = vsel %vm76, %v2836, 0.0
    %2839 = vadd.xlane.f32.xlu0 %v2838
    %v2840 = vpop.xlane.xlu0 %2839
    %v2841 = vsel %vm76, %v2837, 0.0
    %2842 = vadd.xlane.f32.xlu0 %v2841
    %v2843 = vpop.xlane.xlu0 %2842
    %v2844 = vmul.f32 %v2840, %v1399
    %v2845 = vmul.f32 %v2843, %v1399
    %v2846 = vadd.f32 %v2844, 1e-05
    %v2847 = vadd.f32 %v2845, 1e-05
    %v2848 = vrsqrt.pop %v2846
    %v2849 = vrsqrt.pop %v2847
    %v2850 = vmul.f32 %v2834, %v2848
    %v2851 = vmul.f32 %v2835, %v2849
    %v2852 = vlaneseq
    %v2853 = vshrl.u32 %v2852, 7
    %v2854 = vsub.s32 2, %v2853
    %v2855 = vrot.slane %v40, %v2854
    %v2856 = vmul.f32 %v2850, %v2855
    %v2857 = vmul.f32 %v2851, %v2855
    %v2858 = vlaneseq
    %v2859 = vshrl.u32 %v2858, 7
    %v2860 = vsub.s32 3, %v2859
    %v2861 = vrot.slane %v40, %v2860
    %v2862 = vadd.f32 %v2856, %v2861
    %v2863 = vadd.f32 %v2857, %v2861
    %v2864 = vpack.c.bf16 %v2863, %v2862
    %v2865 = vld [vmem:[%s6] sm:$0xf]
    %v2866 = vld [vmem:[%s6 + $0x4] sm:$0xf]
    %v2867 = vld [vmem:[%s6 + $0x8] sm:$0xf]
    %v2868 = vld [vmem:[%s6 + $0xc] sm:$0xf]
    %v2869 = vld [vmem:[%s9] sm:$0x1]
    %v2871 = vlaneseq
    %v2872 = vshrl.u32 %v2871, 7
    %v2873 = vsub.s32 0, %v2872
    %v2874 = vrot.slane %v2869, %v2873
    %v2880 = vunpack.c.l.b16 %v2865
    %v2881 = vunpack.c.l.b16 %v2866
    %v2882 = vunpack.c.l.b16 %v2867
    %v2883 = vunpack.c.l.b16 %v2868
    %v2884 = vpack.c.b16 %v2881, %v2880
    %v2885 = vpack.c.b16 %v2883, %v2882
    %v2889 = vsel %vm76, %v2864, 0
    %2891 = vmatprep.subr.bf16.mxu0 0
    %2892 = vmatpush1.bf16.msra.mxu0 %v2884
    %2893 = vmatprep.subr.bf16.mxu0 0
    %2894 = vmatpush1.bf16.msra.mxu0 %v2885
    %2895 = vmatprep.subr.bf16.mxu0 0
    %2896 = vmatpush1.bf16.msra.mxu0 0
    %2897 = vmatprep.subr.bf16.mxu0 0
    %2898 = vmatpush1.bf16.msra.mxu0 0
    %2899 = vmatprep.subr.bf16.mxu0 0
    %2900 = vmatpush1.bf16.msra.mxu0 0
    %2901 = vmatprep.subr.bf16.mxu0 0
    %2902 = vmatpush1.bf16.msra.mxu0 0
    %2903 = vmatprep.subr.bf16.mxu0 0
    %2904 = vmatpush1.bf16.msra.mxu0 0
    %2905 = vmatprep.subr.bf16.mxu0 0
    %2906 = vmatpush1.bf16.msra.mxu0 0
    %2907 = vmatprep.subr.bf16.mxu0 0
    %2908 = vmatpush1.bf16.msra.mxu0 0
    %2909 = vmatprep.subr.bf16.mxu0 0
    %2910 = vmatpush1.bf16.msra.mxu0 0
    %2911 = vmatprep.subr.bf16.mxu0 0
    %2912 = vmatpush1.bf16.msra.mxu0 0
    %2913 = vmatprep.subr.bf16.mxu0 0
    %2914 = vmatpush1.bf16.msra.mxu0 0
    %2915 = vmatprep.subr.bf16.mxu0 0
    %2916 = vmatpush1.bf16.msra.mxu0 0
    %2917 = vmatprep.subr.bf16.mxu0 0
    %2918 = vmatpush1.bf16.msra.mxu0 0
    %2919 = vmatprep.subr.bf16.mxu0 0
    %2920 = vmatpush1.bf16.msra.mxu0 0
    %2921 = vmatprep.subr.bf16.mxu0 0
    %2922 = vmatpush1.bf16.msra.mxu0 0
    %2923 = vmatprep.mubr.bf16.mxu0 0
    %2924 = vmatmul.mubr.bf16.gmra.mrb[0].mxu0 %v2889
    %v2925 = vpop.f32.mrb[0].mxu0
    %v2926 = vadd.f32 %v2874, %v2925
    %v2927 = vpop.f32.mrb[0].mxu0
    %v2928 = vpop.f32.mrb[0].mxu0
    %v2929 = vadd.f32 %v2874, %v2928
    %v2930 = vpop.f32.mrb[0].mxu0
    %2931 = vdwg.mxu0
    %v2932 = vmax.f32 %v2926, 0.0
    %v2933 = vmax.f32 %v2929, 0.0
    %v2934 = vpack.c.bf16 %v2933, %v2932
    %v2935 = vld [vmem:[%s7] sm:$0xf]
    %v2936 = vld [vmem:[%s7 + $0x4] sm:$0xf]
    %v2937 = vld [vmem:[%s7 + $0x8] sm:$0xf]
    %v2938 = vld [vmem:[%s7 + $0xc] sm:$0xf]
    %v2939 = vld [vmem:[%s7 + $0x10] sm:$0xf]
    %v2940 = vld [vmem:[%s7 + $0x14] sm:$0xf]
    %v2941 = vld [vmem:[%s7 + $0x18] sm:$0xf]
    %v2942 = vld [vmem:[%s7 + $0x1c] sm:$0xf]
    %v2943 = vlaneseq
    %v2944 = vshrl.u32 %v2943, 7
    %v2945 = vsub.s32 6, %v2944
    %v2946 = vrot.slane %v40, %v2945
    %v2955 = vunpack.c.l.b16 %v2935
    %v2956 = vunpack.c.l.b16 %v2936
    %v2957 = vunpack.c.l.b16 %v2937
    %v2958 = vunpack.c.l.b16 %v2938
    %v2959 = vunpack.c.l.b16 %v2939
    %v2960 = vunpack.c.l.b16 %v2940
    %v2961 = vunpack.c.l.b16 %v2941
    %v2962 = vunpack.c.l.b16 %v2942
    %v2963 = vpack.c.b16 %v2956, %v2955
    %v2964 = vpack.c.b16 %v2958, %v2957
    %v2965 = vpack.c.b16 %v2960, %v2959
    %v2966 = vpack.c.b16 %v2962, %v2961
    %vm2971 = vcmask 523264
    %v2973 = vsel %vm2971, %v2934, 0
    %2975 = vmatprep.subr.bf16.mxu0 0
    %2976 = vmatpush1.bf16.msra.mxu0 %v2963
    %2977 = vmatprep.subr.bf16.mxu0 0
    %2978 = vmatpush1.bf16.msra.mxu0 %v2964
    %2979 = vmatprep.subr.bf16.mxu0 0
    %2980 = vmatpush1.bf16.msra.mxu0 %v2965
    %2981 = vmatprep.subr.bf16.mxu0 0
    %2982 = vmatpush1.bf16.msra.mxu0 %v2966
    %2983 = vmatprep.subr.bf16.mxu0 0
    %2984 = vmatpush1.bf16.msra.mxu0 0
    %2985 = vmatprep.subr.bf16.mxu0 0
    %2986 = vmatpush1.bf16.msra.mxu0 0
    %2987 = vmatprep.subr.bf16.mxu0 0
    %2988 = vmatpush1.bf16.msra.mxu0 0
    %2989 = vmatprep.subr.bf16.mxu0 0
    %2990 = vmatpush1.bf16.msra.mxu0 0
    %2991 = vmatprep.subr.bf16.mxu0 0
    %2992 = vmatpush1.bf16.msra.mxu0 0
    %2993 = vmatprep.subr.bf16.mxu0 0
    %2994 = vmatpush1.bf16.msra.mxu0 0
    %2995 = vmatprep.subr.bf16.mxu0 0
    %2996 = vmatpush1.bf16.msra.mxu0 0
    %2997 = vmatprep.subr.bf16.mxu0 0
    %2998 = vmatpush1.bf16.msra.mxu0 0
    %2999 = vmatprep.subr.bf16.mxu0 0
    %3000 = vmatpush1.bf16.msra.mxu0 0
    %3001 = vmatprep.subr.bf16.mxu0 0
    %3002 = vmatpush1.bf16.msra.mxu0 0
    %3003 = vmatprep.subr.bf16.mxu0 0
    %3004 = vmatpush1.bf16.msra.mxu0 0
    %3005 = vmatprep.subr.bf16.mxu0 0
    %3006 = vmatpush1.bf16.msra.mxu0 0
    %3007 = vmatprep.mubr.bf16.mxu0 0
    %3008 = vmatmul.mubr.bf16.gmra.mrb[0].mxu0 %v2973
    %v3009 = vpop.f32.mrb[0].mxu0
    %v3010 = vadd.f32 %v2946, %v3009
    %v3011 = vpop.f32.mrb[0].mxu0
    %v3012 = vpop.f32.mrb[0].mxu0
    %v3013 = vadd.f32 %v2946, %v3012
    %v3014 = vpop.f32.mrb[0].mxu0
    %3015 = vdwg.mxu0
    %v3016 = vadd.f32 %v2862, %v3010
    %v3017 = vadd.f32 %v2863, %v3013
    %v3018 = vsel %vm76, %v3016, 0.0
    %3019 = vadd.xlane.f32.xlu0 %v3018
    %v3020 = vpop.xlane.xlu0 %3019
    %v3021 = vsel %vm76, %v3017, 0.0
    %3022 = vadd.xlane.f32.xlu0 %v3021
    %v3023 = vpop.xlane.xlu0 %3022
    %v3024 = vmul.f32 %v3020, %v1399
    %v3025 = vmul.f32 %v3023, %v1399
    %v3026 = vsub.f32 %v3016, %v3024
    %v3027 = vsub.f32 %v3017, %v3025
    %v3028 = vmul.f32 %v3026, %v3026
    %v3029 = vmul.f32 %v3027, %v3027
    %v3030 = vsel %vm76, %v3028, 0.0
    %3031 = vadd.xlane.f32.xlu0 %v3030
    %v3032 = vpop.xlane.xlu0 %3031
    %v3033 = vsel %vm76, %v3029, 0.0
    %3034 = vadd.xlane.f32.xlu0 %v3033
    %v3035 = vpop.xlane.xlu0 %3034
    %v3036 = vmul.f32 %v3032, %v1399
    %v3037 = vmul.f32 %v3035, %v1399
    %v3038 = vadd.f32 %v3036, 1e-05
    %v3039 = vadd.f32 %v3037, 1e-05
    %v3040 = vrsqrt.pop %v3038
    %v3041 = vrsqrt.pop %v3039
    %v3042 = vmul.f32 %v3026, %v3040
    %v3043 = vmul.f32 %v3027, %v3041
    %v3044 = vlaneseq
    %v3045 = vshrl.u32 %v3044, 7
    %v3046 = vsub.s32 4, %v3045
    %v3047 = vrot.slane %v40, %v3046
    %v3048 = vmul.f32 %v3042, %v3047
    %v3049 = vmul.f32 %v3043, %v3047
    %v3050 = vlaneseq
    %v3051 = vshrl.u32 %v3050, 7
    %v3052 = vsub.s32 5, %v3051
    %v3053 = vrot.slane %v40, %v3052
    %v3054 = vadd.f32 %v3048, %v3053
    %v3055 = vadd.f32 %v3049, %v3053
    %3056 = vst.msk [vmem:[#allocation2] sm:$0xff] %vm76, %v3054
    %3057 = vst.msk [vmem:[#allocation2 + $0x8] sm:$0xff] %vm76, %v3055
    %3058 = vst.msk [vmem:[%s11] sm:$0xff] %vm2163, %v2237
    %3059 = vst.msk [vmem:[%s11 + $0x8] sm:$0xff] %vm2163, %v2239
    %3060 = vst.msk [vmem:[%s11 + $0x10] sm:$0xff] %vm2163, %v2241
    %3061 = vst.msk [vmem:[%s11 + $0x18] sm:$0xff] %vm2163, %v2243
    %3062 = vst.msk [vmem:[%s11 + $0x20] sm:$0xff] %vm2163, %v2245
    %3063 = vst.msk [vmem:[%s11 + $0x28] sm:$0xff] %vm2163, %v2247
    %3064 = vst.msk [vmem:[%s11 + $0x30] sm:$0xff] %vm2163, %v2249
    %3065 = vst.msk [vmem:[%s11 + $0x38] sm:$0xff] %vm2163, %v2251
    // Predicated region
    $region42: #{decoder_layer_forward.1} parent=1 // pred_check
      _
    $region43: #{decoder_layer_forward.1} parent=1 // pred_check_branch
      %3067 = sbr.rel (0) target = $region45
    $region44: #{decoder_layer_forward.1} parent=1 // pred_region
      %s3069 = ssub.s32 256, 256
      %3070 = vsyncadd [#allocation3], %s3069
      %s3071 = sshll.u32 [#allocation2], 4
      %s3072 = int_to_ptr.vmem [resolvable:$true] %s3071
      %3077 = dma.vmem_to_hbm [thread:$0]  %s3072, 256, %s10, [#allocation3], 128, 128, 8
    $region45: #{decoder_layer_forward.1} parent=1 // pred_fallthru
      _
    // Predicated region
    $region46: #{decoder_layer_forward.1} parent=1 // pred_check
      _
    $region47: #{decoder_layer_forward.1} parent=1 // pred_check_branch
      %3079 = sbr.rel (0) target = $region49
    $region48: #{decoder_layer_forward.1} parent=1 // pred_region
      _
    $region49: #{decoder_layer_forward.1} parent=1 // pred_fallthru
      _
    // Predicated region
    $region50: #{decoder_layer_forward.1} parent=1 // pred_check
      _
    $region51: #{decoder_layer_forward.1} parent=1 // pred_check_branch
      %3081 = sbr.rel (0) target = $region53
    $region52: #{decoder_layer_forward.1} parent=1 // pred_region
      %3082 = dma.done [#allocation3], 256
    $region53: #{decoder_layer_forward.1} parent=1 // pred_fallthru
      _
    // Predicated region
    $region54: #{decoder_layer_forward.1} parent=1 // pred_check
      _
    $region55: #{decoder_layer_forward.1} parent=1 // pred_check_branch
      %3084 = sbr.rel (0) target = $region57
    $region56: #{decoder_layer_forward.1} parent=1 // pred_region
      _
    $region57: #{decoder_layer_forward.1} parent=1 // pred_fallthru
      _
    %3085 = vsyncpa [#allocation3], 1

</llo_original>
